<compile_context>
chip_gen: v5e
topology: v5e:2x2
jax: 0.10.0
libtpu: 0.0.40
codegen_flags: <defaults>
</compile_context>

<pallas_src>
import functools

import jax
import jax.numpy as jnp
from jax import lax
from jax.experimental import pallas as pl
from jax.experimental.pallas import tpu as pltpu


# ---------------------------------------------------------------------------
# Pallas kernel: K-tiled (patches @ W) accumulation, fused
# bias + InstanceNorm(affine=False, eps=1e-5) + LeakyReLU(0.2) on finalize.
# ---------------------------------------------------------------------------
def _disc_block_kernel(x_ref, w_ref, b_ref, o_ref, *scratch, norm, act, nk,
                       eps=1e-5, slope=0.2):
    def finalize(acc):
        y = acc + b_ref[...]                               # (tp, tc) f32 + (1, tc) f32
        if norm:
            # InstanceNorm2d(affine=False): per-(sample, channel) over spatial P
            # (tp == full P for norm layers).  Two-pass / centered variance in f32.
            inv_p = 1.0 / y.shape[0]
            mean = jnp.sum(y, axis=0, keepdims=True) * inv_p
            yc = y - mean
            var = jnp.sum(yc * yc, axis=0, keepdims=True) * inv_p
            y = yc * lax.rsqrt(var + eps)
        if act:
            y = jnp.maximum(y, slope * y)                  # LeakyReLU(0.2), one VPU op
        o_ref[0] = y.astype(o_ref.dtype)

    if nk == 1:
        # Single K step: no accumulator scratch, no zero+copy pass.
        finalize(jnp.dot(x_ref[0], w_ref[...], preferred_element_type=jnp.float32))
    else:
        acc_ref, = scratch
        ki = pl.program_id(3)

        @pl.when(ki == 0)
        def _():
            acc_ref[...] = jnp.zeros_like(acc_ref)

        # bf16 x bf16 -> f32 accumulation on the MXU.
        acc_ref[...] += jnp.dot(x_ref[0], w_ref[...],
                                preferred_element_type=jnp.float32)

        @pl.when(ki == nk - 1)
        def _():
            finalize(acc_ref[...])


# ---------------------------------------------------------------------------
# Glue: strided-slice im2col (NHWC), padding, tile picking, pallas_call wrapper.
# ---------------------------------------------------------------------------
def _round_up(x, m):
    return ((x + m - 1) // m) * m


def _pick_tile(total, max_tile, quantum=128):
    """Largest multiple of quantum, <= max_tile, dividing total (total % quantum == 0)."""
    t = min(total, max_tile)
    t = (t // quantum) * quantum
    while total % t:
        t -= quantum
    return t


def _pick_tp(p, tp_max):
    """P tile for no-norm layers: full P if small, else largest x8 divisor <= tp_max."""
    if p <= tp_max:
        return p
    t = (tp_max // 8) * 8
    while t >= 8:
        if p % t == 0:
            return t
        t -= 8
    return p


def _pick_tk(k_pad, tp, max_in_bytes=8 * 1024 * 1024):
    """K tile dividing k_pad, keeping the double-buffered bf16 input block bounded."""
    tk = max((min(k_pad, 512) // 128) * 128, 128)
    while tk > 128 and (k_pad % tk or 4 * tp * tk > max_in_bytes):
        tk -= 128
    if k_pad % tk:
        tk = k_pad
    return tk


def _vmem_limit_bytes():
    cap = 128 * 1024 * 1024
    try:
        cap = int(getattr(pltpu.get_tpu_info(), "vmem_capacity_bytes", cap))
    except Exception:
        pass
    # ~60% of physical VMEM: ~38 MiB on v7x (64 MiB/TC), ~76 MiB on v5e/v6e (128 MiB).
    return max(32 * 1024 * 1024, min(int(cap * 0.6), 100 * 1024 * 1024))


def _im2col_nhwc(x, kh, kw, stride, pad):
    """im2col via kh*kw strided slices + concat (plain copies, no gather/6-D transpose).

    Column order is (dh, dw, c), matching the (kh, kw, Cin, Cout) weight flatten.
    """
    x = jnp.pad(x, ((0, 0), (pad, pad), (pad, pad), (0, 0)))
    n, h, w, c = x.shape
    ho = (h - kh) // stride + 1
    wo = (w - kw) // stride + 1
    cols = []
    for dh in range(kh):
        for dw in range(kw):
            cols.append(lax.slice(
                x, (0, dh, dw, 0),
                (n, dh + (ho - 1) * stride + 1, dw + (wo - 1) * stride + 1, c),
                (1, stride, stride, 1)))
    p = jnp.concatenate(cols, axis=-1)                     # (N, Ho, Wo, kh*kw*C)
    return p.reshape(n, ho * wo, kh * kw * c), ho, wo


def conv_block(x_nhwc, w_oihw, b, *, stride, pad, norm, act, pre_pad=None,
               out_dtype=jnp.bfloat16, tp_max=2048, tc_max=512):
    """One DiscBlock (or bare conv). x_nhwc: (N, H, W, >=Cin). Returns (N, Ho, Wo, Cout_pad)."""
    cout, cin, kh, kw = w_oihw.shape
    N = x_nhwc.shape[0]

    # Previous layer may carry padded channels; the slice fuses into the im2col fusion.
    if x_nhwc.shape[-1] != cin:
        x_nhwc = x_nhwc[..., :cin]
    x = x_nhwc.astype(jnp.bfloat16)

    if pre_pad is not None:                                # ZeroPad2d((left, right, top, bottom))
        l, r, t, bo = pre_pad
        x = jnp.pad(x, ((0, 0), (t, bo), (l, r), (0, 0)))

    # Pad Cin to x8 so K = kh*kw*Cin_pad is a multiple of 128 (4x4 kernels).
    cin_pad = _round_up(cin, 8)
    if cin_pad != cin:
        x = jnp.pad(x, ((0, 0), (0, 0), (0, 0), (0, cin_pad - cin)))

    patches, Ho, Wo = _im2col_nhwc(x, kh, kw, stride, pad)  # (N, P, K_pad) bf16
    P = Ho * Wo
    K_pad = kh * kw * cin_pad
    cout_pad = _round_up(cout, 128)

    w = jnp.transpose(w_oihw, (2, 3, 1, 0))                 # (kh, kw, Cin, Cout)
    w = jnp.pad(w, ((0, 0), (0, 0), (0, cin_pad - cin), (0, cout_pad - cout)))
    wmat = w.reshape(K_pad, cout_pad).astype(jnp.bfloat16)
    bmat = jnp.pad(b, (0, cout_pad - cout)).reshape(1, cout_pad).astype(jnp.float32)

    # Tiles: Cout up to 512 (single Cout tile for this model); norm layers keep full P
    # in-kernel (spatial reduction stays in one program); K tile bounded for VMEM.
    tc = _pick_tile(cout_pad, tc_max, 128)
    tp = P if norm else _pick_tp(P, tp_max)
    tk = _pick_tk(K_pad, tp)
    nk = K_pad // tk
    grid = (N, pl.cdiv(P, tp), cout_pad // tc, nk)

    kernel = functools.partial(_disc_block_kernel, norm=norm, act=act, nk=nk)
    scratch = [pltpu.VMEM((tp, tc), jnp.float32)] if nk > 1 else []

    out = pl.pallas_call(
        kernel,
        out_shape=jax.ShapeDtypeStruct((N, P, cout_pad), out_dtype),
        grid_spec=pltpu.PrefetchScalarGridSpec(
            num_scalar_prefetch=0,
            grid=grid,
            in_specs=[
                pl.BlockSpec((1, tp, tk), lambda n, pi, ci, ki: (n, pi, ki)),
                pl.BlockSpec((tk, tc), lambda n, pi, ci, ki: (ki, ci)),
                pl.BlockSpec((1, tc), lambda n, pi, ci, ki: (0, ci)),
            ],
            out_specs=pl.BlockSpec((1, tp, tc), lambda n, pi, ci, ki: (n, pi, ci)),
            scratch_shapes=scratch,
        ),
        compiler_params=pltpu.CompilerParams(
            dimension_semantics=("parallel", "parallel", "parallel", "arbitrary"),
            vmem_limit_bytes=_vmem_limit_bytes(),
        ),
    )(patches, wmat, bmat)

    # Keep Cout padding attached; the consumer slices channels inside its own fusion.
    return out.reshape(N, Ho, Wo, cout_pad)


# ---------------------------------------------------------------------------
# Discriminator forward (CycleGAN PatchGAN)
# ---------------------------------------------------------------------------
def init_params(key, in_channels):
    shapes = [
        (64, in_channels, 4, 4),
        (128, 64, 4, 4),
        (256, 128, 4, 4),
        (512, 256, 4, 4),
        (1, 512, 4, 4),
    ]
    params = {}
    for i, shp in enumerate(shapes, start=1):
        key, kw_, kb_ = jax.random.split(key, 3)
        fan_in = shp[1] * shp[2] * shp[3]
        scale = 1.0 / jnp.sqrt(fan_in)
        params[f"w{i}"] = (jax.random.uniform(kw_, shp, jnp.float32,
                                              minval=-1.0, maxval=1.0) * scale)
        params[f"b{i}"] = (jax.random.uniform(kb_, (shp[0],), jnp.float32,
                                              minval=-1.0, maxval=1.0) * scale)
    return params


@jax.jit
def discriminator_forward(x_nchw, params):
    # Channels-last once at the top; NHWC bf16 between layers.
    x = jnp.transpose(x_nchw, (0, 2, 3, 1))
    # DiscBlock(in, 64, 4, 2, 1, norm=False)
    x = conv_block(x, params["w1"], params["b1"], stride=2, pad=1,
                   norm=False, act=True)
    # DiscBlock(64, 128, 4, 2, 1)
    x = conv_block(x, params["w2"], params["b2"], stride=2, pad=1,
                   norm=True, act=True)
    # DiscBlock(128, 256, 4, 2, 1)
    x = conv_block(x, params["w3"], params["b3"], stride=2, pad=1,
                   norm=True, act=True)
    # DiscBlock(256, 512, 4, 2, 1)
    x = conv_block(x, params["w4"], params["b4"], stride=2, pad=1,
                   norm=True, act=True)
    # ZeroPad2d((1, 0, 1, 0)) + Conv2d(512, 1, kernel_size=4, padding=1)
    x = conv_block(x, params["w5"], params["b5"], stride=1, pad=1,
                   norm=False, act=False, pre_pad=(1, 0, 1, 0),
                   out_dtype=jnp.float32)
    # Drop the (tiny) Cout padding of the final 1-channel map, back to NCHW once.
    x = x[..., :1]
    return jnp.transpose(x, (0, 3, 1, 2))


if __name__ == "__main__":
    key = jax.random.PRNGKey(0)
    k_x, k_p = jax.random.split(key)

    # 32x32 keeps every InstanceNorm spatial extent > 1 (PyTorch InstanceNorm2d requirement).
    N, C, H, W = 2, 4, 32, 32
    x = jax.random.normal(k_x, (N, C, H, W), jnp.float32)
    params = init_params(k_p, C)

    out = discriminator_forward(x, params)
    out = jax.block_until_ready(out)

    # Expected PatchGAN output shape: (N, 1, 2, 2) for 32x32 input.
    assert out.shape == (N, 1, 2, 2), out.shape
    assert bool(jnp.all(jnp.isfinite(out))), "non-finite output"
    print("KERNEL_OK")
</pallas_src>

<mosaic_0001>
module attributes {stable_mosaic.version = 11 : i64} {
  func.func @_disc_block_kernel(%arg0: i32, %arg1: i32, %arg2: i32, %arg3: i32, %arg4: memref<1x256x128xbf16, #tpu.memory_space<vmem>>, %arg5: memref<128x128xbf16, #tpu.memory_space<vmem>>, %arg6: memref<1x128xf32, #tpu.memory_space<vmem>>, %arg7: memref<1x256x128xbf16, #tpu.memory_space<vmem>>) attributes {dimension_semantics = [#tpu.dimension_semantics<parallel>, #tpu.dimension_semantics<parallel>, #tpu.dimension_semantics<parallel>, #tpu.dimension_semantics<arbitrary>], iteration_bounds = array<i64: 2, 1, 1, 1>, scalar_prefetch = 0 : i64, scratch_operands = 0 : i64, tpu.core_type = #tpu.core_type<tc>, window_params = [{transform_indices = @transform_0, window_bounds = array<i64: 1, 256, 128>}, {transform_indices = @transform_1, window_bounds = array<i64: 128, 128>}, {transform_indices = @transform_2, window_bounds = array<i64: 1, 128>}, {transform_indices = @transform_3, window_bounds = array<i64: 1, 256, 128>}]} {
    %c0 = arith.constant 0 : index
    %c0_0 = arith.constant 0 : index
    %c0_1 = arith.constant 0 : index
    %0 = vector.load %arg4[%c0, %c0_0, %c0_1] : memref<1x256x128xbf16, #tpu.memory_space<vmem>>, vector<1x256x128xbf16>
    %1 = vector.shape_cast %0 : vector<1x256x128xbf16> to vector<256x128xbf16>
    %c0_2 = arith.constant 0 : index
    %c0_3 = arith.constant 0 : index
    %2 = vector.load %arg5[%c0_2, %c0_3] : memref<128x128xbf16, #tpu.memory_space<vmem>>, vector<128x128xbf16>
    %cst = arith.constant dense<0.000000e+00> : vector<256x128xf32>
    %3 = tpu.matmul %1, %2, %cst {dimension_numbers = #tpu.dot_dimension_numbers<[1], [0], [0], [1], [0, 0, 1, 1], [], []>} : vector<256x128xbf16>, vector<128x128xbf16>, vector<256x128xf32> -> vector<256x128xf32>
    %c0_4 = arith.constant 0 : index
    %c0_5 = arith.constant 0 : index
    %4 = vector.load %arg6[%c0_4, %c0_5] : memref<1x128xf32, #tpu.memory_space<vmem>>, vector<1x128xf32>
    %5 = vector.broadcast %4 : vector<1x128xf32> to vector<256x128xf32>
    %6 = arith.addf %3, %5 : vector<256x128xf32>
    %cst_6 = arith.constant 2.000000e-01 : f32
    %7 = vector.broadcast %cst_6 : f32 to vector<256x128xf32>
    %8 = arith.mulf %7, %6 : vector<256x128xf32>
    %9 = arith.maximumf %6, %8 : vector<256x128xf32>
    %10 = arith.truncf %9 : vector<256x128xf32> to vector<256x128xbf16>
    %c0_7 = arith.constant 0 : index
    %c0_8 = arith.constant 0 : index
    %c0_9 = arith.constant 0 : index
    %11 = vector.load %arg7[%c0_7, %c0_8, %c0_9] : memref<1x256x128xbf16, #tpu.memory_space<vmem>>, vector<1x256x128xbf16>
    %12 = vector.shape_cast %11 : vector<1x256x128xbf16> to vector<256x128xbf16>
    %13 = vector.shape_cast %10 : vector<256x128xbf16> to vector<1x256x128xbf16>
    tpu.vector_store %arg7[%c0_7, %c0_8, %c0_9], %13 {strides = array<i32>} : memref<1x256x128xbf16, #tpu.memory_space<vmem>>, vector<1x256x128xbf16>,
    return
  }
  func.func @transform_0(%arg0: i32, %arg1: i32, %arg2: i32, %arg3: i32) -> (i32, i32, i32) {
    %c0_i32 = arith.constant 0 : i32
    return %arg0, %arg1, %arg3 : i32, i32, i32
  }
  func.func @transform_1(%arg0: i32, %arg1: i32, %arg2: i32, %arg3: i32) -> (i32, i32) {
    %c0_i32 = arith.constant 0 : i32
    return %arg3, %arg2 : i32, i32
  }
  func.func @transform_2(%arg0: i32, %arg1: i32, %arg2: i32, %arg3: i32) -> (i32, i32) {
    %c0_i32 = arith.constant 0 : i32
    %c0_i32_0 = arith.constant 0 : i32
    return %c0_i32, %arg2 : i32, i32
  }
  func.func @transform_3(%arg0: i32, %arg1: i32, %arg2: i32, %arg3: i32) -> (i32, i32, i32) {
    %c0_i32 = arith.constant 0 : i32
    return %arg0, %arg1, %arg2 : i32, i32, i32
  }
}

module attributes {stable_mosaic.version = 11 : i64} {
  func.func @_disc_block_kernel(%arg0: i32, %arg1: i32, %arg2: i32, %arg3: i32, %arg4: memref<1x64x512xbf16, #tpu.memory_space<vmem>>, %arg5: memref<512x128xbf16, #tpu.memory_space<vmem>>, %arg6: memref<1x128xf32, #tpu.memory_space<vmem>>, %arg7: memref<1x64x128xbf16, #tpu.memory_space<vmem>>, %arg8: memref<64x128xf32, #tpu.memory_space<vmem>>) attributes {dimension_semantics = [#tpu.dimension_semantics<parallel>, #tpu.dimension_semantics<parallel>, #tpu.dimension_semantics<parallel>, #tpu.dimension_semantics<arbitrary>], iteration_bounds = array<i64: 2, 1, 1, 2>, scalar_prefetch = 0 : i64, scratch_operands = 1 : i64, tpu.core_type = #tpu.core_type<tc>, window_params = [{transform_indices = @transform_0, window_bounds = array<i64: 1, 64, 512>}, {transform_indices = @transform_1, window_bounds = array<i64: 512, 128>}, {transform_indices = @transform_2, window_bounds = array<i64: 1, 128>}, {transform_indices = @transform_3, window_bounds = array<i64: 1, 64, 128>}]} {
    %c0_i32 = arith.constant 0 : i32
    %0 = arith.cmpi eq, %arg3, %c0_i32 : i32
    %1 = arith.extui %0 : i1 to i32
    %c0_i32_0 = arith.constant 0 : i32
    %2 = arith.cmpi ne, %1, %c0_i32_0 : i32
    scf.if %2 {
      %cst_10 = arith.constant 0.000000e+00 : f32
      %13 = vector.broadcast %cst_10 : f32 to vector<64x128xf32>
      %c0_11 = arith.constant 0 : index
      %c0_12 = arith.constant 0 : index
      %14 = vector.load %arg8[%c0_11, %c0_12] : memref<64x128xf32, #tpu.memory_space<vmem>>, vector<64x128xf32>
      tpu.vector_store %arg8[%c0_11, %c0_12], %13 {strides = array<i32>} : memref<64x128xf32, #tpu.memory_space<vmem>>, vector<64x128xf32>,
    } else {
    }
    %c0 = arith.constant 0 : index
    %c0_1 = arith.constant 0 : index
    %3 = vector.load %arg8[%c0, %c0_1] : memref<64x128xf32, #tpu.memory_space<vmem>>, vector<64x128xf32>
    %c0_2 = arith.constant 0 : index
    %c0_3 = arith.constant 0 : index
    %c0_4 = arith.constant 0 : index
    %4 = vector.load %arg4[%c0_2, %c0_3, %c0_4] : memref<1x64x512xbf16, #tpu.memory_space<vmem>>, vector<1x64x512xbf16>
    %5 = vector.shape_cast %4 : vector<1x64x512xbf16> to vector<64x512xbf16>
    %c0_5 = arith.constant 0 : index
    %c0_6 = arith.constant 0 : index
    %6 = vector.load %arg5[%c0_5, %c0_6] : memref<512x128xbf16, #tpu.memory_space<vmem>>, vector<512x128xbf16>
    %cst = arith.constant dense<0.000000e+00> : vector<64x128xf32>
    %7 = tpu.matmul %5, %6, %cst {dimension_numbers = #tpu.dot_dimension_numbers<[1], [0], [0], [1], [0, 0, 1, 1], [], []>} : vector<64x512xbf16>, vector<512x128xbf16>, vector<64x128xf32> -> vector<64x128xf32>
    %8 = arith.addf %3, %7 : vector<64x128xf32>
    %c0_7 = arith.constant 0 : index
    %c0_8 = arith.constant 0 : index
    %9 = vector.load %arg8[%c0_7, %c0_8] : memref<64x128xf32, #tpu.memory_space<vmem>>, vector<64x128xf32>
    tpu.vector_store %arg8[%c0_7, %c0_8], %8 {strides = array<i32>} : memref<64x128xf32, #tpu.memory_space<vmem>>, vector<64x128xf32>,
    %c1_i32 = arith.constant 1 : i32
    %10 = arith.cmpi eq, %arg3, %c1_i32 : i32
    %11 = arith.extui %10 : i1 to i32
    %c0_i32_9 = arith.constant 0 : i32
    %12 = arith.cmpi ne, %11, %c0_i32_9 : i32
    scf.if %12 {
      %c0_10 = arith.constant 0 : index
      %c0_11 = arith.constant 0 : index
      %13 = vector.load %arg8[%c0_10, %c0_11] : memref<64x128xf32, #tpu.memory_space<vmem>>, vector<64x128xf32>
      %c0_12 = arith.constant 0 : index
      %c0_13 = arith.constant 0 : index
      %14 = vector.load %arg6[%c0_12, %c0_13] : memref<1x128xf32, #tpu.memory_space<vmem>>, vector<1x128xf32>
      %15 = vector.broadcast %14 : vector<1x128xf32> to vector<64x128xf32>
      %16 = arith.addf %13, %15 : vector<64x128xf32>
      %cst_14 = arith.constant dense<0.000000e+00> : vector<128xf32>
      %17 = vector.multi_reduction <add>, %16, %cst_14 [0] : vector<64x128xf32> to vector<128xf32>
      %18 = vector.shape_cast %17 : vector<128xf32> to vector<1x128xf32>
      %cst_15 = arith.constant 1.562500e-02 : f32
      %19 = vector.broadcast %cst_15 : f32 to vector<1x128xf32>
      %20 = arith.mulf %18, %19 : vector<1x128xf32>
      %21 = vector.broadcast %20 : vector<1x128xf32> to vector<64x128xf32>
      %22 = arith.subf %16, %21 : vector<64x128xf32>
      %23 = arith.mulf %22, %22 : vector<64x128xf32>
      %cst_16 = arith.constant dense<0.000000e+00> : vector<128xf32>
      %24 = vector.multi_reduction <add>, %23, %cst_16 [0] : vector<64x128xf32> to vector<128xf32>
      %25 = vector.shape_cast %24 : vector<128xf32> to vector<1x128xf32>
      %cst_17 = arith.constant 1.562500e-02 : f32
      %26 = vector.broadcast %cst_17 : f32 to vector<1x128xf32>
      %27 = arith.mulf %25, %26 : vector<1x128xf32>
      %cst_18 = arith.constant 9.99999974E-6 : f32
      %28 = vector.broadcast %cst_18 : f32 to vector<1x128xf32>
      %29 = arith.addf %27, %28 : vector<1x128xf32>
      %30 = math.rsqrt %29 : vector<1x128xf32>
      %31 = vector.broadcast %30 : vector<1x128xf32> to vector<64x128xf32>
      %32 = arith.mulf %22, %31 : vector<64x128xf32>
      %cst_19 = arith.constant 2.000000e-01 : f32
      %33 = vector.broadcast %cst_19 : f32 to vector<64x128xf32>
      %34 = arith.mulf %33, %32 : vector<64x128xf32>
      %35 = arith.maximumf %32, %34 : vector<64x128xf32>
      %36 = arith.truncf %35 : vector<64x128xf32> to vector<64x128xbf16>
      %c0_20 = arith.constant 0 : index
      %c0_21 = arith.constant 0 : index
      %c0_22 = arith.constant 0 : index
      %37 = vector.load %arg7[%c0_20, %c0_21, %c0_22] : memref<1x64x128xbf16, #tpu.memory_space<vmem>>, vector<1x64x128xbf16>
      %38 = vector.shape_cast %37 : vector<1x64x128xbf16> to vector<64x128xbf16>
      %39 = vector.shape_cast %36 : vector<64x128xbf16> to vector<1x64x128xbf16>
      tpu.vector_store %arg7[%c0_20, %c0_21, %c0_22], %39 {strides = array<i32>} : memref<1x64x128xbf16, #tpu.memory_space<vmem>>, vector<1x64x128xbf16>,
    } else {
    }
    return
  }
  func.func @transform_0(%arg0: i32, %arg1: i32, %arg2: i32, %arg3: i32) -> (i32, i32, i32) {
    %c0_i32 = arith.constant 0 : i32
    return %arg0, %arg1, %arg3 : i32, i32, i32
  }
  func.func @transform_1(%arg0: i32, %arg1: i32, %arg2: i32, %arg3: i32) -> (i32, i32) {
    %c0_i32 = arith.constant 0 : i32
    return %arg3, %arg2 : i32, i32
  }
  func.func @transform_2(%arg0: i32, %arg1: i32, %arg2: i32, %arg3: i32) -> (i32, i32) {
    %c0_i32 = arith.constant 0 : i32
    %c0_i32_0 = arith.constant 0 : i32
    return %c0_i32, %arg2 : i32, i32
  }
  func.func @transform_3(%arg0: i32, %arg1: i32, %arg2: i32, %arg3: i32) -> (i32, i32, i32) {
    %c0_i32 = arith.constant 0 : i32
    return %arg0, %arg1, %arg2 : i32, i32, i32
  }
}

module attributes {stable_mosaic.version = 11 : i64} {
  func.func @_disc_block_kernel(%arg0: i32, %arg1: i32, %arg2: i32, %arg3: i32, %arg4: memref<1x16x512xbf16, #tpu.memory_space<vmem>>, %arg5: memref<512x256xbf16, #tpu.memory_space<vmem>>, %arg6: memref<1x256xf32, #tpu.memory_space<vmem>>, %arg7: memref<1x16x256xbf16, #tpu.memory_space<vmem>>, %arg8: memref<16x256xf32, #tpu.memory_space<vmem>>) attributes {dimension_semantics = [#tpu.dimension_semantics<parallel>, #tpu.dimension_semantics<parallel>, #tpu.dimension_semantics<parallel>, #tpu.dimension_semantics<arbitrary>], iteration_bounds = array<i64: 2, 1, 1, 4>, scalar_prefetch = 0 : i64, scratch_operands = 1 : i64, tpu.core_type = #tpu.core_type<tc>, window_params = [{transform_indices = @transform_0, window_bounds = array<i64: 1, 16, 512>}, {transform_indices = @transform_1, window_bounds = array<i64: 512, 256>}, {transform_indices = @transform_2, window_bounds = array<i64: 1, 256>}, {transform_indices = @transform_3, window_bounds = array<i64: 1, 16, 256>}]} {
    %c0_i32 = arith.constant 0 : i32
    %0 = arith.cmpi eq, %arg3, %c0_i32 : i32
    %1 = arith.extui %0 : i1 to i32
    %c0_i32_0 = arith.constant 0 : i32
    %2 = arith.cmpi ne, %1, %c0_i32_0 : i32
    scf.if %2 {
      %cst_10 = arith.constant 0.000000e+00 : f32
      %13 = vector.broadcast %cst_10 : f32 to vector<16x256xf32>
      %c0_11 = arith.constant 0 : index
      %c0_12 = arith.constant 0 : index
      %14 = vector.load %arg8[%c0_11, %c0_12] : memref<16x256xf32, #tpu.memory_space<vmem>>, vector<16x256xf32>
      tpu.vector_store %arg8[%c0_11, %c0_12], %13 {strides = array<i32>} : memref<16x256xf32, #tpu.memory_space<vmem>>, vector<16x256xf32>,
    } else {
    }
    %c0 = arith.constant 0 : index
    %c0_1 = arith.constant 0 : index
    %3 = vector.load %arg8[%c0, %c0_1] : memref<16x256xf32, #tpu.memory_space<vmem>>, vector<16x256xf32>
    %c0_2 = arith.constant 0 : index
    %c0_3 = arith.constant 0 : index
    %c0_4 = arith.constant 0 : index
    %4 = vector.load %arg4[%c0_2, %c0_3, %c0_4] : memref<1x16x512xbf16, #tpu.memory_space<vmem>>, vector<1x16x512xbf16>
    %5 = vector.shape_cast %4 : vector<1x16x512xbf16> to vector<16x512xbf16>
    %c0_5 = arith.constant 0 : index
    %c0_6 = arith.constant 0 : index
    %6 = vector.load %arg5[%c0_5, %c0_6] : memref<512x256xbf16, #tpu.memory_space<vmem>>, vector<512x256xbf16>
    %cst = arith.constant dense<0.000000e+00> : vector<16x256xf32>
    %7 = tpu.matmul %5, %6, %cst {dimension_numbers = #tpu.dot_dimension_numbers<[1], [0], [0], [1], [0, 0, 1, 1], [], []>} : vector<16x512xbf16>, vector<512x256xbf16>, vector<16x256xf32> -> vector<16x256xf32>
    %8 = arith.addf %3, %7 : vector<16x256xf32>
    %c0_7 = arith.constant 0 : index
    %c0_8 = arith.constant 0 : index
    %9 = vector.load %arg8[%c0_7, %c0_8] : memref<16x256xf32, #tpu.memory_space<vmem>>, vector<16x256xf32>
    tpu.vector_store %arg8[%c0_7, %c0_8], %8 {strides = array<i32>} : memref<16x256xf32, #tpu.memory_space<vmem>>, vector<16x256xf32>,
    %c3_i32 = arith.constant 3 : i32
    %10 = arith.cmpi eq, %arg3, %c3_i32 : i32
    %11 = arith.extui %10 : i1 to i32
    %c0_i32_9 = arith.constant 0 : i32
    %12 = arith.cmpi ne, %11, %c0_i32_9 : i32
    scf.if %12 {
      %c0_10 = arith.constant 0 : index
      %c0_11 = arith.constant 0 : index
      %13 = vector.load %arg8[%c0_10, %c0_11] : memref<16x256xf32, #tpu.memory_space<vmem>>, vector<16x256xf32>
      %c0_12 = arith.constant 0 : index
      %c0_13 = arith.constant 0 : index
      %14 = vector.load %arg6[%c0_12, %c0_13] : memref<1x256xf32, #tpu.memory_space<vmem>>, vector<1x256xf32>
      %15 = vector.broadcast %14 : vector<1x256xf32> to vector<16x256xf32>
      %16 = arith.addf %13, %15 : vector<16x256xf32>
      %cst_14 = arith.constant dense<0.000000e+00> : vector<256xf32>
      %17 = vector.multi_reduction <add>, %16, %cst_14 [0] : vector<16x256xf32> to vector<256xf32>
      %18 = vector.shape_cast %17 : vector<256xf32> to vector<1x256xf32>
      %cst_15 = arith.constant 6.250000e-02 : f32
      %19 = vector.broadcast %cst_15 : f32 to vector<1x256xf32>
      %20 = arith.mulf %18, %19 : vector<1x256xf32>
      %21 = vector.broadcast %20 : vector<1x256xf32> to vector<16x256xf32>
      %22 = arith.subf %16, %21 : vector<16x256xf32>
      %23 = arith.mulf %22, %22 : vector<16x256xf32>
      %cst_16 = arith.constant dense<0.000000e+00> : vector<256xf32>
      %24 = vector.multi_reduction <add>, %23, %cst_16 [0] : vector<16x256xf32> to vector<256xf32>
      %25 = vector.shape_cast %24 : vector<256xf32> to vector<1x256xf32>
      %cst_17 = arith.constant 6.250000e-02 : f32
      %26 = vector.broadcast %cst_17 : f32 to vector<1x256xf32>
      %27 = arith.mulf %25, %26 : vector<1x256xf32>
      %cst_18 = arith.constant 9.99999974E-6 : f32
      %28 = vector.broadcast %cst_18 : f32 to vector<1x256xf32>
      %29 = arith.addf %27, %28 : vector<1x256xf32>
      %30 = math.rsqrt %29 : vector<1x256xf32>
      %31 = vector.broadcast %30 : vector<1x256xf32> to vector<16x256xf32>
      %32 = arith.mulf %22, %31 : vector<16x256xf32>
      %cst_19 = arith.constant 2.000000e-01 : f32
      %33 = vector.broadcast %cst_19 : f32 to vector<16x256xf32>
      %34 = arith.mulf %33, %32 : vector<16x256xf32>
      %35 = arith.maximumf %32, %34 : vector<16x256xf32>
      %36 = arith.truncf %35 : vector<16x256xf32> to vector<16x256xbf16>
      %c0_20 = arith.constant 0 : index
      %c0_21 = arith.constant 0 : index
      %c0_22 = arith.constant 0 : index
      %37 = vector.load %arg7[%c0_20, %c0_21, %c0_22] : memref<1x16x256xbf16, #tpu.memory_space<vmem>>, vector<1x16x256xbf16>
      %38 = vector.shape_cast %37 : vector<1x16x256xbf16> to vector<16x256xbf16>
      %39 = vector.shape_cast %36 : vector<16x256xbf16> to vector<1x16x256xbf16>
      tpu.vector_store %arg7[%c0_20, %c0_21, %c0_22], %39 {strides = array<i32>} : memref<1x16x256xbf16, #tpu.memory_space<vmem>>, vector<1x16x256xbf16>,
    } else {
    }
    return
  }
  func.func @transform_0(%arg0: i32, %arg1: i32, %arg2: i32, %arg3: i32) -> (i32, i32, i32) {
    %c0_i32 = arith.constant 0 : i32
    return %arg0, %arg1, %arg3 : i32, i32, i32
  }
  func.func @transform_1(%arg0: i32, %arg1: i32, %arg2: i32, %arg3: i32) -> (i32, i32) {
    %c0_i32 = arith.constant 0 : i32
    return %arg3, %arg2 : i32, i32
  }
  func.func @transform_2(%arg0: i32, %arg1: i32, %arg2: i32, %arg3: i32) -> (i32, i32) {
    %c0_i32 = arith.constant 0 : i32
    %c0_i32_0 = arith.constant 0 : i32
    return %c0_i32, %arg2 : i32, i32
  }
  func.func @transform_3(%arg0: i32, %arg1: i32, %arg2: i32, %arg3: i32) -> (i32, i32, i32) {
    %c0_i32 = arith.constant 0 : i32
    return %arg0, %arg1, %arg2 : i32, i32, i32
  }
}

module attributes {stable_mosaic.version = 11 : i64} {
  func.func @_disc_block_kernel(%arg0: i32, %arg1: i32, %arg2: i32, %arg3: i32, %arg4: memref<1x4x512xbf16, #tpu.memory_space<vmem>>, %arg5: memref<512x512xbf16, #tpu.memory_space<vmem>>, %arg6: memref<1x512xf32, #tpu.memory_space<vmem>>, %arg7: memref<1x4x512xbf16, #tpu.memory_space<vmem>>, %arg8: memref<4x512xf32, #tpu.memory_space<vmem>>) attributes {dimension_semantics = [#tpu.dimension_semantics<parallel>, #tpu.dimension_semantics<parallel>, #tpu.dimension_semantics<parallel>, #tpu.dimension_semantics<arbitrary>], iteration_bounds = array<i64: 2, 1, 1, 8>, scalar_prefetch = 0 : i64, scratch_operands = 1 : i64, tpu.core_type = #tpu.core_type<tc>, window_params = [{transform_indices = @transform_0, window_bounds = array<i64: 1, 4, 512>}, {transform_indices = @transform_1, window_bounds = array<i64: 512, 512>}, {transform_indices = @transform_2, window_bounds = array<i64: 1, 512>}, {transform_indices = @transform_3, window_bounds = array<i64: 1, 4, 512>}]} {
    %c0_i32 = arith.constant 0 : i32
    %0 = arith.cmpi eq, %arg3, %c0_i32 : i32
    %1 = arith.extui %0 : i1 to i32
    %c0_i32_0 = arith.constant 0 : i32
    %2 = arith.cmpi ne, %1, %c0_i32_0 : i32
    scf.if %2 {
      %cst_10 = arith.constant 0.000000e+00 : f32
      %13 = vector.broadcast %cst_10 : f32 to vector<4x512xf32>
      %c0_11 = arith.constant 0 : index
      %c0_12 = arith.constant 0 : index
      %14 = vector.load %arg8[%c0_11, %c0_12] : memref<4x512xf32, #tpu.memory_space<vmem>>, vector<4x512xf32>
      tpu.vector_store %arg8[%c0_11, %c0_12], %13 {strides = array<i32>} : memref<4x512xf32, #tpu.memory_space<vmem>>, vector<4x512xf32>,
    } else {
    }
    %c0 = arith.constant 0 : index
    %c0_1 = arith.constant 0 : index
    %3 = vector.load %arg8[%c0, %c0_1] : memref<4x512xf32, #tpu.memory_space<vmem>>, vector<4x512xf32>
    %c0_2 = arith.constant 0 : index
    %c0_3 = arith.constant 0 : index
    %c0_4 = arith.constant 0 : index
    %4 = vector.load %arg4[%c0_2, %c0_3, %c0_4] : memref<1x4x512xbf16, #tpu.memory_space<vmem>>, vector<1x4x512xbf16>
    %5 = vector.shape_cast %4 : vector<1x4x512xbf16> to vector<4x512xbf16>
    %c0_5 = arith.constant 0 : index
    %c0_6 = arith.constant 0 : index
    %6 = vector.load %arg5[%c0_5, %c0_6] : memref<512x512xbf16, #tpu.memory_space<vmem>>, vector<512x512xbf16>
    %cst = arith.constant dense<0.000000e+00> : vector<4x512xf32>
    %7 = tpu.matmul %5, %6, %cst {dimension_numbers = #tpu.dot_dimension_numbers<[1], [0], [0], [1], [0, 0, 1, 1], [], []>} : vector<4x512xbf16>, vector<512x512xbf16>, vector<4x512xf32> -> vector<4x512xf32>
    %8 = arith.addf %3, %7 : vector<4x512xf32>
    %c0_7 = arith.constant 0 : index
    %c0_8 = arith.constant 0 : index
    %9 = vector.load %arg8[%c0_7, %c0_8] : memref<4x512xf32, #tpu.memory_space<vmem>>, vector<4x512xf32>
    tpu.vector_store %arg8[%c0_7, %c0_8], %8 {strides = array<i32>} : memref<4x512xf32, #tpu.memory_space<vmem>>, vector<4x512xf32>,
    %c7_i32 = arith.constant 7 : i32
    %10 = arith.cmpi eq, %arg3, %c7_i32 : i32
    %11 = arith.extui %10 : i1 to i32
    %c0_i32_9 = arith.constant 0 : i32
    %12 = arith.cmpi ne, %11, %c0_i32_9 : i32
    scf.if %12 {
      %c0_10 = arith.constant 0 : index
      %c0_11 = arith.constant 0 : index
      %13 = vector.load %arg8[%c0_10, %c0_11] : memref<4x512xf32, #tpu.memory_space<vmem>>, vector<4x512xf32>
      %c0_12 = arith.constant 0 : index
      %c0_13 = arith.constant 0 : index
      %14 = vector.load %arg6[%c0_12, %c0_13] : memref<1x512xf32, #tpu.memory_space<vmem>>, vector<1x512xf32>
      %15 = vector.broadcast %14 : vector<1x512xf32> to vector<4x512xf32>
      %16 = arith.addf %13, %15 : vector<4x512xf32>
      %cst_14 = arith.constant dense<0.000000e+00> : vector<512xf32>
      %17 = vector.multi_reduction <add>, %16, %cst_14 [0] : vector<4x512xf32> to vector<512xf32>
      %18 = vector.shape_cast %17 : vector<512xf32> to vector<1x512xf32>
      %cst_15 = arith.constant 2.500000e-01 : f32
      %19 = vector.broadcast %cst_15 : f32 to vector<1x512xf32>
      %20 = arith.mulf %18, %19 : vector<1x512xf32>
      %21 = vector.broadcast %20 : vector<1x512xf32> to vector<4x512xf32>
      %22 = arith.subf %16, %21 : vector<4x512xf32>
      %23 = arith.mulf %22, %22 : vector<4x512xf32>
      %cst_16 = arith.constant dense<0.000000e+00> : vector<512xf32>
      %24 = vector.multi_reduction <add>, %23, %cst_16 [0] : vector<4x512xf32> to vector<512xf32>
      %25 = vector.shape_cast %24 : vector<512xf32> to vector<1x512xf32>
      %cst_17 = arith.constant 2.500000e-01 : f32
      %26 = vector.broadcast %cst_17 : f32 to vector<1x512xf32>
      %27 = arith.mulf %25, %26 : vector<1x512xf32>
      %cst_18 = arith.constant 9.99999974E-6 : f32
      %28 = vector.broadcast %cst_18 : f32 to vector<1x512xf32>
      %29 = arith.addf %27, %28 : vector<1x512xf32>
      %30 = math.rsqrt %29 : vector<1x512xf32>
      %31 = vector.broadcast %30 : vector<1x512xf32> to vector<4x512xf32>
      %32 = arith.mulf %22, %31 : vector<4x512xf32>
      %cst_19 = arith.constant 2.000000e-01 : f32
      %33 = vector.broadcast %cst_19 : f32 to vector<4x512xf32>
      %34 = arith.mulf %33, %32 : vector<4x512xf32>
      %35 = arith.maximumf %32, %34 : vector<4x512xf32>
      %36 = arith.truncf %35 : vector<4x512xf32> to vector<4x512xbf16>
      %c0_20 = arith.constant 0 : index
      %c0_21 = arith.constant 0 : index
      %c0_22 = arith.constant 0 : index
      %37 = vector.load %arg7[%c0_20, %c0_21, %c0_22] : memref<1x4x512xbf16, #tpu.memory_space<vmem>>, vector<1x4x512xbf16>
      %38 = vector.shape_cast %37 : vector<1x4x512xbf16> to vector<4x512xbf16>
      %39 = vector.shape_cast %36 : vector<4x512xbf16> to vector<1x4x512xbf16>
      tpu.vector_store %arg7[%c0_20, %c0_21, %c0_22], %39 {strides = array<i32>} : memref<1x4x512xbf16, #tpu.memory_space<vmem>>, vector<1x4x512xbf16>,
    } else {
    }
    return
  }
  func.func @transform_0(%arg0: i32, %arg1: i32, %arg2: i32, %arg3: i32) -> (i32, i32, i32) {
    %c0_i32 = arith.constant 0 : i32
    return %arg0, %arg1, %arg3 : i32, i32, i32
  }
  func.func @transform_1(%arg0: i32, %arg1: i32, %arg2: i32, %arg3: i32) -> (i32, i32) {
    %c0_i32 = arith.constant 0 : i32
    return %arg3, %arg2 : i32, i32
  }
  func.func @transform_2(%arg0: i32, %arg1: i32, %arg2: i32, %arg3: i32) -> (i32, i32) {
    %c0_i32 = arith.constant 0 : i32
    %c0_i32_0 = arith.constant 0 : i32
    return %c0_i32, %arg2 : i32, i32
  }
  func.func @transform_3(%arg0: i32, %arg1: i32, %arg2: i32, %arg3: i32) -> (i32, i32, i32) {
    %c0_i32 = arith.constant 0 : i32
    return %arg0, %arg1, %arg2 : i32, i32, i32
  }
}

module attributes {stable_mosaic.version = 11 : i64} {
  func.func @_disc_block_kernel(%arg0: i32, %arg1: i32, %arg2: i32, %arg3: i32, %arg4: memref<1x4x512xbf16, #tpu.memory_space<vmem>>, %arg5: memref<512x128xbf16, #tpu.memory_space<vmem>>, %arg6: memref<1x128xf32, #tpu.memory_space<vmem>>, %arg7: memref<1x4x128xf32, #tpu.memory_space<vmem>>, %arg8: memref<4x128xf32, #tpu.memory_space<vmem>>) attributes {dimension_semantics = [#tpu.dimension_semantics<parallel>, #tpu.dimension_semantics<parallel>, #tpu.dimension_semantics<parallel>, #tpu.dimension_semantics<arbitrary>], iteration_bounds = array<i64: 2, 1, 1, 16>, scalar_prefetch = 0 : i64, scratch_operands = 1 : i64, tpu.core_type = #tpu.core_type<tc>, window_params = [{transform_indices = @transform_0, window_bounds = array<i64: 1, 4, 512>}, {transform_indices = @transform_1, window_bounds = array<i64: 512, 128>}, {transform_indices = @transform_2, window_bounds = array<i64: 1, 128>}, {transform_indices = @transform_3, window_bounds = array<i64: 1, 4, 128>}]} {
    %c0_i32 = arith.constant 0 : i32
    %0 = arith.cmpi eq, %arg3, %c0_i32 : i32
    %1 = arith.extui %0 : i1 to i32
    %c0_i32_0 = arith.constant 0 : i32
    %2 = arith.cmpi ne, %1, %c0_i32_0 : i32
    scf.if %2 {
      %cst_10 = arith.constant 0.000000e+00 : f32
      %13 = vector.broadcast %cst_10 : f32 to vector<4x128xf32>
      %c0_11 = arith.constant 0 : index
      %c0_12 = arith.constant 0 : index
      %14 = vector.load %arg8[%c0_11, %c0_12] : memref<4x128xf32, #tpu.memory_space<vmem>>, vector<4x128xf32>
      tpu.vector_store %arg8[%c0_11, %c0_12], %13 {strides = array<i32>} : memref<4x128xf32, #tpu.memory_space<vmem>>, vector<4x128xf32>,
    } else {
    }
    %c0 = arith.constant 0 : index
    %c0_1 = arith.constant 0 : index
    %3 = vector.load %arg8[%c0, %c0_1] : memref<4x128xf32, #tpu.memory_space<vmem>>, vector<4x128xf32>
    %c0_2 = arith.constant 0 : index
    %c0_3 = arith.constant 0 : index
    %c0_4 = arith.constant 0 : index
    %4 = vector.load %arg4[%c0_2, %c0_3, %c0_4] : memref<1x4x512xbf16, #tpu.memory_space<vmem>>, vector<1x4x512xbf16>
    %5 = vector.shape_cast %4 : vector<1x4x512xbf16> to vector<4x512xbf16>
    %c0_5 = arith.constant 0 : index
    %c0_6 = arith.constant 0 : index
    %6 = vector.load %arg5[%c0_5, %c0_6] : memref<512x128xbf16, #tpu.memory_space<vmem>>, vector<512x128xbf16>
    %cst = arith.constant dense<0.000000e+00> : vector<4x128xf32>
    %7 = tpu.matmul %5, %6, %cst {dimension_numbers = #tpu.dot_dimension_numbers<[1], [0], [0], [1], [0, 0, 1, 1], [], []>} : vector<4x512xbf16>, vector<512x128xbf16>, vector<4x128xf32> -> vector<4x128xf32>
    %8 = arith.addf %3, %7 : vector<4x128xf32>
    %c0_7 = arith.constant 0 : index
    %c0_8 = arith.constant 0 : index
    %9 = vector.load %arg8[%c0_7, %c0_8] : memref<4x128xf32, #tpu.memory_space<vmem>>, vector<4x128xf32>
    tpu.vector_store %arg8[%c0_7, %c0_8], %8 {strides = array<i32>} : memref<4x128xf32, #tpu.memory_space<vmem>>, vector<4x128xf32>,
    %c15_i32 = arith.constant 15 : i32
    %10 = arith.cmpi eq, %arg3, %c15_i32 : i32
    %11 = arith.extui %10 : i1 to i32
    %c0_i32_9 = arith.constant 0 : i32
    %12 = arith.cmpi ne, %11, %c0_i32_9 : i32
    scf.if %12 {
      %c0_10 = arith.constant 0 : index
      %c0_11 = arith.constant 0 : index
      %13 = vector.load %arg8[%c0_10, %c0_11] : memref<4x128xf32, #tpu.memory_space<vmem>>, vector<4x128xf32>
      %c0_12 = arith.constant 0 : index
      %c0_13 = arith.constant 0 : index
      %14 = vector.load %arg6[%c0_12, %c0_13] : memref<1x128xf32, #tpu.memory_space<vmem>>, vector<1x128xf32>
      %15 = vector.broadcast %14 : vector<1x128xf32> to vector<4x128xf32>
      %16 = arith.addf %13, %15 : vector<4x128xf32>
      %c0_14 = arith.constant 0 : index
      %c0_15 = arith.constant 0 : index
      %c0_16 = arith.constant 0 : index
      %17 = vector.load %arg7[%c0_14, %c0_15, %c0_16] : memref<1x4x128xf32, #tpu.memory_space<vmem>>, vector<1x4x128xf32>
      %18 = vector.shape_cast %17 : vector<1x4x128xf32> to vector<4x128xf32>
      %19 = vector.shape_cast %16 : vector<4x128xf32> to vector<1x4x128xf32>
      tpu.vector_store %arg7[%c0_14, %c0_15, %c0_16], %19 {strides = array<i32>} : memref<1x4x128xf32, #tpu.memory_space<vmem>>, vector<1x4x128xf32>,
    } else {
    }
    return
  }
  func.func @transform_0(%arg0: i32, %arg1: i32, %arg2: i32, %arg3: i32) -> (i32, i32, i32) {
    %c0_i32 = arith.constant 0 : i32
    return %arg0, %arg1, %arg3 : i32, i32, i32
  }
  func.func @transform_1(%arg0: i32, %arg1: i32, %arg2: i32, %arg3: i32) -> (i32, i32) {
    %c0_i32 = arith.constant 0 : i32
    return %arg3, %arg2 : i32, i32
  }
  func.func @transform_2(%arg0: i32, %arg1: i32, %arg2: i32, %arg3: i32) -> (i32, i32) {
    %c0_i32 = arith.constant 0 : i32
    %c0_i32_0 = arith.constant 0 : i32
    return %c0_i32, %arg2 : i32, i32
  }
  func.func @transform_3(%arg0: i32, %arg1: i32, %arg2: i32, %arg3: i32) -> (i32, i32, i32) {
    %c0_i32 = arith.constant 0 : i32
    return %arg0, %arg1, %arg2 : i32, i32, i32
  }
}

</mosaic_0001>

<llo_original>
// kernel: discriminator_forward.5
$region0: #{discriminator_forward.5}
  #allocation0 [shape = 'u32[]', space=smem, size = 0x4, offset = 0x4, fixed_abs, tag = 'smem constant byte address 0x4 - core index']
  #allocation1 [shape = 'u32[72,128]{1,0:T(1,128)}', space=vmem, size = 0x9000, scoped, tag = 'internal scratch']
  %s0 = inlined_call_operand.vmem [shape: bf16[2,256,128], index: 0, kind: input, shape index: {}]
  %s1 = inlined_call_operand.vmem [shape: bf16[128,128], index: 1, kind: input, shape index: {}]
  %s2 = inlined_call_operand.vmem [shape: f32[1,128], index: 2, kind: input, shape index: {}]
  %s3 = inlined_call_operand.vmem [shape: bf16[2,256,128], index: 3, kind: output, shape index: {}]
  %s4 = sld [smem:[#allocation0]]
  $region45: #{discriminator_forward.5} parent=0
    _
  %s6 = ssub.s32 1, %s4
  %s7 = scalar_select 0, %s6, %s4
  loop: start=0, step=1, limit=4
  $region2: #{discriminator_forward.5} parent=0 // loop_pre_header
    _
  $region3: #{discriminator_forward.5} parent=0 // loop_header
    %s9 = sphi 0, %s13
    %p10 = scmp.ge.s32.totalorder %s9, 4
    %s16 = sphi 0, %s42
    %s17 = sphi 0, %s38
    %s18 = sphi 0, %s34
    %s19 = sphi 0, %s30
    %s20 = sphi 0, %s16
    %s21 = sphi 0, %s17
    %s22 = sphi 0, %s18
    %s23 = sphi 0, %s19
    %s24 = sphi 0, %s20
    %s25 = sphi 0, %s21
    %s26 = sphi 0, %s22
    %s27 = sphi 0, %s23
    %s49 = sphi 0, %s51
    %s52 = sphi 0, %s49
    %s53 = sphi 0, %s52
    %s69 = sphi 0, %s53
    %s77 = sphi 0, %s79
    %s80 = sphi 0, %s77
    %s81 = sphi 0, %s80
    %s97 = sphi 0, %s81
    %s103 = sphi 0, %s105
    %s106 = sphi 0, %s103
    %s107 = sphi 0, %s106
    %s123 = sphi 0, %s107
    %s133 = sphi 0, %s135
    %s136 = sphi 0, %s133
    %s137 = sphi 0, %s136
    %s153 = sphi 0, %s137
  $region4: #{discriminator_forward.5} parent=0 // loop_header_branch
    %12 = sbr.rel (%p10) target = $region8
  $region5: #{discriminator_forward.5} parent=0 // loop_body
    %s14 = ssub.s32 %s9, 1
    %s15 = ssub.s32 %s9, 2
    %s28 = sadd.s32 1, %s19
    %p29 = scmp.ge.s32.totalorder %s28, 1
    %s30 = scalar_select %p29, 0, %s28
    %s31 = sadd.s32 1, %s18
    %s32 = scalar_select %p29, %s31, %s18
    %p33 = scmp.ge.s32.totalorder %s32, 1
    %s34 = scalar_select %p33, 0, %s32
    %s35 = sadd.s32 1, %s17
    %s36 = scalar_select %p33, %s35, %s17
    %p37 = scmp.ge.s32.totalorder %s36, 1
    %s38 = scalar_select %p37, 0, %s36
    %s39 = sadd.s32 1, %s16
    %s40 = scalar_select %p37, %s39, %s16
    %p41 = scmp.ge.s32.totalorder %s40, 2
    %s42 = scalar_select %p41, 0, %s40
    %s43 = ssub.s32 %s16, %s42
    %s44 = ssub.s32 %s17, %s38
    %s45 = sor.u32 %s43, %s44
    %s46 = ssub.s32 %s19, %s30
    %s47 = sor.u32 %s45, %s46
    %p48 = scmp.eq.s32.totalorder %s47, 0
    %s50 = sadd.s32 %s49, 1
    %s51 = scalar_select %p48, %s49, %s50
    %p54 = pneg %p48
    %p55 = scmp.eq.s32.totalorder %s9, 1
    %p56 = por %p54, %p55
    %p57 = scmp.ne.s32.totalorder %s49, %s52
    %p58 = scmp.eq.s32.totalorder %s9, 0
    %p59 = por %p57, %p58
    %p60 = scmp.ne.s32.totalorder %s49, %s52
    %p61 = scmp.eq.s32.totalorder %s14, 1
    %p62 = por %p60, %p61
    %p63 = scmp.ne.s32.totalorder %s52, %s53
    %p64 = scmp.eq.s32.totalorder %s14, 0
    %p65 = por %p63, %p64
    %p66 = scmp.ne.s32.totalorder %s52, %s53
    %p67 = scmp.eq.s32.totalorder %s15, 1
    %p68 = por %p66, %p67
    %p70 = scmp.ne.s32.totalorder %s53, %s69
    %p71 = scmp.eq.s32.totalorder %s15, 0
    %p72 = por %p70, %p71
    %s73 = ssub.s32 %s19, %s30
    %s74 = ssub.s32 %s18, %s34
    %s75 = sor.u32 %s73, %s74
    %p76 = scmp.eq.s32.totalorder %s75, 0
    %s78 = sadd.s32 %s77, 1
    %s79 = scalar_select %p76, %s77, %s78
    %p82 = pneg %p76
    %p83 = scmp.eq.s32.totalorder %s9, 1
    %p84 = por %p82, %p83
    %p85 = scmp.ne.s32.totalorder %s77, %s80
    %p86 = scmp.eq.s32.totalorder %s9, 0
    %p87 = por %p85, %p86
    %p88 = scmp.ne.s32.totalorder %s77, %s80
    %p89 = scmp.eq.s32.totalorder %s14, 1
    %p90 = por %p88, %p89
    %p91 = scmp.ne.s32.totalorder %s80, %s81
    %p92 = scmp.eq.s32.totalorder %s14, 0
    %p93 = por %p91, %p92
    %p94 = scmp.ne.s32.totalorder %s80, %s81
    %p95 = scmp.eq.s32.totalorder %s15, 1
    %p96 = por %p94, %p95
    %p98 = scmp.ne.s32.totalorder %s81, %s97
    %p99 = scmp.eq.s32.totalorder %s15, 0
    %p100 = por %p98, %p99
    %s101 = ssub.s32 %s18, %s34
    %p102 = scmp.eq.s32.totalorder %s101, 0
    %s104 = sadd.s32 %s103, 1
    %s105 = scalar_select %p102, %s103, %s104
    %p108 = pneg %p102
    %p109 = scmp.eq.s32.totalorder %s9, 1
    %p110 = por %p108, %p109
    %p111 = scmp.ne.s32.totalorder %s103, %s106
    %p112 = scmp.eq.s32.totalorder %s9, 0
    %p113 = por %p111, %p112
    %p114 = scmp.ne.s32.totalorder %s103, %s106
    %p115 = scmp.eq.s32.totalorder %s14, 1
    %p116 = por %p114, %p115
    %p117 = scmp.ne.s32.totalorder %s106, %s107
    %p118 = scmp.eq.s32.totalorder %s14, 0
    %p119 = por %p117, %p118
    %p120 = scmp.ne.s32.totalorder %s106, %s107
    %p121 = scmp.eq.s32.totalorder %s15, 1
    %p122 = por %p120, %p121
    %p124 = scmp.ne.s32.totalorder %s107, %s123
    %p125 = scmp.eq.s32.totalorder %s15, 0
    %p126 = por %p124, %p125
    %s127 = ssub.s32 %s16, %s42
    %s128 = ssub.s32 %s17, %s38
    %s129 = sor.u32 %s127, %s128
    %s130 = ssub.s32 %s18, %s34
    %s131 = sor.u32 %s129, %s130
    %p132 = scmp.eq.s32.totalorder %s131, 0
    %s134 = sadd.s32 %s133, 1
    %s135 = scalar_select %p132, %s133, %s134
    %p138 = pneg %p132
    %p139 = scmp.eq.s32.totalorder %s9, 1
    %p140 = por %p138, %p139
    %p141 = scmp.ne.s32.totalorder %s133, %s136
    %p142 = scmp.eq.s32.totalorder %s9, 0
    %p143 = por %p141, %p142
    %p144 = scmp.ne.s32.totalorder %s133, %s136
    %p145 = scmp.eq.s32.totalorder %s14, 1
    %p146 = por %p144, %p145
    %p147 = scmp.ne.s32.totalorder %s136, %s137
    %p148 = scmp.eq.s32.totalorder %s14, 0
    %p149 = por %p147, %p148
    %p150 = scmp.ne.s32.totalorder %s136, %s137
    %p151 = scmp.eq.s32.totalorder %s15, 1
    %p152 = por %p150, %p151
    %p154 = scmp.ne.s32.totalorder %s137, %s153
    %p155 = scmp.eq.s32.totalorder %s15, 0
    %p156 = por %p154, %p155
    %p157 = scmp.le.s32.totalorder 1, %s9
    %p158 = scmp.lt.s32.totalorder %s9, 3
    %p159 = pnand %p157, %p158
    %p160 = pneg %p159
    // Predicated region
    $region9: #{discriminator_forward.5} parent=5 // pred_check
      _
    $region10: #{discriminator_forward.5} parent=5 // pred_check_branch
      %162 = sbr.rel (%p159) target = $region12
    $region11: #{discriminator_forward.5} parent=5 // pred_region
      %s163 = ssub.s32 %s9, 1
      // Predicated region
      $region13: #{discriminator_forward.5} parent=11 // pred_check
        %p164 = pneg %p93
      $region14: #{discriminator_forward.5} parent=11 // pred_check_branch
        %166 = sbr.rel (%p164) target = $region16
      $region15: #{discriminator_forward.5} parent=11 // pred_region
        %s167 = smul.u32 16, %s23
        %p168 = scmp.lt.s32.totalorder %s167, 15
        %s169 = scalar_select %p168, %s167, 15
        %p170 = scmp.lt.s32.totalorder %s22, 0
        %s171 = scalar_select %p170, %s22, 0
        %s172 = sadd.s32 %s171, %s169
        %s173 = smul.addr %s172, 4
        %s174 = scalar_lea.vmem %s1, %s173
        %s175 = smul.u32 16, %s23
      $region16: #{discriminator_forward.5} parent=11 // pred_fallthru
        _
      // Predicated region
      $region17: #{discriminator_forward.5} parent=11 // pred_check
        %p176 = pneg %p119
      $region18: #{discriminator_forward.5} parent=11 // pred_check_branch
        %178 = sbr.rel (%p176) target = $region20
      $region19: #{discriminator_forward.5} parent=11 // pred_region
        %p179 = scmp.lt.s32.totalorder %s22, 0
        %s180 = scalar_select %p179, %s22, 0
        %s181 = scalar_lea.vmem %s2, %s180
      $region20: #{discriminator_forward.5} parent=11 // pred_fallthru
        _
    $region12: #{discriminator_forward.5} parent=5 // pred_fallthru
      _
    %p182 = scmp.lt.s32.totalorder %s9, 2
    // Predicated region
    $region21: #{discriminator_forward.5} parent=5 // pred_check
      %p183 = pneg %p182
    $region22: #{discriminator_forward.5} parent=5 // pred_check_branch
      %185 = sbr.rel (%p183) target = $region24
    $region23: #{discriminator_forward.5} parent=5 // pred_region
      // Predicated region
      $region25: #{discriminator_forward.5} parent=23 // pred_check
        %p186 = pneg %p59
      $region26: #{discriminator_forward.5} parent=23 // pred_check_branch
        %188 = sbr.rel (%p186) target = $region28
      $region27: #{discriminator_forward.5} parent=23 // pred_region
        %s189 = smul.u32 32, %s17
        %p190 = scmp.lt.s32.totalorder %s16, 1
        %s191 = scalar_select %p190, %s16, 1
        %p192 = scmp.lt.s32.totalorder %s189, 31
        %s193 = scalar_select %p192, %s189, 31
        %p194 = scmp.lt.s32.totalorder %s19, 0
        %s195 = scalar_select %p194, %s19, 0
        %s196 = sadd.s32 %s195, %s193
        %s197 = smul.addr %s191, 32
        %s198 = sadd.s32 %s196, %s197
        %s199 = smul.addr %s198, 4
        %s200 = scalar_lea.vmem %s0, %s199
        %s201 = smul.u32 32, %s17
      $region28: #{discriminator_forward.5} parent=23 // pred_fallthru
        _
    $region24: #{discriminator_forward.5} parent=5 // pred_fallthru
      _
    %p202 = scmp.le.s32.totalorder 1, %s9
    %p203 = scmp.lt.s32.totalorder %s9, 3
    %p204 = pnand %p202, %p203
    %p205 = pneg %p204
    // Predicated region
    $region29: #{discriminator_forward.5} parent=5 // pred_check
      _
    $region30: #{discriminator_forward.5} parent=5 // pred_check_branch
      %207 = sbr.rel (%p204) target = $region32
    $region31: #{discriminator_forward.5} parent=5 // pred_region
      %s208 = ssub.s32 %s9, 1
      %s209 = smul.u32 32, %s21
      %p210 = scmp.lt.s32.totalorder %s20, 1
      %s211 = scalar_select %p210, %s20, 1
      %p212 = scmp.lt.s32.totalorder %s209, 31
      %s213 = scalar_select %p212, %s209, 31
      %p214 = scmp.lt.s32.totalorder %s23, 0
      %s215 = scalar_select %p214, %s23, 0
      %s216 = sadd.s32 %s215, %s213
      %s217 = smul.addr %s211, 32
      %s218 = sadd.s32 %s216, %s217
      %s219 = smul.addr %s218, 4
      %s220 = scalar_lea.vmem %s0, %s219
      %p221 = pneg %p65
      %p222 = pneg %p62
      %s223 = smul.u32 16, %s23
      %p224 = scmp.lt.s32.totalorder %s223, 15
      %s225 = scalar_select %p224, %s223, 15
      %p226 = scmp.lt.s32.totalorder %s22, 0
      %s227 = scalar_select %p226, %s22, 0
      %s228 = sadd.s32 %s227, %s225
      %s229 = smul.addr %s228, 4
      %s230 = scalar_lea.vmem %s1, %s229
      %p231 = pneg %p93
      %p232 = pneg %p90
      %p233 = scmp.lt.s32.totalorder %s22, 0
      %s234 = scalar_select %p233, %s22, 0
      %s235 = scalar_lea.vmem %s2, %s234
      %p236 = pneg %p119
      %p237 = pneg %p116
      %p238 = pneg %p149
      %p239 = pneg %p146
      %s240 = smul.u32 32, %s21
      %p241 = scmp.lt.s32.totalorder %s20, 1
      %s242 = scalar_select %p241, %s20, 1
      %p243 = scmp.lt.s32.totalorder %s240, 31
      %s244 = scalar_select %p243, %s240, 31
      %p245 = scmp.lt.s32.totalorder %s22, 0
      %s246 = scalar_select %p245, %s22, 0
      %s247 = sadd.s32 %s246, %s244
      %s248 = smul.addr %s242, 32
      %s249 = sadd.s32 %s247, %s248
      %s250 = smul.addr %s249, 4
      %s251 = scalar_lea.vmem %s3, %s250
      %s252 = smul.u32 32, %s21
      %p253 = scmp.lt.s32.totalorder %s20, 1
      %s254 = scalar_select %p253, %s20, 1
      %p255 = scmp.lt.s32.totalorder %s252, 31
      %s256 = scalar_select %p255, %s252, 31
      %p257 = scmp.lt.s32.totalorder %s23, 0
      %s258 = scalar_select %p257, %s23, 0
      %s259 = sadd.s32 %s258, %s256
      %s260 = smul.addr %s254, 32
      %s261 = sadd.s32 %s259, %s260
      %s262 = smul.addr %s261, 4
      %s263 = scalar_lea.vmem %s0, %s262
      %s264 = smul.u32 32, %s21
      %s265 = smul.u32 16, %s23
      %p266 = scmp.lt.s32.totalorder %s265, 15
      %s267 = scalar_select %p266, %s265, 15
      %p268 = scmp.lt.s32.totalorder %s22, 0
      %s269 = scalar_select %p268, %s22, 0
      %s270 = sadd.s32 %s269, %s267
      %s271 = smul.addr %s270, 4
      %s272 = scalar_lea.vmem %s1, %s271
      %s273 = smul.u32 16, %s23
      %p274 = scmp.lt.s32.totalorder %s22, 0
      %s275 = scalar_select %p274, %s22, 0
      %s276 = scalar_lea.vmem %s2, %s275
      %s277 = smul.u32 32, %s21
      %p278 = scmp.lt.s32.totalorder %s20, 1
      %s279 = scalar_select %p278, %s20, 1
      %p280 = scmp.lt.s32.totalorder %s277, 31
      %s281 = scalar_select %p280, %s277, 31
      %p282 = scmp.lt.s32.totalorder %s22, 0
      %s283 = scalar_select %p282, %s22, 0
      %s284 = sadd.s32 %s283, %s281
      %s285 = smul.addr %s279, 32
      %s286 = sadd.s32 %s284, %s285
      %s287 = smul.addr %s286, 4
      %s288 = scalar_lea.vmem %s3, %s287
      %s289 = smul.u32 32, %s21
      %v290 = vld [vmem:[%s263] sm:$0xf]
      %v291 = vld [vmem:[%s263 + $0x4] sm:$0xf]
      %v292 = vld [vmem:[%s263 + $0x8] sm:$0xf]
      %v293 = vld [vmem:[%s263 + $0xc] sm:$0xf]
      %v294 = vld [vmem:[%s263 + $0x10] sm:$0xf]
      %v295 = vld [vmem:[%s263 + $0x14] sm:$0xf]
      %v296 = vld [vmem:[%s263 + $0x18] sm:$0xf]
      %v297 = vld [vmem:[%s263 + $0x1c] sm:$0xf]
      %v298 = vld [vmem:[%s263 + $0x20] sm:$0xf]
      %v299 = vld [vmem:[%s263 + $0x24] sm:$0xf]
      %v300 = vld [vmem:[%s263 + $0x28] sm:$0xf]
      %v301 = vld [vmem:[%s263 + $0x2c] sm:$0xf]
      %v302 = vld [vmem:[%s263 + $0x30] sm:$0xf]
      %v303 = vld [vmem:[%s263 + $0x34] sm:$0xf]
      %v304 = vld [vmem:[%s263 + $0x38] sm:$0xf]
      %v305 = vld [vmem:[%s263 + $0x3c] sm:$0xf]
      %v306 = vld [vmem:[%s263 + $0x40] sm:$0xf]
      %v307 = vld [vmem:[%s263 + $0x44] sm:$0xf]
      %v308 = vld [vmem:[%s263 + $0x48] sm:$0xf]
      %v309 = vld [vmem:[%s263 + $0x4c] sm:$0xf]
      %v310 = vld [vmem:[%s263 + $0x50] sm:$0xf]
      %v311 = vld [vmem:[%s263 + $0x54] sm:$0xf]
      %v312 = vld [vmem:[%s263 + $0x58] sm:$0xf]
      %v313 = vld [vmem:[%s263 + $0x5c] sm:$0xf]
      %v314 = vld [vmem:[%s263 + $0x60] sm:$0xf]
      %v315 = vld [vmem:[%s263 + $0x64] sm:$0xf]
      %v316 = vld [vmem:[%s263 + $0x68] sm:$0xf]
      %v317 = vld [vmem:[%s263 + $0x6c] sm:$0xf]
      %v318 = vld [vmem:[%s263 + $0x70] sm:$0xf]
      %v319 = vld [vmem:[%s263 + $0x74] sm:$0xf]
      %v320 = vld [vmem:[%s263 + $0x78] sm:$0xf]
      %v321 = vld [vmem:[%s263 + $0x7c] sm:$0xf]
      %v322 = vld [vmem:[%s272] sm:$0xf]
      %v323 = vld [vmem:[%s272 + $0x4] sm:$0xf]
      %v324 = vld [vmem:[%s272 + $0x8] sm:$0xf]
      %v325 = vld [vmem:[%s272 + $0xc] sm:$0xf]
      %v326 = vld [vmem:[%s272 + $0x10] sm:$0xf]
      %v327 = vld [vmem:[%s272 + $0x14] sm:$0xf]
      %v328 = vld [vmem:[%s272 + $0x18] sm:$0xf]
      %v329 = vld [vmem:[%s272 + $0x1c] sm:$0xf]
      %v330 = vld [vmem:[%s272 + $0x20] sm:$0xf]
      %v331 = vld [vmem:[%s272 + $0x24] sm:$0xf]
      %v332 = vld [vmem:[%s272 + $0x28] sm:$0xf]
      %v333 = vld [vmem:[%s272 + $0x2c] sm:$0xf]
      %v334 = vld [vmem:[%s272 + $0x30] sm:$0xf]
      %v335 = vld [vmem:[%s272 + $0x34] sm:$0xf]
      %v336 = vld [vmem:[%s272 + $0x38] sm:$0xf]
      %v337 = vld [vmem:[%s272 + $0x3c] sm:$0xf]
      %v338 = vld [vmem:[%s276] sm:$0x1]
      %v340 = vperm.slane %v338, 0
      %v374 = vunpack.c.l.b16 %v290
      %v375 = vunpack.c.l.b16 %v291
      %v376 = vunpack.c.l.b16 %v292
      %v377 = vunpack.c.l.b16 %v293
      %v378 = vunpack.c.l.b16 %v294
      %v379 = vunpack.c.l.b16 %v295
      %v380 = vunpack.c.l.b16 %v296
      %v381 = vunpack.c.l.b16 %v297
      %v382 = vunpack.c.l.b16 %v298
      %v383 = vunpack.c.l.b16 %v299
      %v384 = vunpack.c.l.b16 %v300
      %v385 = vunpack.c.l.b16 %v301
      %v386 = vunpack.c.l.b16 %v302
      %v387 = vunpack.c.l.b16 %v303
      %v388 = vunpack.c.l.b16 %v304
      %v389 = vunpack.c.l.b16 %v305
      %v390 = vunpack.c.l.b16 %v306
      %v391 = vunpack.c.l.b16 %v307
      %v392 = vunpack.c.l.b16 %v308
      %v393 = vunpack.c.l.b16 %v309
      %v394 = vunpack.c.l.b16 %v310
      %v395 = vunpack.c.l.b16 %v311
      %v396 = vunpack.c.l.b16 %v312
      %v397 = vunpack.c.l.b16 %v313
      %v398 = vunpack.c.l.b16 %v314
      %v399 = vunpack.c.l.b16 %v315
      %v400 = vunpack.c.l.b16 %v316
      %v401 = vunpack.c.l.b16 %v317
      %v402 = vunpack.c.l.b16 %v318
      %v403 = vunpack.c.l.b16 %v319
      %v404 = vunpack.c.l.b16 %v320
      %v405 = vunpack.c.l.b16 %v321
      %v406 = vpack.c.b16 %v375, %v374
      %v407 = vpack.c.b16 %v377, %v376
      %v408 = vpack.c.b16 %v379, %v378
      %v409 = vpack.c.b16 %v381, %v380
      %v410 = vpack.c.b16 %v383, %v382
      %v411 = vpack.c.b16 %v385, %v384
      %v412 = vpack.c.b16 %v387, %v386
      %v413 = vpack.c.b16 %v389, %v388
      %v414 = vpack.c.b16 %v391, %v390
      %v415 = vpack.c.b16 %v393, %v392
      %v416 = vpack.c.b16 %v395, %v394
      %v417 = vpack.c.b16 %v397, %v396
      %v418 = vpack.c.b16 %v399, %v398
      %v419 = vpack.c.b16 %v401, %v400
      %v420 = vpack.c.b16 %v403, %v402
      %v421 = vpack.c.b16 %v405, %v404
      %v454 = vunpack.c.l.b16 %v322
      %v455 = vunpack.c.l.b16 %v323
      %v456 = vunpack.c.l.b16 %v324
      %v457 = vunpack.c.l.b16 %v325
      %v458 = vunpack.c.l.b16 %v326
      %v459 = vunpack.c.l.b16 %v327
      %v460 = vunpack.c.l.b16 %v328
      %v461 = vunpack.c.l.b16 %v329
      %v462 = vunpack.c.l.b16 %v330
      %v463 = vunpack.c.l.b16 %v331
      %v464 = vunpack.c.l.b16 %v332
      %v465 = vunpack.c.l.b16 %v333
      %v466 = vunpack.c.l.b16 %v334
      %v467 = vunpack.c.l.b16 %v335
      %v468 = vunpack.c.l.b16 %v336
      %v469 = vunpack.c.l.b16 %v337
      %v470 = vpack.c.b16 %v455, %v454
      %v471 = vpack.c.b16 %v457, %v456
      %v472 = vpack.c.b16 %v459, %v458
      %v473 = vpack.c.b16 %v461, %v460
      %v474 = vpack.c.b16 %v463, %v462
      %v475 = vpack.c.b16 %v465, %v464
      %v476 = vpack.c.b16 %v467, %v466
      %v477 = vpack.c.b16 %v469, %v468
      %486 = vmatpush.bf16.msra.mxu0 %v477
      %487 = vmatpush.bf16.msra.mxu0 %v476
      %488 = vmatpush.bf16.msra.mxu0 %v475
      %489 = vmatpush.bf16.msra.mxu0 %v474
      %490 = vmatpush.bf16.msra.mxu0 %v473
      %491 = vmatpush.bf16.msra.mxu0 %v472
      %492 = vmatpush.bf16.msra.mxu0 %v471
      %493 = vmatpush.bf16.msra.mxu0 %v470
      %494 = vmatmul.bf16.gmra.mxu0 %v406
      %v495 = vpop.f32.mrf.mxu0
      %v496 = vadd.f32 %v340, %v495
      %v497 = vpop.f32.mrf.mxu0
      %v498 = vadd.f32 %v340, %v497
      %499 = vmatmul.bf16.gmra.mxu0 %v407
      %v500 = vpop.f32.mrf.mxu0
      %v501 = vadd.f32 %v340, %v500
      %v502 = vpop.f32.mrf.mxu0
      %v503 = vadd.f32 %v340, %v502
      %504 = vmatmul.bf16.gmra.mxu0 %v408
      %v505 = vpop.f32.mrf.mxu0
      %v506 = vadd.f32 %v340, %v505
      %v507 = vpop.f32.mrf.mxu0
      %v508 = vadd.f32 %v340, %v507
      %509 = vmatmul.bf16.gmra.mxu0 %v409
      %v510 = vpop.f32.mrf.mxu0
      %v511 = vadd.f32 %v340, %v510
      %v512 = vpop.f32.mrf.mxu0
      %v513 = vadd.f32 %v340, %v512
      %514 = vmatmul.bf16.gmra.mxu0 %v410
      %v515 = vpop.f32.mrf.mxu0
      %v516 = vadd.f32 %v340, %v515
      %v517 = vpop.f32.mrf.mxu0
      %v518 = vadd.f32 %v340, %v517
      %519 = vmatmul.bf16.gmra.mxu0 %v411
      %v520 = vpop.f32.mrf.mxu0
      %v521 = vadd.f32 %v340, %v520
      %v522 = vpop.f32.mrf.mxu0
      %v523 = vadd.f32 %v340, %v522
      %524 = vmatmul.bf16.gmra.mxu0 %v412
      %v525 = vpop.f32.mrf.mxu0
      %v526 = vadd.f32 %v340, %v525
      %v527 = vpop.f32.mrf.mxu0
      %v528 = vadd.f32 %v340, %v527
      %529 = vmatmul.bf16.gmra.mxu0 %v413
      %v530 = vpop.f32.mrf.mxu0
      %v531 = vadd.f32 %v340, %v530
      %v532 = vpop.f32.mrf.mxu0
      %v533 = vadd.f32 %v340, %v532
      %534 = vmatmul.bf16.gmra.mxu0 %v414
      %v535 = vpop.f32.mrf.mxu0
      %v536 = vadd.f32 %v340, %v535
      %v537 = vpop.f32.mrf.mxu0
      %v538 = vadd.f32 %v340, %v537
      %539 = vmatmul.bf16.gmra.mxu0 %v415
      %v540 = vpop.f32.mrf.mxu0
      %v541 = vadd.f32 %v340, %v540
      %v542 = vpop.f32.mrf.mxu0
      %v543 = vadd.f32 %v340, %v542
      %544 = vmatmul.bf16.gmra.mxu0 %v416
      %v545 = vpop.f32.mrf.mxu0
      %v546 = vadd.f32 %v340, %v545
      %v547 = vpop.f32.mrf.mxu0
      %v548 = vadd.f32 %v340, %v547
      %549 = vmatmul.bf16.gmra.mxu0 %v417
      %v550 = vpop.f32.mrf.mxu0
      %v551 = vadd.f32 %v340, %v550
      %v552 = vpop.f32.mrf.mxu0
      %v553 = vadd.f32 %v340, %v552
      %554 = vmatmul.bf16.gmra.mxu0 %v418
      %v555 = vpop.f32.mrf.mxu0
      %v556 = vadd.f32 %v340, %v555
      %v557 = vpop.f32.mrf.mxu0
      %v558 = vadd.f32 %v340, %v557
      %559 = vmatmul.bf16.gmra.mxu0 %v419
      %v560 = vpop.f32.mrf.mxu0
      %v561 = vadd.f32 %v340, %v560
      %v562 = vpop.f32.mrf.mxu0
      %v563 = vadd.f32 %v340, %v562
      %564 = vmatmul.bf16.gmra.mxu0 %v420
      %v565 = vpop.f32.mrf.mxu0
      %v566 = vadd.f32 %v340, %v565
      %v567 = vpop.f32.mrf.mxu0
      %v568 = vadd.f32 %v340, %v567
      %569 = vmatmul.bf16.gmra.mxu0 %v421
      %v570 = vpop.f32.mrf.mxu0
      %v571 = vadd.f32 %v340, %v570
      %v572 = vpop.f32.mrf.mxu0
      %v573 = vadd.f32 %v340, %v572
      %574 = vdwg.mxu0
      %v575 = vmul.f32 %v496, 0.2
      %v576 = vmul.f32 %v498, 0.2
      %v577 = vmul.f32 %v501, 0.2
      %v578 = vmul.f32 %v503, 0.2
      %v579 = vmul.f32 %v506, 0.2
      %v580 = vmul.f32 %v508, 0.2
      %v581 = vmul.f32 %v511, 0.2
      %v582 = vmul.f32 %v513, 0.2
      %v583 = vmul.f32 %v516, 0.2
      %v584 = vmul.f32 %v518, 0.2
      %v585 = vmul.f32 %v521, 0.2
      %v586 = vmul.f32 %v523, 0.2
      %v587 = vmul.f32 %v526, 0.2
      %v588 = vmul.f32 %v528, 0.2
      %v589 = vmul.f32 %v531, 0.2
      %v590 = vmul.f32 %v533, 0.2
      %v591 = vmul.f32 %v536, 0.2
      %v592 = vmul.f32 %v538, 0.2
      %v593 = vmul.f32 %v541, 0.2
      %v594 = vmul.f32 %v543, 0.2
      %v595 = vmul.f32 %v546, 0.2
      %v596 = vmul.f32 %v548, 0.2
      %v597 = vmul.f32 %v551, 0.2
      %v598 = vmul.f32 %v553, 0.2
      %v599 = vmul.f32 %v556, 0.2
      %v600 = vmul.f32 %v558, 0.2
      %v601 = vmul.f32 %v561, 0.2
      %v602 = vmul.f32 %v563, 0.2
      %v603 = vmul.f32 %v566, 0.2
      %v604 = vmul.f32 %v568, 0.2
      %v605 = vmul.f32 %v571, 0.2
      %v606 = vmul.f32 %v573, 0.2
      %v607 = vmax.f32 %v496, %v575
      %v608 = vmax.f32 %v498, %v576
      %v609 = vmax.f32 %v501, %v577
      %v610 = vmax.f32 %v503, %v578
      %v611 = vmax.f32 %v506, %v579
      %v612 = vmax.f32 %v508, %v580
      %v613 = vmax.f32 %v511, %v581
      %v614 = vmax.f32 %v513, %v582
      %v615 = vmax.f32 %v516, %v583
      %v616 = vmax.f32 %v518, %v584
      %v617 = vmax.f32 %v521, %v585
      %v618 = vmax.f32 %v523, %v586
      %v619 = vmax.f32 %v526, %v587
      %v620 = vmax.f32 %v528, %v588
      %v621 = vmax.f32 %v531, %v589
      %v622 = vmax.f32 %v533, %v590
      %v623 = vmax.f32 %v536, %v591
      %v624 = vmax.f32 %v538, %v592
      %v625 = vmax.f32 %v541, %v593
      %v626 = vmax.f32 %v543, %v594
      %v627 = vmax.f32 %v546, %v595
      %v628 = vmax.f32 %v548, %v596
      %v629 = vmax.f32 %v551, %v597
      %v630 = vmax.f32 %v553, %v598
      %v631 = vmax.f32 %v556, %v599
      %v632 = vmax.f32 %v558, %v600
      %v633 = vmax.f32 %v561, %v601
      %v634 = vmax.f32 %v563, %v602
      %v635 = vmax.f32 %v566, %v603
      %v636 = vmax.f32 %v568, %v604
      %v637 = vmax.f32 %v571, %v605
      %v638 = vmax.f32 %v573, %v606
      %v639 = vpack.c.bf16 %v607, %v607
      %v640 = vpack.c.bf16 %v608, %v608
      %v641 = vpack.c.bf16 %v609, %v609
      %v642 = vpack.c.bf16 %v610, %v610
      %v643 = vpack.c.bf16 %v611, %v611
      %v644 = vpack.c.bf16 %v612, %v612
      %v645 = vpack.c.bf16 %v613, %v613
      %v646 = vpack.c.bf16 %v614, %v614
      %v647 = vpack.c.bf16 %v615, %v615
      %v648 = vpack.c.bf16 %v616, %v616
      %v649 = vpack.c.bf16 %v617, %v617
      %v650 = vpack.c.bf16 %v618, %v618
      %v651 = vpack.c.bf16 %v619, %v619
      %v652 = vpack.c.bf16 %v620, %v620
      %v653 = vpack.c.bf16 %v621, %v621
      %v654 = vpack.c.bf16 %v622, %v622
      %v655 = vpack.c.bf16 %v623, %v623
      %v656 = vpack.c.bf16 %v624, %v624
      %v657 = vpack.c.bf16 %v625, %v625
      %v658 = vpack.c.bf16 %v626, %v626
      %v659 = vpack.c.bf16 %v627, %v627
      %v660 = vpack.c.bf16 %v628, %v628
      %v661 = vpack.c.bf16 %v629, %v629
      %v662 = vpack.c.bf16 %v630, %v630
      %v663 = vpack.c.bf16 %v631, %v631
      %v664 = vpack.c.bf16 %v632, %v632
      %v665 = vpack.c.bf16 %v633, %v633
      %v666 = vpack.c.bf16 %v634, %v634
      %v667 = vpack.c.bf16 %v635, %v635
      %v668 = vpack.c.bf16 %v636, %v636
      %v669 = vpack.c.bf16 %v637, %v637
      %v670 = vpack.c.bf16 %v638, %v638
      %671 = vst [vmem:[%s288] sm:$0xf] %v639
      %672 = vst [vmem:[%s288 + $0x4] sm:$0xf] %v640
      %673 = vst [vmem:[%s288 + $0x8] sm:$0xf] %v641
      %674 = vst [vmem:[%s288 + $0xc] sm:$0xf] %v642
      %675 = vst [vmem:[%s288 + $0x10] sm:$0xf] %v643
      %676 = vst [vmem:[%s288 + $0x14] sm:$0xf] %v644
      %677 = vst [vmem:[%s288 + $0x18] sm:$0xf] %v645
      %678 = vst [vmem:[%s288 + $0x1c] sm:$0xf] %v646
      %679 = vst [vmem:[%s288 + $0x20] sm:$0xf] %v647
      %680 = vst [vmem:[%s288 + $0x24] sm:$0xf] %v648
      %681 = vst [vmem:[%s288 + $0x28] sm:$0xf] %v649
      %682 = vst [vmem:[%s288 + $0x2c] sm:$0xf] %v650
      %683 = vst [vmem:[%s288 + $0x30] sm:$0xf] %v651
      %684 = vst [vmem:[%s288 + $0x34] sm:$0xf] %v652
      %685 = vst [vmem:[%s288 + $0x38] sm:$0xf] %v653
      %686 = vst [vmem:[%s288 + $0x3c] sm:$0xf] %v654
      %687 = vst [vmem:[%s288 + $0x40] sm:$0xf] %v655
      %688 = vst [vmem:[%s288 + $0x44] sm:$0xf] %v656
      %689 = vst [vmem:[%s288 + $0x48] sm:$0xf] %v657
      %690 = vst [vmem:[%s288 + $0x4c] sm:$0xf] %v658
      %691 = vst [vmem:[%s288 + $0x50] sm:$0xf] %v659
      %692 = vst [vmem:[%s288 + $0x54] sm:$0xf] %v660
      %693 = vst [vmem:[%s288 + $0x58] sm:$0xf] %v661
      %694 = vst [vmem:[%s288 + $0x5c] sm:$0xf] %v662
      %695 = vst [vmem:[%s288 + $0x60] sm:$0xf] %v663
      %696 = vst [vmem:[%s288 + $0x64] sm:$0xf] %v664
      %697 = vst [vmem:[%s288 + $0x68] sm:$0xf] %v665
      %698 = vst [vmem:[%s288 + $0x6c] sm:$0xf] %v666
      %699 = vst [vmem:[%s288 + $0x70] sm:$0xf] %v667
      %700 = vst [vmem:[%s288 + $0x74] sm:$0xf] %v668
      %701 = vst [vmem:[%s288 + $0x78] sm:$0xf] %v669
      %702 = vst [vmem:[%s288 + $0x7c] sm:$0xf] %v670
      %s703 = smul.u32 32, %s21
      %p704 = scmp.lt.s32.totalorder %s20, 1
      %s705 = scalar_select %p704, %s20, 1
      %p706 = scmp.lt.s32.totalorder %s703, 31
      %s707 = scalar_select %p706, %s703, 31
      %p708 = scmp.lt.s32.totalorder %s22, 0
      %s709 = scalar_select %p708, %s22, 0
      %s710 = sadd.s32 %s709, %s707
      %s711 = smul.addr %s705, 32
      %s712 = sadd.s32 %s710, %s711
      %s713 = smul.addr %s712, 4
      %s714 = scalar_lea.vmem %s3, %s713
      // Predicated region
      $region33: #{discriminator_forward.5} parent=31 // pred_check
        %p715 = pneg %p146
      $region34: #{discriminator_forward.5} parent=31 // pred_check_branch
        %717 = sbr.rel (%p715) target = $region36
      $region35: #{discriminator_forward.5} parent=31 // pred_region
        %s718 = smul.u32 32, %s21
      $region36: #{discriminator_forward.5} parent=31 // pred_fallthru
        _
    $region32: #{discriminator_forward.5} parent=5 // pred_fallthru
      _
    %p719 = scmp.le.s32.totalorder 2, %s9
    // Predicated region
    $region37: #{discriminator_forward.5} parent=5 // pred_check
      %p720 = pneg %p719
    $region38: #{discriminator_forward.5} parent=5 // pred_check_branch
      %722 = sbr.rel (%p720) target = $region40
    $region39: #{discriminator_forward.5} parent=5 // pred_region
      %s723 = ssub.s32 %s9, 2
      // Predicated region
      $region41: #{discriminator_forward.5} parent=39 // pred_check
        %p724 = pneg %p152
      $region42: #{discriminator_forward.5} parent=39 // pred_check_branch
        %726 = sbr.rel (%p724) target = $region44
      $region43: #{discriminator_forward.5} parent=39 // pred_region
        %s727 = smul.u32 32, %s25
        %p728 = scmp.lt.s32.totalorder %s24, 1
        %s729 = scalar_select %p728, %s24, 1
        %p730 = scmp.lt.s32.totalorder %s727, 31
        %s731 = scalar_select %p730, %s727, 31
        %p732 = scmp.lt.s32.totalorder %s26, 0
        %s733 = scalar_select %p732, %s26, 0
        %s734 = sadd.s32 %s733, %s731
        %s735 = smul.addr %s729, 32
        %s736 = sadd.s32 %s734, %s735
        %s737 = smul.addr %s736, 4
        %s738 = scalar_lea.vmem %s3, %s737
      $region44: #{discriminator_forward.5} parent=39 // pred_fallthru
        _
    $region40: #{discriminator_forward.5} parent=5 // pred_fallthru
      _
  $region6: #{discriminator_forward.5} parent=0 // loop_footer
    %s13 = sadd.s32 1, %s9
  $region7: #{discriminator_forward.5} parent=0 // loop_footer_branch
    %8 = sbr.rel target = $region3
  $region8: #{discriminator_forward.5} parent=0 // loop_exit
    _

// kernel: discriminator_forward.6
$region0: #{discriminator_forward.6}
  #allocation0 [shape = 'u32[]', space=smem, size = 0x4, offset = 0x4, fixed_abs, tag = 'smem constant byte address 0x4 - core index']
  #allocation1 [shape = 'u32[72,128]{1,0:T(1,128)}', space=vmem, size = 0x9000, scoped, tag = 'internal scratch']
  #allocation2 [shape = 'f32[64,128]{1,0:T(8,128)}', space=vmem, size = 0x8000, scoped, tag = 'scratch operand']
  %s0 = inlined_call_operand.vmem [shape: bf16[2,64,1024], index: 0, kind: input, shape index: {}]
  %s1 = inlined_call_operand.vmem [shape: bf16[1024,128], index: 1, kind: input, shape index: {}]
  %s2 = inlined_call_operand.vmem [shape: f32[1,128], index: 2, kind: input, shape index: {}]
  %s3 = inlined_call_operand.vmem [shape: bf16[2,64,128], index: 3, kind: output, shape index: {}]
  %s4 = sld [smem:[#allocation0]]
  $region76: #{discriminator_forward.6} parent=0
    _
  %s6 = ssub.s32 1, %s4
  %s7 = scalar_select 0, %s6, %s4
  $region1: #{discriminator_forward.6} parent=0
    #allocation3 [shape = 'u8[131072]{0}', space=vmem, size = 0x20000, scoped, tag = 'input window, operand 0']
    loop: start=0, step=1, limit=6
    $region2: #{discriminator_forward.6} parent=1 // loop_pre_header
      _
    $region3: #{discriminator_forward.6} parent=1 // loop_header
      %s9 = sphi 0, %s13
      %p10 = scmp.ge.s32.totalorder %s9, 6
      %s16 = sphi 0, %s42
      %s17 = sphi 0, %s38
      %s18 = sphi 0, %s34
      %s19 = sphi 0, %s30
      %s20 = sphi 0, %s16
      %s21 = sphi 0, %s17
      %s22 = sphi 0, %s18
      %s23 = sphi 0, %s19
      %s24 = sphi 0, %s20
      %s25 = sphi 0, %s21
      %s26 = sphi 0, %s22
      %s27 = sphi 0, %s23
      %s49 = sphi 0, %s51
      %s52 = sphi 0, %s49
      %s53 = sphi 0, %s52
      %s69 = sphi 0, %s53
      %s77 = sphi 0, %s79
      %s80 = sphi 0, %s77
      %s81 = sphi 0, %s80
      %s97 = sphi 0, %s81
      %s103 = sphi 0, %s105
      %s106 = sphi 0, %s103
      %s107 = sphi 0, %s106
      %s123 = sphi 0, %s107
      %s133 = sphi 0, %s135
      %s136 = sphi 0, %s133
      %s137 = sphi 0, %s136
      %s153 = sphi 0, %s137
    $region4: #{discriminator_forward.6} parent=1 // loop_header_branch
      %12 = sbr.rel (%p10) target = $region8
    $region5: #{discriminator_forward.6} parent=1 // loop_body
      %s14 = ssub.s32 %s9, 1
      %s15 = ssub.s32 %s9, 2
      %s28 = sadd.s32 1, %s19
      %p29 = scmp.ge.s32.totalorder %s28, 2
      %s30 = scalar_select %p29, 0, %s28
      %s31 = sadd.s32 1, %s18
      %s32 = scalar_select %p29, %s31, %s18
      %p33 = scmp.ge.s32.totalorder %s32, 1
      %s34 = scalar_select %p33, 0, %s32
      %s35 = sadd.s32 1, %s17
      %s36 = scalar_select %p33, %s35, %s17
      %p37 = scmp.ge.s32.totalorder %s36, 1
      %s38 = scalar_select %p37, 0, %s36
      %s39 = sadd.s32 1, %s16
      %s40 = scalar_select %p37, %s39, %s16
      %p41 = scmp.ge.s32.totalorder %s40, 2
      %s42 = scalar_select %p41, 0, %s40
      %s43 = ssub.s32 %s16, %s42
      %s44 = ssub.s32 %s17, %s38
      %s45 = sor.u32 %s43, %s44
      %s46 = ssub.s32 %s19, %s30
      %s47 = sor.u32 %s45, %s46
      %p48 = scmp.eq.s32.totalorder %s47, 0
      %s50 = sadd.s32 %s49, 1
      %s51 = scalar_select %p48, %s49, %s50
      %p54 = pneg %p48
      %p55 = scmp.eq.s32.totalorder %s9, 3
      %p56 = por %p54, %p55
      %p57 = scmp.ne.s32.totalorder %s49, %s52
      %p58 = scmp.eq.s32.totalorder %s9, 0
      %p59 = por %p57, %p58
      %p60 = scmp.ne.s32.totalorder %s49, %s52
      %p61 = scmp.eq.s32.totalorder %s14, 3
      %p62 = por %p60, %p61
      %p63 = scmp.ne.s32.totalorder %s52, %s53
      %p64 = scmp.eq.s32.totalorder %s14, 0
      %p65 = por %p63, %p64
      %p66 = scmp.ne.s32.totalorder %s52, %s53
      %p67 = scmp.eq.s32.totalorder %s15, 3
      %p68 = por %p66, %p67
      %p70 = scmp.ne.s32.totalorder %s53, %s69
      %p71 = scmp.eq.s32.totalorder %s15, 0
      %p72 = por %p70, %p71
      %s73 = ssub.s32 %s19, %s30
      %s74 = ssub.s32 %s18, %s34
      %s75 = sor.u32 %s73, %s74
      %p76 = scmp.eq.s32.totalorder %s75, 0
      %s78 = sadd.s32 %s77, 1
      %s79 = scalar_select %p76, %s77, %s78
      %p82 = pneg %p76
      %p83 = scmp.eq.s32.totalorder %s9, 3
      %p84 = por %p82, %p83
      %p85 = scmp.ne.s32.totalorder %s77, %s80
      %p86 = scmp.eq.s32.totalorder %s9, 0
      %p87 = por %p85, %p86
      %p88 = scmp.ne.s32.totalorder %s77, %s80
      %p89 = scmp.eq.s32.totalorder %s14, 3
      %p90 = por %p88, %p89
      %p91 = scmp.ne.s32.totalorder %s80, %s81
      %p92 = scmp.eq.s32.totalorder %s14, 0
      %p93 = por %p91, %p92
      %p94 = scmp.ne.s32.totalorder %s80, %s81
      %p95 = scmp.eq.s32.totalorder %s15, 3
      %p96 = por %p94, %p95
      %p98 = scmp.ne.s32.totalorder %s81, %s97
      %p99 = scmp.eq.s32.totalorder %s15, 0
      %p100 = por %p98, %p99
      %s101 = ssub.s32 %s18, %s34
      %p102 = scmp.eq.s32.totalorder %s101, 0
      %s104 = sadd.s32 %s103, 1
      %s105 = scalar_select %p102, %s103, %s104
      %p108 = pneg %p102
      %p109 = scmp.eq.s32.totalorder %s9, 3
      %p110 = por %p108, %p109
      %p111 = scmp.ne.s32.totalorder %s103, %s106
      %p112 = scmp.eq.s32.totalorder %s9, 0
      %p113 = por %p111, %p112
      %p114 = scmp.ne.s32.totalorder %s103, %s106
      %p115 = scmp.eq.s32.totalorder %s14, 3
      %p116 = por %p114, %p115
      %p117 = scmp.ne.s32.totalorder %s106, %s107
      %p118 = scmp.eq.s32.totalorder %s14, 0
      %p119 = por %p117, %p118
      %p120 = scmp.ne.s32.totalorder %s106, %s107
      %p121 = scmp.eq.s32.totalorder %s15, 3
      %p122 = por %p120, %p121
      %p124 = scmp.ne.s32.totalorder %s107, %s123
      %p125 = scmp.eq.s32.totalorder %s15, 0
      %p126 = por %p124, %p125
      %s127 = ssub.s32 %s16, %s42
      %s128 = ssub.s32 %s17, %s38
      %s129 = sor.u32 %s127, %s128
      %s130 = ssub.s32 %s18, %s34
      %s131 = sor.u32 %s129, %s130
      %p132 = scmp.eq.s32.totalorder %s131, 0
      %s134 = sadd.s32 %s133, 1
      %s135 = scalar_select %p132, %s133, %s134
      %p138 = pneg %p132
      %p139 = scmp.eq.s32.totalorder %s9, 3
      %p140 = por %p138, %p139
      %p141 = scmp.ne.s32.totalorder %s133, %s136
      %p142 = scmp.eq.s32.totalorder %s9, 0
      %p143 = por %p141, %p142
      %p144 = scmp.ne.s32.totalorder %s133, %s136
      %p145 = scmp.eq.s32.totalorder %s14, 3
      %p146 = por %p144, %p145
      %p147 = scmp.ne.s32.totalorder %s136, %s137
      %p148 = scmp.eq.s32.totalorder %s14, 0
      %p149 = por %p147, %p148
      %p150 = scmp.ne.s32.totalorder %s136, %s137
      %p151 = scmp.eq.s32.totalorder %s15, 3
      %p152 = por %p150, %p151
      %p154 = scmp.ne.s32.totalorder %s137, %s153
      %p155 = scmp.eq.s32.totalorder %s15, 0
      %p156 = por %p154, %p155
      %p157 = scmp.le.s32.totalorder 1, %s9
      %p158 = scmp.lt.s32.totalorder %s9, 5
      %p159 = pnand %p157, %p158
      %p160 = pneg %p159
      // Predicated region
      $region9: #{discriminator_forward.6} parent=5 // pred_check
        _
      $region10: #{discriminator_forward.6} parent=5 // pred_check_branch
        %162 = sbr.rel (%p159) target = $region12
      $region11: #{discriminator_forward.6} parent=5 // pred_region
        %s163 = ssub.s32 %s9, 1
        // Predicated region
        $region13: #{discriminator_forward.6} parent=11 // pred_check
          %p164 = pneg %p119
        $region14: #{discriminator_forward.6} parent=11 // pred_check_branch
          %166 = sbr.rel (%p164) target = $region16
        $region15: #{discriminator_forward.6} parent=11 // pred_region
          %p167 = scmp.lt.s32.totalorder %s22, 0
          %s168 = scalar_select %p167, %s22, 0
          %s169 = scalar_lea.vmem %s2, %s168
        $region16: #{discriminator_forward.6} parent=11 // pred_fallthru
          _
      $region12: #{discriminator_forward.6} parent=5 // pred_fallthru
        _
      %p170 = scmp.lt.s32.totalorder %s9, 4
      // Predicated region
      $region17: #{discriminator_forward.6} parent=5 // pred_check
        %p171 = pneg %p170
      $region18: #{discriminator_forward.6} parent=5 // pred_check_branch
        %173 = sbr.rel (%p171) target = $region20
      $region19: #{discriminator_forward.6} parent=5 // pred_region
        // Predicated region
        $region21: #{discriminator_forward.6} parent=19 // pred_check
          %p174 = pneg %p59
        $region22: #{discriminator_forward.6} parent=19 // pred_check_branch
          %176 = sbr.rel (%p174) target = $region24
        $region23: #{discriminator_forward.6} parent=19 // pred_region
          %s177 = sand.u32 %s49, 1
          %s178 = sand.u32 %s49, 1
          %s179 = smul.addr %s178, 128
          %s180 = scalar_lea.vmem [#allocation3], %s179
          %s181 = smul.u32 8, %s17
          %s182 = smul.u32 4, %s19
          %s183 = smul.addr %s181, 8
          %s184 = sadd.s32 %s182, %s183
          %s185 = smul.addr %s16, 64
          %s186 = sadd.s32 %s184, %s185
          %s187 = smul.addr %s186, 4
          %s188 = scalar_lea.vmem %s0, %s187
          // Predicated region
          $region25: #{discriminator_forward.6} parent=23 // pred_check
            _
          $region26: #{discriminator_forward.6} parent=23 // pred_check_branch
            %190 = sbr.rel (0) target = $region28
          $region27: #{discriminator_forward.6} parent=23 // pred_region
            // Predicated region
            $region29: #{discriminator_forward.6} parent=27 // pred_check
              _
            $region30: #{discriminator_forward.6} parent=27 // pred_check_branch
              %192 = sbr.rel (0) target = $region32
            $region31: #{discriminator_forward.6} parent=27 // pred_region
              loop: start=0, step=1, limit=1
              $region33: #{discriminator_forward.6} parent=31 // loop_pre_header
                _
              $region34: #{discriminator_forward.6} parent=31 // loop_header
                %s194 = sphi 0, %s198
                %p195 = scmp.ge.s32.totalorder %s194, 1
                %s199 = sphi %s188, %s188
                %s200 = sphi %s180, %s180
              $region35: #{discriminator_forward.6} parent=31 // loop_header_branch
                %197 = sbr.rel (%p195) target = $region39
              $region36: #{discriminator_forward.6} parent=31 // loop_body
                %v201 = vld [vmem:[%s199] sm:$0xff]
                %202 = vst [vmem:[%s200] sm:$0xff] %v201
                %v203 = vld [vmem:[%s199 + $0x8] sm:$0xff]
                %204 = vst [vmem:[%s200 + $0x8] sm:$0xff] %v203
                %v205 = vld [vmem:[%s199 + $0x20] sm:$0xff]
                %206 = vst [vmem:[%s200 + $0x10] sm:$0xff] %v205
                %v207 = vld [vmem:[%s199 + $0x28] sm:$0xff]
                %208 = vst [vmem:[%s200 + $0x18] sm:$0xff] %v207
                %v209 = vld [vmem:[%s199 + $0x40] sm:$0xff]
                %210 = vst [vmem:[%s200 + $0x20] sm:$0xff] %v209
                %v211 = vld [vmem:[%s199 + $0x48] sm:$0xff]
                %212 = vst [vmem:[%s200 + $0x28] sm:$0xff] %v211
                %v213 = vld [vmem:[%s199 + $0x60] sm:$0xff]
                %214 = vst [vmem:[%s200 + $0x30] sm:$0xff] %v213
                %v215 = vld [vmem:[%s199 + $0x68] sm:$0xff]
                %216 = vst [vmem:[%s200 + $0x38] sm:$0xff] %v215
                %v217 = vld [vmem:[%s199 + $0x80] sm:$0xff]
                %218 = vst [vmem:[%s200 + $0x40] sm:$0xff] %v217
                %v219 = vld [vmem:[%s199 + $0x88] sm:$0xff]
                %220 = vst [vmem:[%s200 + $0x48] sm:$0xff] %v219
                %v221 = vld [vmem:[%s199 + $0xa0] sm:$0xff]
                %222 = vst [vmem:[%s200 + $0x50] sm:$0xff] %v221
                %v223 = vld [vmem:[%s199 + $0xa8] sm:$0xff]
                %224 = vst [vmem:[%s200 + $0x58] sm:$0xff] %v223
                %v225 = vld [vmem:[%s199 + $0xc0] sm:$0xff]
                %226 = vst [vmem:[%s200 + $0x60] sm:$0xff] %v225
                %v227 = vld [vmem:[%s199 + $0xc8] sm:$0xff]
                %228 = vst [vmem:[%s200 + $0x68] sm:$0xff] %v227
                %v229 = vld [vmem:[%s199 + $0xe0] sm:$0xff]
                %230 = vst [vmem:[%s200 + $0x70] sm:$0xff] %v229
                %v231 = vld [vmem:[%s199 + $0xe8] sm:$0xff]
                %232 = vst [vmem:[%s200 + $0x78] sm:$0xff] %v231
              $region37: #{discriminator_forward.6} parent=31 // loop_footer
                %s198 = sadd.s32 1, %s194
              $region38: #{discriminator_forward.6} parent=31 // loop_footer_branch
                %193 = sbr.rel target = $region34
              $region39: #{discriminator_forward.6} parent=31 // loop_exit
                _
            $region32: #{discriminator_forward.6} parent=27 // pred_fallthru
              _
            // Predicated region
            $region40: #{discriminator_forward.6} parent=27 // pred_check
              _
            $region41: #{discriminator_forward.6} parent=27 // pred_check_branch
              %234 = sbr.rel target = $region43
            $region42: #{discriminator_forward.6} parent=27 // pred_region
              _
            $region43: #{discriminator_forward.6} parent=27 // pred_fallthru
              _
          $region28: #{discriminator_forward.6} parent=23 // pred_fallthru
            _
          %235 = vnop
        $region24: #{discriminator_forward.6} parent=19 // pred_fallthru
          _
        // Predicated region
        $region44: #{discriminator_forward.6} parent=19 // pred_check
          %p236 = pneg %p87
        $region45: #{discriminator_forward.6} parent=19 // pred_check_branch
          %238 = sbr.rel (%p236) target = $region47
        $region46: #{discriminator_forward.6} parent=19 // pred_region
          %s239 = smul.u32 64, %s19
          %p240 = scmp.lt.s32.totalorder %s239, 127
          %s241 = scalar_select %p240, %s239, 127
          %p242 = scmp.lt.s32.totalorder %s18, 0
          %s243 = scalar_select %p242, %s18, 0
          %s244 = sadd.s32 %s243, %s241
          %s245 = smul.addr %s244, 4
          %s246 = scalar_lea.vmem %s1, %s245
          %s247 = smul.u32 64, %s19
        $region47: #{discriminator_forward.6} parent=19 // pred_fallthru
          _
      $region20: #{discriminator_forward.6} parent=5 // pred_fallthru
        _
      %p248 = scmp.le.s32.totalorder 1, %s9
      %p249 = scmp.lt.s32.totalorder %s9, 5
      %p250 = pnand %p248, %p249
      %p251 = pneg %p250
      // Predicated region
      $region48: #{discriminator_forward.6} parent=5 // pred_check
        _
      $region49: #{discriminator_forward.6} parent=5 // pred_check_branch
        %253 = sbr.rel (%p250) target = $region51
      $region50: #{discriminator_forward.6} parent=5 // pred_region
        %s254 = ssub.s32 %s9, 1
        %s255 = sand.u32 %s52, 1
        %s256 = sand.u32 %s52, 1
        %s257 = smul.addr %s256, 128
        %s258 = scalar_lea.vmem [#allocation3], %s257
        // Predicated region
        $region52: #{discriminator_forward.6} parent=50 // pred_check
          %p259 = pneg %p65
        $region53: #{discriminator_forward.6} parent=50 // pred_check_branch
          %261 = sbr.rel (%p259) target = $region55
        $region54: #{discriminator_forward.6} parent=50 // pred_region
          _
        $region55: #{discriminator_forward.6} parent=50 // pred_fallthru
          _
        %s262 = sand.u32 %s52, 1
        %s263 = sand.u32 %s52, 1
        %s264 = smul.addr %s263, 128
        %s265 = scalar_lea.vmem [#allocation3], %s264
        %p266 = pneg %p65
        %p267 = pneg %p62
        %s268 = smul.u32 64, %s23
        %p269 = scmp.lt.s32.totalorder %s268, 127
        %s270 = scalar_select %p269, %s268, 127
        %p271 = scmp.lt.s32.totalorder %s22, 0
        %s272 = scalar_select %p271, %s22, 0
        %s273 = sadd.s32 %s272, %s270
        %s274 = smul.addr %s273, 4
        %s275 = scalar_lea.vmem %s1, %s274
        %p276 = pneg %p93
        %p277 = pneg %p90
        %p278 = scmp.lt.s32.totalorder %s22, 0
        %s279 = scalar_select %p278, %s22, 0
        %s280 = scalar_lea.vmem %s2, %s279
        %p281 = pneg %p119
        %p282 = pneg %p116
        %p283 = pneg %p149
        %p284 = pneg %p146
        %s285 = smul.u32 8, %s21
        %p286 = scmp.lt.s32.totalorder %s20, 1
        %s287 = scalar_select %p286, %s20, 1
        %p288 = scmp.lt.s32.totalorder %s285, 7
        %s289 = scalar_select %p288, %s285, 7
        %p290 = scmp.lt.s32.totalorder %s22, 0
        %s291 = scalar_select %p290, %s22, 0
        %s292 = sadd.s32 %s291, %s289
        %s293 = smul.addr %s287, 8
        %s294 = sadd.s32 %s292, %s293
        %s295 = smul.addr %s294, 4
        %s296 = scalar_lea.vmem %s3, %s295
        %s297 = smul.u32 8, %s21
        %s298 = smul.u32 4, %s23
        %s299 = smul.u32 64, %s23
        %p300 = scmp.lt.s32.totalorder %s299, 127
        %s301 = scalar_select %p300, %s299, 127
        %p302 = scmp.lt.s32.totalorder %s22, 0
        %s303 = scalar_select %p302, %s22, 0
        %s304 = sadd.s32 %s303, %s301
        %s305 = smul.addr %s304, 4
        %s306 = scalar_lea.vmem %s1, %s305
        %s307 = smul.u32 64, %s23
        %p308 = scmp.lt.s32.totalorder %s22, 0
        %s309 = scalar_select %p308, %s22, 0
        %s310 = scalar_lea.vmem %s2, %s309
        %s311 = smul.u32 8, %s21
        %p312 = scmp.lt.s32.totalorder %s20, 1
        %s313 = scalar_select %p312, %s20, 1
        %p314 = scmp.lt.s32.totalorder %s311, 7
        %s315 = scalar_select %p314, %s311, 7
        %p316 = scmp.lt.s32.totalorder %s22, 0
        %s317 = scalar_select %p316, %s22, 0
        %s318 = sadd.s32 %s317, %s315
        %s319 = smul.addr %s313, 8
        %s320 = sadd.s32 %s318, %s319
        %s321 = smul.addr %s320, 4
        %s322 = scalar_lea.vmem %s3, %s321
        %s323 = smul.u32 8, %s21
        %p324 = scmp.eq.s32.totalorder %s23, 0
        // Predicated region
        $region56: #{discriminator_forward.6} parent=50 // pred_check
          %p325 = pneg %p324
        $region57: #{discriminator_forward.6} parent=50 // pred_check_branch
          %327 = sbr.rel (%p325) target = $region59
        $region58: #{discriminator_forward.6} parent=50 // pred_region
          %328 = vst [vmem:[#allocation2] sm:$0xff] 0.0
          %329 = vst [vmem:[#allocation2 + $0x8] sm:$0xff] 0.0
          %330 = vst [vmem:[#allocation2 + $0x10] sm:$0xff] 0.0
          %331 = vst [vmem:[#allocation2 + $0x18] sm:$0xff] 0.0
          %332 = vst [vmem:[#allocation2 + $0x20] sm:$0xff] 0.0
          %333 = vst [vmem:[#allocation2 + $0x28] sm:$0xff] 0.0
          %334 = vst [vmem:[#allocation2 + $0x30] sm:$0xff] 0.0
          %335 = vst [vmem:[#allocation2 + $0x38] sm:$0xff] 0.0
        $region59: #{discriminator_forward.6} parent=50 // pred_fallthru
          _
        %v336 = vld [vmem:[#allocation2] sm:$0xff]
        %v337 = vld [vmem:[#allocation2 + $0x8] sm:$0xff]
        %v338 = vld [vmem:[#allocation2 + $0x10] sm:$0xff]
        %v339 = vld [vmem:[#allocation2 + $0x18] sm:$0xff]
        %v340 = vld [vmem:[#allocation2 + $0x20] sm:$0xff]
        %v341 = vld [vmem:[#allocation2 + $0x28] sm:$0xff]
        %v342 = vld [vmem:[#allocation2 + $0x30] sm:$0xff]
        %v343 = vld [vmem:[#allocation2 + $0x38] sm:$0xff]
        %v344 = vld [vmem:[%s258] sm:$0xff]
        %v345 = vld [vmem:[%s258 + $0x8] sm:$0xff]
        %v346 = vld [vmem:[%s258 + $0x10] sm:$0xff]
        %v347 = vld [vmem:[%s258 + $0x18] sm:$0xff]
        %v348 = vld [vmem:[%s258 + $0x20] sm:$0xff]
        %v349 = vld [vmem:[%s258 + $0x28] sm:$0xff]
        %v350 = vld [vmem:[%s258 + $0x30] sm:$0xff]
        %v351 = vld [vmem:[%s258 + $0x38] sm:$0xff]
        %v352 = vld [vmem:[%s258 + $0x40] sm:$0xff]
        %v353 = vld [vmem:[%s258 + $0x48] sm:$0xff]
        %v354 = vld [vmem:[%s258 + $0x50] sm:$0xff]
        %v355 = vld [vmem:[%s258 + $0x58] sm:$0xff]
        %v356 = vld [vmem:[%s258 + $0x60] sm:$0xff]
        %v357 = vld [vmem:[%s258 + $0x68] sm:$0xff]
        %v358 = vld [vmem:[%s258 + $0x70] sm:$0xff]
        %v359 = vld [vmem:[%s258 + $0x78] sm:$0xff]
        %v360 = vld [vmem:[%s306] sm:$0xf]
        %v361 = vld [vmem:[%s306 + $0x4] sm:$0xf]
        %v362 = vld [vmem:[%s306 + $0x8] sm:$0xf]
        %v363 = vld [vmem:[%s306 + $0xc] sm:$0xf]
        %v364 = vld [vmem:[%s306 + $0x10] sm:$0xf]
        %v365 = vld [vmem:[%s306 + $0x14] sm:$0xf]
        %v366 = vld [vmem:[%s306 + $0x18] sm:$0xf]
        %v367 = vld [vmem:[%s306 + $0x1c] sm:$0xf]
        %v368 = vld [vmem:[%s306 + $0x20] sm:$0xf]
        %v369 = vld [vmem:[%s306 + $0x24] sm:$0xf]
        %v370 = vld [vmem:[%s306 + $0x28] sm:$0xf]
        %v371 = vld [vmem:[%s306 + $0x2c] sm:$0xf]
        %v372 = vld [vmem:[%s306 + $0x30] sm:$0xf]
        %v373 = vld [vmem:[%s306 + $0x34] sm:$0xf]
        %v374 = vld [vmem:[%s306 + $0x38] sm:$0xf]
        %v375 = vld [vmem:[%s306 + $0x3c] sm:$0xf]
        %v376 = vld [vmem:[%s306 + $0x40] sm:$0xf]
        %v377 = vld [vmem:[%s306 + $0x44] sm:$0xf]
        %v378 = vld [vmem:[%s306 + $0x48] sm:$0xf]
        %v379 = vld [vmem:[%s306 + $0x4c] sm:$0xf]
        %v380 = vld [vmem:[%s306 + $0x50] sm:$0xf]
        %v381 = vld [vmem:[%s306 + $0x54] sm:$0xf]
        %v382 = vld [vmem:[%s306 + $0x58] sm:$0xf]
        %v383 = vld [vmem:[%s306 + $0x5c] sm:$0xf]
        %v384 = vld [vmem:[%s306 + $0x60] sm:$0xf]
        %v385 = vld [vmem:[%s306 + $0x64] sm:$0xf]
        %v386 = vld [vmem:[%s306 + $0x68] sm:$0xf]
        %v387 = vld [vmem:[%s306 + $0x6c] sm:$0xf]
        %v388 = vld [vmem:[%s306 + $0x70] sm:$0xf]
        %v389 = vld [vmem:[%s306 + $0x74] sm:$0xf]
        %v390 = vld [vmem:[%s306 + $0x78] sm:$0xf]
        %v391 = vld [vmem:[%s306 + $0x7c] sm:$0xf]
        %v392 = vld [vmem:[%s306 + $0x80] sm:$0xf]
        %v393 = vld [vmem:[%s306 + $0x84] sm:$0xf]
        %v394 = vld [vmem:[%s306 + $0x88] sm:$0xf]
        %v395 = vld [vmem:[%s306 + $0x8c] sm:$0xf]
        %v396 = vld [vmem:[%s306 + $0x90] sm:$0xf]
        %v397 = vld [vmem:[%s306 + $0x94] sm:$0xf]
        %v398 = vld [vmem:[%s306 + $0x98] sm:$0xf]
        %v399 = vld [vmem:[%s306 + $0x9c] sm:$0xf]
        %v400 = vld [vmem:[%s306 + $0xa0] sm:$0xf]
        %v401 = vld [vmem:[%s306 + $0xa4] sm:$0xf]
        %v402 = vld [vmem:[%s306 + $0xa8] sm:$0xf]
        %v403 = vld [vmem:[%s306 + $0xac] sm:$0xf]
        %v404 = vld [vmem:[%s306 + $0xb0] sm:$0xf]
        %v405 = vld [vmem:[%s306 + $0xb4] sm:$0xf]
        %v406 = vld [vmem:[%s306 + $0xb8] sm:$0xf]
        %v407 = vld [vmem:[%s306 + $0xbc] sm:$0xf]
        %v408 = vld [vmem:[%s306 + $0xc0] sm:$0xf]
        %v409 = vld [vmem:[%s306 + $0xc4] sm:$0xf]
        %v410 = vld [vmem:[%s306 + $0xc8] sm:$0xf]
        %v411 = vld [vmem:[%s306 + $0xcc] sm:$0xf]
        %v412 = vld [vmem:[%s306 + $0xd0] sm:$0xf]
        %v413 = vld [vmem:[%s306 + $0xd4] sm:$0xf]
        %v414 = vld [vmem:[%s306 + $0xd8] sm:$0xf]
        %v415 = vld [vmem:[%s306 + $0xdc] sm:$0xf]
        %v416 = vld [vmem:[%s306 + $0xe0] sm:$0xf]
        %v417 = vld [vmem:[%s306 + $0xe4] sm:$0xf]
        %v418 = vld [vmem:[%s306 + $0xe8] sm:$0xf]
        %v419 = vld [vmem:[%s306 + $0xec] sm:$0xf]
        %v420 = vld [vmem:[%s306 + $0xf0] sm:$0xf]
        %v421 = vld [vmem:[%s306 + $0xf4] sm:$0xf]
        %v422 = vld [vmem:[%s306 + $0xf8] sm:$0xf]
        %v423 = vld [vmem:[%s306 + $0xfc] sm:$0xf]
        %v440 = vunpack.c.l.b16 %v344
        %v441 = vunpack.c.h.b16 %v344
        %v442 = vunpack.c.l.b16 %v345
        %v443 = vunpack.c.h.b16 %v345
        %v444 = vunpack.c.l.b16 %v346
        %v445 = vunpack.c.h.b16 %v346
        %v446 = vunpack.c.l.b16 %v347
        %v447 = vunpack.c.h.b16 %v347
        %v448 = vunpack.c.l.b16 %v348
        %v449 = vunpack.c.h.b16 %v348
        %v450 = vunpack.c.l.b16 %v349
        %v451 = vunpack.c.h.b16 %v349
        %v452 = vunpack.c.l.b16 %v350
        %v453 = vunpack.c.h.b16 %v350
        %v454 = vunpack.c.l.b16 %v351
        %v455 = vunpack.c.h.b16 %v351
        %v456 = vunpack.c.l.b16 %v352
        %v457 = vunpack.c.h.b16 %v352
        %v458 = vunpack.c.l.b16 %v353
        %v459 = vunpack.c.h.b16 %v353
        %v460 = vunpack.c.l.b16 %v354
        %v461 = vunpack.c.h.b16 %v354
        %v462 = vunpack.c.l.b16 %v355
        %v463 = vunpack.c.h.b16 %v355
        %v464 = vunpack.c.l.b16 %v356
        %v465 = vunpack.c.h.b16 %v356
        %v466 = vunpack.c.l.b16 %v357
        %v467 = vunpack.c.h.b16 %v357
        %v468 = vunpack.c.l.b16 %v358
        %v469 = vunpack.c.h.b16 %v358
        %v470 = vunpack.c.l.b16 %v359
        %v471 = vunpack.c.h.b16 %v359
        %v472 = vpack.c.b16 %v444, %v440
        %v473 = vpack.c.b16 %v445, %v441
        %v474 = vpack.c.b16 %v446, %v442
        %v475 = vpack.c.b16 %v447, %v443
        %v476 = vpack.c.b16 %v452, %v448
        %v477 = vpack.c.b16 %v453, %v449
        %v478 = vpack.c.b16 %v454, %v450
        %v479 = vpack.c.b16 %v455, %v451
        %v480 = vpack.c.b16 %v460, %v456
        %v481 = vpack.c.b16 %v461, %v457
        %v482 = vpack.c.b16 %v462, %v458
        %v483 = vpack.c.b16 %v463, %v459
        %v484 = vpack.c.b16 %v468, %v464
        %v485 = vpack.c.b16 %v469, %v465
        %v486 = vpack.c.b16 %v470, %v466
        %v487 = vpack.c.b16 %v471, %v467
        %v568 = vunpack.c.l.b16 %v360
        %v569 = vunpack.c.l.b16 %v361
        %v570 = vunpack.c.l.b16 %v362
        %v571 = vunpack.c.l.b16 %v363
        %v572 = vunpack.c.l.b16 %v364
        %v573 = vunpack.c.l.b16 %v365
        %v574 = vunpack.c.l.b16 %v366
        %v575 = vunpack.c.l.b16 %v367
        %v576 = vunpack.c.l.b16 %v368
        %v577 = vunpack.c.l.b16 %v369
        %v578 = vunpack.c.l.b16 %v370
        %v579 = vunpack.c.l.b16 %v371
        %v580 = vunpack.c.l.b16 %v372
        %v581 = vunpack.c.l.b16 %v373
        %v582 = vunpack.c.l.b16 %v374
        %v583 = vunpack.c.l.b16 %v375
        %v584 = vunpack.c.l.b16 %v376
        %v585 = vunpack.c.l.b16 %v377
        %v586 = vunpack.c.l.b16 %v378
        %v587 = vunpack.c.l.b16 %v379
        %v588 = vunpack.c.l.b16 %v380
        %v589 = vunpack.c.l.b16 %v381
        %v590 = vunpack.c.l.b16 %v382
        %v591 = vunpack.c.l.b16 %v383
        %v592 = vunpack.c.l.b16 %v384
        %v593 = vunpack.c.l.b16 %v385
        %v594 = vunpack.c.l.b16 %v386
        %v595 = vunpack.c.l.b16 %v387
        %v596 = vunpack.c.l.b16 %v388
        %v597 = vunpack.c.l.b16 %v389
        %v598 = vunpack.c.l.b16 %v390
        %v599 = vunpack.c.l.b16 %v391
        %v600 = vunpack.c.l.b16 %v392
        %v601 = vunpack.c.l.b16 %v393
        %v602 = vunpack.c.l.b16 %v394
        %v603 = vunpack.c.l.b16 %v395
        %v604 = vunpack.c.l.b16 %v396
        %v605 = vunpack.c.l.b16 %v397
        %v606 = vunpack.c.l.b16 %v398
        %v607 = vunpack.c.l.b16 %v399
        %v608 = vunpack.c.l.b16 %v400
        %v609 = vunpack.c.l.b16 %v401
        %v610 = vunpack.c.l.b16 %v402
        %v611 = vunpack.c.l.b16 %v403
        %v612 = vunpack.c.l.b16 %v404
        %v613 = vunpack.c.l.b16 %v405
        %v614 = vunpack.c.l.b16 %v406
        %v615 = vunpack.c.l.b16 %v407
        %v616 = vunpack.c.l.b16 %v408
        %v617 = vunpack.c.l.b16 %v409
        %v618 = vunpack.c.l.b16 %v410
        %v619 = vunpack.c.l.b16 %v411
        %v620 = vunpack.c.l.b16 %v412
        %v621 = vunpack.c.l.b16 %v413
        %v622 = vunpack.c.l.b16 %v414
        %v623 = vunpack.c.l.b16 %v415
        %v624 = vunpack.c.l.b16 %v416
        %v625 = vunpack.c.l.b16 %v417
        %v626 = vunpack.c.l.b16 %v418
        %v627 = vunpack.c.l.b16 %v419
        %v628 = vunpack.c.l.b16 %v420
        %v629 = vunpack.c.l.b16 %v421
        %v630 = vunpack.c.l.b16 %v422
        %v631 = vunpack.c.l.b16 %v423
        %v632 = vpack.c.b16 %v569, %v568
        %v633 = vpack.c.b16 %v571, %v570
        %v634 = vpack.c.b16 %v573, %v572
        %v635 = vpack.c.b16 %v575, %v574
        %v636 = vpack.c.b16 %v577, %v576
        %v637 = vpack.c.b16 %v579, %v578
        %v638 = vpack.c.b16 %v581, %v580
        %v639 = vpack.c.b16 %v583, %v582
        %v640 = vpack.c.b16 %v585, %v584
        %v641 = vpack.c.b16 %v587, %v586
        %v642 = vpack.c.b16 %v589, %v588
        %v643 = vpack.c.b16 %v591, %v590
        %v644 = vpack.c.b16 %v593, %v592
        %v645 = vpack.c.b16 %v595, %v594
        %v646 = vpack.c.b16 %v597, %v596
        %v647 = vpack.c.b16 %v599, %v598
        %v648 = vpack.c.b16 %v601, %v600
        %v649 = vpack.c.b16 %v603, %v602
        %v650 = vpack.c.b16 %v605, %v604
        %v651 = vpack.c.b16 %v607, %v606
        %v652 = vpack.c.b16 %v609, %v608
        %v653 = vpack.c.b16 %v611, %v610
        %v654 = vpack.c.b16 %v613, %v612
        %v655 = vpack.c.b16 %v615, %v614
        %v656 = vpack.c.b16 %v617, %v616
        %v657 = vpack.c.b16 %v619, %v618
        %v658 = vpack.c.b16 %v621, %v620
        %v659 = vpack.c.b16 %v623, %v622
        %v660 = vpack.c.b16 %v625, %v624
        %v661 = vpack.c.b16 %v627, %v626
        %v662 = vpack.c.b16 %v629, %v628
        %v663 = vpack.c.b16 %v631, %v630
        %696 = vmatpush.bf16.msra.mxu0 %v639
        %697 = vmatpush.bf16.msra.mxu0 %v638
        %698 = vmatpush.bf16.msra.mxu0 %v637
        %699 = vmatpush.bf16.msra.mxu0 %v636
        %700 = vmatpush.bf16.msra.mxu0 %v635
        %701 = vmatpush.bf16.msra.mxu0 %v634
        %702 = vmatpush.bf16.msra.mxu0 %v633
        %703 = vmatpush.bf16.msra.mxu0 %v632
        %704 = vmatmul.bf16.gmra.mxu0 %v472
        %v705 = vpop.f32.mrf.mxu0
        %v706 = vadd.f32 0.0, %v705
        %v707 = vpop.f32.mrf.mxu0
        %v708 = vadd.f32 0.0, %v707
        %709 = vmatmul.bf16.gmra.mxu0 %v476
        %v710 = vpop.f32.mrf.mxu0
        %v711 = vadd.f32 0.0, %v710
        %v712 = vpop.f32.mrf.mxu0
        %v713 = vadd.f32 0.0, %v712
        %714 = vmatmul.bf16.gmra.mxu0 %v480
        %v715 = vpop.f32.mrf.mxu0
        %v716 = vadd.f32 0.0, %v715
        %v717 = vpop.f32.mrf.mxu0
        %v718 = vadd.f32 0.0, %v717
        %719 = vmatmul.bf16.gmra.mxu0 %v484
        %v720 = vpop.f32.mrf.mxu0
        %v721 = vadd.f32 0.0, %v720
        %v722 = vpop.f32.mrf.mxu0
        %v723 = vadd.f32 0.0, %v722
        %724 = vdwg.mxu0
        %725 = vmatpush.bf16.msra.mxu0 %v647
        %726 = vmatpush.bf16.msra.mxu0 %v646
        %727 = vmatpush.bf16.msra.mxu0 %v645
        %728 = vmatpush.bf16.msra.mxu0 %v644
        %729 = vmatpush.bf16.msra.mxu0 %v643
        %730 = vmatpush.bf16.msra.mxu0 %v642
        %731 = vmatpush.bf16.msra.mxu0 %v641
        %732 = vmatpush.bf16.msra.mxu0 %v640
        %733 = vmatmul.bf16.gmra.mxu0 %v473
        %v734 = vpop.f32.mrf.mxu0
        %v735 = vadd.f32 %v706, %v734
        %v736 = vpop.f32.mrf.mxu0
        %v737 = vadd.f32 %v708, %v736
        %738 = vmatmul.bf16.gmra.mxu0 %v477
        %v739 = vpop.f32.mrf.mxu0
        %v740 = vadd.f32 %v711, %v739
        %v741 = vpop.f32.mrf.mxu0
        %v742 = vadd.f32 %v713, %v741
        %743 = vmatmul.bf16.gmra.mxu0 %v481
        %v744 = vpop.f32.mrf.mxu0
        %v745 = vadd.f32 %v716, %v744
        %v746 = vpop.f32.mrf.mxu0
        %v747 = vadd.f32 %v718, %v746
        %748 = vmatmul.bf16.gmra.mxu0 %v485
        %v749 = vpop.f32.mrf.mxu0
        %v750 = vadd.f32 %v721, %v749
        %v751 = vpop.f32.mrf.mxu0
        %v752 = vadd.f32 %v723, %v751
        %753 = vdwg.mxu0
        %754 = vmatpush.bf16.msra.mxu0 %v655
        %755 = vmatpush.bf16.msra.mxu0 %v654
        %756 = vmatpush.bf16.msra.mxu0 %v653
        %757 = vmatpush.bf16.msra.mxu0 %v652
        %758 = vmatpush.bf16.msra.mxu0 %v651
        %759 = vmatpush.bf16.msra.mxu0 %v650
        %760 = vmatpush.bf16.msra.mxu0 %v649
        %761 = vmatpush.bf16.msra.mxu0 %v648
        %762 = vmatmul.bf16.gmra.mxu0 %v474
        %v763 = vpop.f32.mrf.mxu0
        %v764 = vadd.f32 %v735, %v763
        %v765 = vpop.f32.mrf.mxu0
        %v766 = vadd.f32 %v737, %v765
        %767 = vmatmul.bf16.gmra.mxu0 %v478
        %v768 = vpop.f32.mrf.mxu0
        %v769 = vadd.f32 %v740, %v768
        %v770 = vpop.f32.mrf.mxu0
        %v771 = vadd.f32 %v742, %v770
        %772 = vmatmul.bf16.gmra.mxu0 %v482
        %v773 = vpop.f32.mrf.mxu0
        %v774 = vadd.f32 %v745, %v773
        %v775 = vpop.f32.mrf.mxu0
        %v776 = vadd.f32 %v747, %v775
        %777 = vmatmul.bf16.gmra.mxu0 %v486
        %v778 = vpop.f32.mrf.mxu0
        %v779 = vadd.f32 %v750, %v778
        %v780 = vpop.f32.mrf.mxu0
        %v781 = vadd.f32 %v752, %v780
        %782 = vdwg.mxu0
        %783 = vmatpush.bf16.msra.mxu0 %v663
        %784 = vmatpush.bf16.msra.mxu0 %v662
        %785 = vmatpush.bf16.msra.mxu0 %v661
        %786 = vmatpush.bf16.msra.mxu0 %v660
        %787 = vmatpush.bf16.msra.mxu0 %v659
        %788 = vmatpush.bf16.msra.mxu0 %v658
        %789 = vmatpush.bf16.msra.mxu0 %v657
        %790 = vmatpush.bf16.msra.mxu0 %v656
        %791 = vmatmul.bf16.gmra.mxu0 %v475
        %v792 = vpop.f32.mrf.mxu0
        %v793 = vadd.f32 %v764, %v792
        %v794 = vpop.f32.mrf.mxu0
        %v795 = vadd.f32 %v766, %v794
        %796 = vmatmul.bf16.gmra.mxu0 %v479
        %v797 = vpop.f32.mrf.mxu0
        %v798 = vadd.f32 %v769, %v797
        %v799 = vpop.f32.mrf.mxu0
        %v800 = vadd.f32 %v771, %v799
        %801 = vmatmul.bf16.gmra.mxu0 %v483
        %v802 = vpop.f32.mrf.mxu0
        %v803 = vadd.f32 %v774, %v802
        %v804 = vpop.f32.mrf.mxu0
        %v805 = vadd.f32 %v776, %v804
        %806 = vmatmul.bf16.gmra.mxu0 %v487
        %v807 = vpop.f32.mrf.mxu0
        %v808 = vadd.f32 %v779, %v807
        %v809 = vpop.f32.mrf.mxu0
        %v810 = vadd.f32 %v781, %v809
        %811 = vdwg.mxu0
        %v812 = vadd.f32 %v336, %v793
        %v813 = vadd.f32 %v337, %v795
        %v814 = vadd.f32 %v338, %v798
        %v815 = vadd.f32 %v339, %v800
        %v816 = vadd.f32 %v340, %v803
        %v817 = vadd.f32 %v341, %v805
        %v818 = vadd.f32 %v342, %v808
        %v819 = vadd.f32 %v343, %v810
        %820 = vst [vmem:[#allocation2] sm:$0xff] %v812
        %821 = vst [vmem:[#allocation2 + $0x8] sm:$0xff] %v813
        %822 = vst [vmem:[#allocation2 + $0x10] sm:$0xff] %v814
        %823 = vst [vmem:[#allocation2 + $0x18] sm:$0xff] %v815
        %824 = vst [vmem:[#allocation2 + $0x20] sm:$0xff] %v816
        %825 = vst [vmem:[#allocation2 + $0x28] sm:$0xff] %v817
        %826 = vst [vmem:[#allocation2 + $0x30] sm:$0xff] %v818
        %827 = vst [vmem:[#allocation2 + $0x38] sm:$0xff] %v819
        %p828 = scmp.eq.s32.totalorder %s23, 1
        // Predicated region
        $region60: #{discriminator_forward.6} parent=50 // pred_check
          %p829 = pneg %p828
        $region61: #{discriminator_forward.6} parent=50 // pred_check_branch
          %831 = sbr.rel (%p829) target = $region63
        $region62: #{discriminator_forward.6} parent=50 // pred_region
          %v832 = vld [vmem:[#allocation2] sm:$0xff]
          %v833 = vld [vmem:[#allocation2 + $0x8] sm:$0xff]
          %v834 = vld [vmem:[#allocation2 + $0x10] sm:$0xff]
          %v835 = vld [vmem:[#allocation2 + $0x18] sm:$0xff]
          %v836 = vld [vmem:[#allocation2 + $0x20] sm:$0xff]
          %v837 = vld [vmem:[#allocation2 + $0x28] sm:$0xff]
          %v838 = vld [vmem:[#allocation2 + $0x30] sm:$0xff]
          %v839 = vld [vmem:[#allocation2 + $0x38] sm:$0xff]
          %v840 = vld [vmem:[%s310] sm:$0x1]
          %v842 = vperm.slane %v840, 0
          %v844 = vadd.f32 %v832, %v842
          %v845 = vadd.f32 %v833, %v842
          %v846 = vadd.f32 %v834, %v842
          %v847 = vadd.f32 %v835, %v842
          %v848 = vadd.f32 %v836, %v842
          %v849 = vadd.f32 %v837, %v842
          %v850 = vadd.f32 %v838, %v842
          %v851 = vadd.f32 %v839, %v842
          %v852 = vadd.f32 %v844, %v845
          %v853 = vadd.f32 %v852, %v846
          %v854 = vadd.f32 %v853, %v847
          %v855 = vadd.f32 %v854, %v848
          %v856 = vadd.f32 %v855, %v849
          %v857 = vadd.f32 %v856, %v850
          %v858 = vadd.f32 %v857, %v851
          %v859 = vrot.slane %v858, 4
          %v860 = vadd.f32 %v858, %v859
          %v861 = vrot.slane %v860, 2
          %v862 = vadd.f32 %v860, %v861
          %v863 = vrot.slane %v862, 1
          %v864 = vadd.f32 %v862, %v863
          %v865 = vmul.f32 %v864, 0.015625
          %v866 = vsub.f32 %v844, %v865
          %v867 = vsub.f32 %v845, %v865
          %v868 = vsub.f32 %v846, %v865
          %v869 = vsub.f32 %v847, %v865
          %v870 = vsub.f32 %v848, %v865
          %v871 = vsub.f32 %v849, %v865
          %v872 = vsub.f32 %v850, %v865
          %v873 = vsub.f32 %v851, %v865
          %v874 = vmul.f32 %v866, %v866
          %v875 = vmul.f32 %v867, %v867
          %v876 = vmul.f32 %v868, %v868
          %v877 = vmul.f32 %v869, %v869
          %v878 = vmul.f32 %v870, %v870
          %v879 = vmul.f32 %v871, %v871
          %v880 = vmul.f32 %v872, %v872
          %v881 = vmul.f32 %v873, %v873
          %v882 = vadd.f32 %v874, %v875
          %v883 = vadd.f32 %v882, %v876
          %v884 = vadd.f32 %v883, %v877
          %v885 = vadd.f32 %v884, %v878
          %v886 = vadd.f32 %v885, %v879
          %v887 = vadd.f32 %v886, %v880
          %v888 = vadd.f32 %v887, %v881
          %v889 = vrot.slane %v888, 4
          %v890 = vadd.f32 %v888, %v889
          %v891 = vrot.slane %v890, 2
          %v892 = vadd.f32 %v890, %v891
          %v893 = vrot.slane %v892, 1
          %v894 = vadd.f32 %v892, %v893
          %v895 = vmul.f32 %v894, 0.015625
          %v896 = vadd.f32 %v895, 1e-05
          %v897 = vrsqrt.pop %v896
          %v898 = vmul.f32 %v897, %v896
          %v899 = vmul.f32 %v898, %v897
          %v900 = vmul.f32 0.5, %v899
          %v901 = vsub.f32 1.5, %v900
          %v902 = vmul.f32 %v897, %v901
          %vm903 = vweird.f32 %v896
          %vm904 = vweird.f32 %v897
          %vm905 = vmor %vm903, %vm904
          %v906 = vsel %vm905, %v897, %v902
          %v907 = vmul.f32 %v866, %v906
          %v908 = vmul.f32 %v867, %v906
          %v909 = vmul.f32 %v868, %v906
          %v910 = vmul.f32 %v869, %v906
          %v911 = vmul.f32 %v870, %v906
          %v912 = vmul.f32 %v871, %v906
          %v913 = vmul.f32 %v872, %v906
          %v914 = vmul.f32 %v873, %v906
          %v915 = vmul.f32 %v907, 0.2
          %v916 = vmul.f32 %v908, 0.2
          %v917 = vmul.f32 %v909, 0.2
          %v918 = vmul.f32 %v910, 0.2
          %v919 = vmul.f32 %v911, 0.2
          %v920 = vmul.f32 %v912, 0.2
          %v921 = vmul.f32 %v913, 0.2
          %v922 = vmul.f32 %v914, 0.2
          %v923 = vmax.f32 %v907, %v915
          %v924 = vmax.f32 %v908, %v916
          %v925 = vmax.f32 %v909, %v917
          %v926 = vmax.f32 %v910, %v918
          %v927 = vmax.f32 %v911, %v919
          %v928 = vmax.f32 %v912, %v920
          %v929 = vmax.f32 %v913, %v921
          %v930 = vmax.f32 %v914, %v922
          %v931 = vpack.c.bf16 %v923, %v923
          %v932 = vpack.c.bf16 %v924, %v924
          %v933 = vpack.c.bf16 %v925, %v925
          %v934 = vpack.c.bf16 %v926, %v926
          %v935 = vpack.c.bf16 %v927, %v927
          %v936 = vpack.c.bf16 %v928, %v928
          %v937 = vpack.c.bf16 %v929, %v929
          %v938 = vpack.c.bf16 %v930, %v930
          %939 = vst [vmem:[%s322] sm:$0xf] %v931
          %940 = vst [vmem:[%s322 + $0x4] sm:$0xf] %v932
          %941 = vst [vmem:[%s322 + $0x8] sm:$0xf] %v933
          %942 = vst [vmem:[%s322 + $0xc] sm:$0xf] %v934
          %943 = vst [vmem:[%s322 + $0x10] sm:$0xf] %v935
          %944 = vst [vmem:[%s322 + $0x14] sm:$0xf] %v936
          %945 = vst [vmem:[%s322 + $0x18] sm:$0xf] %v937
          %946 = vst [vmem:[%s322 + $0x1c] sm:$0xf] %v938
        $region63: #{discriminator_forward.6} parent=50 // pred_fallthru
          _
        %s947 = smul.u32 8, %s21
        %p948 = scmp.lt.s32.totalorder %s20, 1
        %s949 = scalar_select %p948, %s20, 1
        %p950 = scmp.lt.s32.totalorder %s947, 7
        %s951 = scalar_select %p950, %s947, 7
        %p952 = scmp.lt.s32.totalorder %s22, 0
        %s953 = scalar_select %p952, %s22, 0
        %s954 = sadd.s32 %s953, %s951
        %s955 = smul.addr %s949, 8
        %s956 = sadd.s32 %s954, %s955
        %s957 = smul.addr %s956, 4
        %s958 = scalar_lea.vmem %s3, %s957
        // Predicated region
        $region64: #{discriminator_forward.6} parent=50 // pred_check
          %p959 = pneg %p146
        $region65: #{discriminator_forward.6} parent=50 // pred_check_branch
          %961 = sbr.rel (%p959) target = $region67
        $region66: #{discriminator_forward.6} parent=50 // pred_region
          %s962 = smul.u32 8, %s21
        $region67: #{discriminator_forward.6} parent=50 // pred_fallthru
          _
      $region51: #{discriminator_forward.6} parent=5 // pred_fallthru
        _
      %p963 = scmp.le.s32.totalorder 2, %s9
      // Predicated region
      $region68: #{discriminator_forward.6} parent=5 // pred_check
        %p964 = pneg %p963
      $region69: #{discriminator_forward.6} parent=5 // pred_check_branch
        %966 = sbr.rel (%p964) target = $region71
      $region70: #{discriminator_forward.6} parent=5 // pred_region
        %s967 = ssub.s32 %s9, 2
        // Predicated region
        $region72: #{discriminator_forward.6} parent=70 // pred_check
          %p968 = pneg %p152
        $region73: #{discriminator_forward.6} parent=70 // pred_check_branch
          %970 = sbr.rel (%p968) target = $region75
        $region74: #{discriminator_forward.6} parent=70 // pred_region
          %s971 = smul.u32 8, %s25
          %p972 = scmp.lt.s32.totalorder %s24, 1
          %s973 = scalar_select %p972, %s24, 1
          %p974 = scmp.lt.s32.totalorder %s971, 7
          %s975 = scalar_select %p974, %s971, 7
          %p976 = scmp.lt.s32.totalorder %s26, 0
          %s977 = scalar_select %p976, %s26, 0
          %s978 = sadd.s32 %s977, %s975
          %s979 = smul.addr %s973, 8
          %s980 = sadd.s32 %s978, %s979
          %s981 = smul.addr %s980, 4
          %s982 = scalar_lea.vmem %s3, %s981
        $region75: #{discriminator_forward.6} parent=70 // pred_fallthru
          _
      $region71: #{discriminator_forward.6} parent=5 // pred_fallthru
        _
    $region6: #{discriminator_forward.6} parent=1 // loop_footer
      %s13 = sadd.s32 1, %s9
    $region7: #{discriminator_forward.6} parent=1 // loop_footer_branch
      %8 = sbr.rel target = $region3
    $region8: #{discriminator_forward.6} parent=1 // loop_exit
      _

// kernel: discriminator_forward.7
$region0: #{discriminator_forward.7}
  #allocation0 [shape = 'u32[]', space=smem, size = 0x4, offset = 0x4, fixed_abs, tag = 'smem constant byte address 0x4 - core index']
  #allocation1 [shape = 'u32[72,128]{1,0:T(1,128)}', space=vmem, size = 0x9000, scoped, tag = 'internal scratch']
  #allocation2 [shape = 'f32[16,256]{1,0:T(8,128)}', space=vmem, size = 0x4000, scoped, tag = 'scratch operand']
  %s0 = inlined_call_operand.vmem [shape: bf16[2,16,2048], index: 0, kind: input, shape index: {}]
  %s1 = inlined_call_operand.vmem [shape: bf16[2048,256], index: 1, kind: input, shape index: {}]
  %s2 = inlined_call_operand.vmem [shape: f32[1,256], index: 2, kind: input, shape index: {}]
  %s3 = inlined_call_operand.vmem [shape: bf16[2,16,256], index: 3, kind: output, shape index: {}]
  %s4 = sld [smem:[#allocation0]]
  $region76: #{discriminator_forward.7} parent=0
    _
  %s6 = ssub.s32 1, %s4
  %s7 = scalar_select 0, %s6, %s4
  $region1: #{discriminator_forward.7} parent=0
    #allocation3 [shape = 'u8[32768]{0}', space=vmem, size = 0x8000, scoped, tag = 'input window, operand 0']
    loop: start=0, step=1, limit=10
    $region2: #{discriminator_forward.7} parent=1 // loop_pre_header
      _
    $region3: #{discriminator_forward.7} parent=1 // loop_header
      %s9 = sphi 0, %s13
      %p10 = scmp.ge.s32.totalorder %s9, 10
      %s16 = sphi 0, %s42
      %s17 = sphi 0, %s38
      %s18 = sphi 0, %s34
      %s19 = sphi 0, %s30
      %s20 = sphi 0, %s16
      %s21 = sphi 0, %s17
      %s22 = sphi 0, %s18
      %s23 = sphi 0, %s19
      %s24 = sphi 0, %s20
      %s25 = sphi 0, %s21
      %s26 = sphi 0, %s22
      %s27 = sphi 0, %s23
      %s49 = sphi 0, %s51
      %s52 = sphi 0, %s49
      %s53 = sphi 0, %s52
      %s69 = sphi 0, %s53
      %s77 = sphi 0, %s79
      %s80 = sphi 0, %s77
      %s81 = sphi 0, %s80
      %s97 = sphi 0, %s81
      %s103 = sphi 0, %s105
      %s106 = sphi 0, %s103
      %s107 = sphi 0, %s106
      %s123 = sphi 0, %s107
      %s133 = sphi 0, %s135
      %s136 = sphi 0, %s133
      %s137 = sphi 0, %s136
      %s153 = sphi 0, %s137
    $region4: #{discriminator_forward.7} parent=1 // loop_header_branch
      %12 = sbr.rel (%p10) target = $region8
    $region5: #{discriminator_forward.7} parent=1 // loop_body
      %s14 = ssub.s32 %s9, 1
      %s15 = ssub.s32 %s9, 2
      %s28 = sadd.s32 1, %s19
      %p29 = scmp.ge.s32.totalorder %s28, 4
      %s30 = scalar_select %p29, 0, %s28
      %s31 = sadd.s32 1, %s18
      %s32 = scalar_select %p29, %s31, %s18
      %p33 = scmp.ge.s32.totalorder %s32, 1
      %s34 = scalar_select %p33, 0, %s32
      %s35 = sadd.s32 1, %s17
      %s36 = scalar_select %p33, %s35, %s17
      %p37 = scmp.ge.s32.totalorder %s36, 1
      %s38 = scalar_select %p37, 0, %s36
      %s39 = sadd.s32 1, %s16
      %s40 = scalar_select %p37, %s39, %s16
      %p41 = scmp.ge.s32.totalorder %s40, 2
      %s42 = scalar_select %p41, 0, %s40
      %s43 = ssub.s32 %s16, %s42
      %s44 = ssub.s32 %s17, %s38
      %s45 = sor.u32 %s43, %s44
      %s46 = ssub.s32 %s19, %s30
      %s47 = sor.u32 %s45, %s46
      %p48 = scmp.eq.s32.totalorder %s47, 0
      %s50 = sadd.s32 %s49, 1
      %s51 = scalar_select %p48, %s49, %s50
      %p54 = pneg %p48
      %p55 = scmp.eq.s32.totalorder %s9, 7
      %p56 = por %p54, %p55
      %p57 = scmp.ne.s32.totalorder %s49, %s52
      %p58 = scmp.eq.s32.totalorder %s9, 0
      %p59 = por %p57, %p58
      %p60 = scmp.ne.s32.totalorder %s49, %s52
      %p61 = scmp.eq.s32.totalorder %s14, 7
      %p62 = por %p60, %p61
      %p63 = scmp.ne.s32.totalorder %s52, %s53
      %p64 = scmp.eq.s32.totalorder %s14, 0
      %p65 = por %p63, %p64
      %p66 = scmp.ne.s32.totalorder %s52, %s53
      %p67 = scmp.eq.s32.totalorder %s15, 7
      %p68 = por %p66, %p67
      %p70 = scmp.ne.s32.totalorder %s53, %s69
      %p71 = scmp.eq.s32.totalorder %s15, 0
      %p72 = por %p70, %p71
      %s73 = ssub.s32 %s19, %s30
      %s74 = ssub.s32 %s18, %s34
      %s75 = sor.u32 %s73, %s74
      %p76 = scmp.eq.s32.totalorder %s75, 0
      %s78 = sadd.s32 %s77, 1
      %s79 = scalar_select %p76, %s77, %s78
      %p82 = pneg %p76
      %p83 = scmp.eq.s32.totalorder %s9, 7
      %p84 = por %p82, %p83
      %p85 = scmp.ne.s32.totalorder %s77, %s80
      %p86 = scmp.eq.s32.totalorder %s9, 0
      %p87 = por %p85, %p86
      %p88 = scmp.ne.s32.totalorder %s77, %s80
      %p89 = scmp.eq.s32.totalorder %s14, 7
      %p90 = por %p88, %p89
      %p91 = scmp.ne.s32.totalorder %s80, %s81
      %p92 = scmp.eq.s32.totalorder %s14, 0
      %p93 = por %p91, %p92
      %p94 = scmp.ne.s32.totalorder %s80, %s81
      %p95 = scmp.eq.s32.totalorder %s15, 7
      %p96 = por %p94, %p95
      %p98 = scmp.ne.s32.totalorder %s81, %s97
      %p99 = scmp.eq.s32.totalorder %s15, 0
      %p100 = por %p98, %p99
      %s101 = ssub.s32 %s18, %s34
      %p102 = scmp.eq.s32.totalorder %s101, 0
      %s104 = sadd.s32 %s103, 1
      %s105 = scalar_select %p102, %s103, %s104
      %p108 = pneg %p102
      %p109 = scmp.eq.s32.totalorder %s9, 7
      %p110 = por %p108, %p109
      %p111 = scmp.ne.s32.totalorder %s103, %s106
      %p112 = scmp.eq.s32.totalorder %s9, 0
      %p113 = por %p111, %p112
      %p114 = scmp.ne.s32.totalorder %s103, %s106
      %p115 = scmp.eq.s32.totalorder %s14, 7
      %p116 = por %p114, %p115
      %p117 = scmp.ne.s32.totalorder %s106, %s107
      %p118 = scmp.eq.s32.totalorder %s14, 0
      %p119 = por %p117, %p118
      %p120 = scmp.ne.s32.totalorder %s106, %s107
      %p121 = scmp.eq.s32.totalorder %s15, 7
      %p122 = por %p120, %p121
      %p124 = scmp.ne.s32.totalorder %s107, %s123
      %p125 = scmp.eq.s32.totalorder %s15, 0
      %p126 = por %p124, %p125
      %s127 = ssub.s32 %s16, %s42
      %s128 = ssub.s32 %s17, %s38
      %s129 = sor.u32 %s127, %s128
      %s130 = ssub.s32 %s18, %s34
      %s131 = sor.u32 %s129, %s130
      %p132 = scmp.eq.s32.totalorder %s131, 0
      %s134 = sadd.s32 %s133, 1
      %s135 = scalar_select %p132, %s133, %s134
      %p138 = pneg %p132
      %p139 = scmp.eq.s32.totalorder %s9, 7
      %p140 = por %p138, %p139
      %p141 = scmp.ne.s32.totalorder %s133, %s136
      %p142 = scmp.eq.s32.totalorder %s9, 0
      %p143 = por %p141, %p142
      %p144 = scmp.ne.s32.totalorder %s133, %s136
      %p145 = scmp.eq.s32.totalorder %s14, 7
      %p146 = por %p144, %p145
      %p147 = scmp.ne.s32.totalorder %s136, %s137
      %p148 = scmp.eq.s32.totalorder %s14, 0
      %p149 = por %p147, %p148
      %p150 = scmp.ne.s32.totalorder %s136, %s137
      %p151 = scmp.eq.s32.totalorder %s15, 7
      %p152 = por %p150, %p151
      %p154 = scmp.ne.s32.totalorder %s137, %s153
      %p155 = scmp.eq.s32.totalorder %s15, 0
      %p156 = por %p154, %p155
      %p157 = scmp.le.s32.totalorder 1, %s9
      %p158 = scmp.lt.s32.totalorder %s9, 9
      %p159 = pnand %p157, %p158
      %p160 = pneg %p159
      // Predicated region
      $region9: #{discriminator_forward.7} parent=5 // pred_check
        _
      $region10: #{discriminator_forward.7} parent=5 // pred_check_branch
        %162 = sbr.rel (%p159) target = $region12
      $region11: #{discriminator_forward.7} parent=5 // pred_region
        %s163 = ssub.s32 %s9, 1
        // Predicated region
        $region13: #{discriminator_forward.7} parent=11 // pred_check
          %p164 = pneg %p119
        $region14: #{discriminator_forward.7} parent=11 // pred_check_branch
          %166 = sbr.rel (%p164) target = $region16
        $region15: #{discriminator_forward.7} parent=11 // pred_region
          %s167 = smul.u32 2, %s22
          %p168 = scmp.lt.s32.totalorder %s167, 1
          %s169 = scalar_select %p168, %s167, 1
          %s170 = scalar_lea.vmem %s2, %s169
          %s171 = smul.u32 2, %s22
        $region16: #{discriminator_forward.7} parent=11 // pred_fallthru
          _
      $region12: #{discriminator_forward.7} parent=5 // pred_fallthru
        _
      %p172 = scmp.lt.s32.totalorder %s9, 8
      // Predicated region
      $region17: #{discriminator_forward.7} parent=5 // pred_check
        %p173 = pneg %p172
      $region18: #{discriminator_forward.7} parent=5 // pred_check_branch
        %175 = sbr.rel (%p173) target = $region20
      $region19: #{discriminator_forward.7} parent=5 // pred_region
        // Predicated region
        $region21: #{discriminator_forward.7} parent=19 // pred_check
          %p176 = pneg %p59
        $region22: #{discriminator_forward.7} parent=19 // pred_check_branch
          %178 = sbr.rel (%p176) target = $region24
        $region23: #{discriminator_forward.7} parent=19 // pred_region
          %s179 = sand.u32 %s49, 1
          %s180 = sand.u32 %s49, 1
          %s181 = smul.addr %s180, 32
          %s182 = scalar_lea.vmem [#allocation3], %s181
          %s183 = smul.u32 2, %s17
          %s184 = smul.u32 4, %s19
          %s185 = smul.addr %s183, 16
          %s186 = sadd.s32 %s184, %s185
          %s187 = smul.addr %s16, 32
          %s188 = sadd.s32 %s186, %s187
          %s189 = smul.addr %s188, 4
          %s190 = scalar_lea.vmem %s0, %s189
          // Predicated region
          $region25: #{discriminator_forward.7} parent=23 // pred_check
            _
          $region26: #{discriminator_forward.7} parent=23 // pred_check_branch
            %192 = sbr.rel (0) target = $region28
          $region27: #{discriminator_forward.7} parent=23 // pred_region
            // Predicated region
            $region29: #{discriminator_forward.7} parent=27 // pred_check
              _
            $region30: #{discriminator_forward.7} parent=27 // pred_check_branch
              %194 = sbr.rel (0) target = $region32
            $region31: #{discriminator_forward.7} parent=27 // pred_region
              loop: start=0, step=1, limit=1
              $region33: #{discriminator_forward.7} parent=31 // loop_pre_header
                _
              $region34: #{discriminator_forward.7} parent=31 // loop_header
                %s196 = sphi 0, %s200
                %p197 = scmp.ge.s32.totalorder %s196, 1
                %s201 = sphi %s190, %s190
                %s202 = sphi %s182, %s182
              $region35: #{discriminator_forward.7} parent=31 // loop_header_branch
                %199 = sbr.rel (%p197) target = $region39
              $region36: #{discriminator_forward.7} parent=31 // loop_body
                %v203 = vld [vmem:[%s201] sm:$0xff]
                %204 = vst [vmem:[%s202] sm:$0xff] %v203
                %v205 = vld [vmem:[%s201 + $0x8] sm:$0xff]
                %206 = vst [vmem:[%s202 + $0x8] sm:$0xff] %v205
                %v207 = vld [vmem:[%s201 + $0x40] sm:$0xff]
                %208 = vst [vmem:[%s202 + $0x10] sm:$0xff] %v207
                %v209 = vld [vmem:[%s201 + $0x48] sm:$0xff]
                %210 = vst [vmem:[%s202 + $0x18] sm:$0xff] %v209
              $region37: #{discriminator_forward.7} parent=31 // loop_footer
                %s200 = sadd.s32 1, %s196
              $region38: #{discriminator_forward.7} parent=31 // loop_footer_branch
                %195 = sbr.rel target = $region34
              $region39: #{discriminator_forward.7} parent=31 // loop_exit
                _
            $region32: #{discriminator_forward.7} parent=27 // pred_fallthru
              _
            // Predicated region
            $region40: #{discriminator_forward.7} parent=27 // pred_check
              _
            $region41: #{discriminator_forward.7} parent=27 // pred_check_branch
              %212 = sbr.rel target = $region43
            $region42: #{discriminator_forward.7} parent=27 // pred_region
              _
            $region43: #{discriminator_forward.7} parent=27 // pred_fallthru
              _
          $region28: #{discriminator_forward.7} parent=23 // pred_fallthru
            _
          %213 = vnop
        $region24: #{discriminator_forward.7} parent=19 // pred_fallthru
          _
        // Predicated region
        $region44: #{discriminator_forward.7} parent=19 // pred_check
          %p214 = pneg %p87
        $region45: #{discriminator_forward.7} parent=19 // pred_check_branch
          %216 = sbr.rel (%p214) target = $region47
        $region46: #{discriminator_forward.7} parent=19 // pred_region
          %s217 = smul.u32 64, %s19
          %s218 = smul.u32 2, %s18
          %p219 = scmp.lt.s32.totalorder %s217, 255
          %s220 = scalar_select %p219, %s217, 255
          %p221 = scmp.lt.s32.totalorder %s218, 1
          %s222 = scalar_select %p221, %s218, 1
          %s223 = smul.addr %s220, 2
          %s224 = sadd.s32 %s222, %s223
          %s225 = smul.addr %s224, 4
          %s226 = scalar_lea.vmem %s1, %s225
          %s227 = smul.u32 64, %s19
          %s228 = smul.u32 2, %s18
        $region47: #{discriminator_forward.7} parent=19 // pred_fallthru
          _
      $region20: #{discriminator_forward.7} parent=5 // pred_fallthru
        _
      %p229 = scmp.le.s32.totalorder 1, %s9
      %p230 = scmp.lt.s32.totalorder %s9, 9
      %p231 = pnand %p229, %p230
      %p232 = pneg %p231
      // Predicated region
      $region48: #{discriminator_forward.7} parent=5 // pred_check
        _
      $region49: #{discriminator_forward.7} parent=5 // pred_check_branch
        %234 = sbr.rel (%p231) target = $region51
      $region50: #{discriminator_forward.7} parent=5 // pred_region
        %s235 = ssub.s32 %s9, 1
        %s236 = sand.u32 %s52, 1
        %s237 = sand.u32 %s52, 1
        %s238 = smul.addr %s237, 32
        %s239 = scalar_lea.vmem [#allocation3], %s238
        // Predicated region
        $region52: #{discriminator_forward.7} parent=50 // pred_check
          %p240 = pneg %p65
        $region53: #{discriminator_forward.7} parent=50 // pred_check_branch
          %242 = sbr.rel (%p240) target = $region55
        $region54: #{discriminator_forward.7} parent=50 // pred_region
          _
        $region55: #{discriminator_forward.7} parent=50 // pred_fallthru
          _
        %s243 = sand.u32 %s52, 1
        %s244 = sand.u32 %s52, 1
        %s245 = smul.addr %s244, 32
        %s246 = scalar_lea.vmem [#allocation3], %s245
        %p247 = pneg %p65
        %p248 = pneg %p62
        %s249 = smul.u32 64, %s23
        %s250 = smul.u32 2, %s22
        %p251 = scmp.lt.s32.totalorder %s249, 255
        %s252 = scalar_select %p251, %s249, 255
        %p253 = scmp.lt.s32.totalorder %s250, 1
        %s254 = scalar_select %p253, %s250, 1
        %s255 = smul.addr %s252, 2
        %s256 = sadd.s32 %s254, %s255
        %s257 = smul.addr %s256, 4
        %s258 = scalar_lea.vmem %s1, %s257
        %p259 = pneg %p93
        %p260 = pneg %p90
        %s261 = smul.u32 2, %s22
        %p262 = scmp.lt.s32.totalorder %s261, 1
        %s263 = scalar_select %p262, %s261, 1
        %s264 = scalar_lea.vmem %s2, %s263
        %p265 = pneg %p119
        %p266 = pneg %p116
        %p267 = pneg %p149
        %p268 = pneg %p146
        %s269 = smul.u32 2, %s21
        %s270 = smul.u32 2, %s22
        %p271 = scmp.lt.s32.totalorder %s20, 1
        %s272 = scalar_select %p271, %s20, 1
        %p273 = scmp.lt.s32.totalorder %s269, 1
        %s274 = scalar_select %p273, %s269, 1
        %p275 = scmp.lt.s32.totalorder %s270, 1
        %s276 = scalar_select %p275, %s270, 1
        %s277 = smul.addr %s274, 2
        %s278 = sadd.s32 %s276, %s277
        %s279 = smul.addr %s272, 4
        %s280 = sadd.s32 %s278, %s279
        %s281 = smul.addr %s280, 4
        %s282 = scalar_lea.vmem %s3, %s281
        %s283 = smul.u32 2, %s21
        %s284 = smul.u32 4, %s23
        %s285 = smul.u32 64, %s23
        %s286 = smul.u32 2, %s22
        %p287 = scmp.lt.s32.totalorder %s285, 255
        %s288 = scalar_select %p287, %s285, 255
        %p289 = scmp.lt.s32.totalorder %s286, 1
        %s290 = scalar_select %p289, %s286, 1
        %s291 = smul.addr %s288, 2
        %s292 = sadd.s32 %s290, %s291
        %s293 = smul.addr %s292, 4
        %s294 = scalar_lea.vmem %s1, %s293
        %s295 = smul.u32 64, %s23
        %s296 = smul.u32 2, %s22
        %s297 = smul.u32 2, %s22
        %p298 = scmp.lt.s32.totalorder %s297, 1
        %s299 = scalar_select %p298, %s297, 1
        %s300 = scalar_lea.vmem %s2, %s299
        %s301 = smul.u32 2, %s22
        %s302 = smul.u32 2, %s21
        %s303 = smul.u32 2, %s22
        %p304 = scmp.lt.s32.totalorder %s20, 1
        %s305 = scalar_select %p304, %s20, 1
        %p306 = scmp.lt.s32.totalorder %s302, 1
        %s307 = scalar_select %p306, %s302, 1
        %p308 = scmp.lt.s32.totalorder %s303, 1
        %s309 = scalar_select %p308, %s303, 1
        %s310 = smul.addr %s307, 2
        %s311 = sadd.s32 %s309, %s310
        %s312 = smul.addr %s305, 4
        %s313 = sadd.s32 %s311, %s312
        %s314 = smul.addr %s313, 4
        %s315 = scalar_lea.vmem %s3, %s314
        %s316 = smul.u32 2, %s21
        %s317 = smul.u32 2, %s22
        %p318 = scmp.eq.s32.totalorder %s23, 0
        // Predicated region
        $region56: #{discriminator_forward.7} parent=50 // pred_check
          %p319 = pneg %p318
        $region57: #{discriminator_forward.7} parent=50 // pred_check_branch
          %321 = sbr.rel (%p319) target = $region59
        $region58: #{discriminator_forward.7} parent=50 // pred_region
          %322 = vst [vmem:[#allocation2] sm:$0xff] 0.0
          %323 = vst [vmem:[#allocation2 + $0x8] sm:$0xff] 0.0
          %324 = vst [vmem:[#allocation2 + $0x10] sm:$0xff] 0.0
          %325 = vst [vmem:[#allocation2 + $0x18] sm:$0xff] 0.0
        $region59: #{discriminator_forward.7} parent=50 // pred_fallthru
          _
        %v326 = vld [vmem:[#allocation2] sm:$0xff]
        %v327 = vld [vmem:[#allocation2 + $0x8] sm:$0xff]
        %v328 = vld [vmem:[#allocation2 + $0x10] sm:$0xff]
        %v329 = vld [vmem:[#allocation2 + $0x18] sm:$0xff]
        %v330 = vld [vmem:[%s239] sm:$0xff]
        %v331 = vld [vmem:[%s239 + $0x8] sm:$0xff]
        %v332 = vld [vmem:[%s239 + $0x10] sm:$0xff]
        %v333 = vld [vmem:[%s239 + $0x18] sm:$0xff]
        %v334 = vld [vmem:[%s294] sm:$0xff]
        %v335 = vld [vmem:[%s294 + $0x8] sm:$0xff]
        %v336 = vld [vmem:[%s294 + $0x10] sm:$0xff]
        %v337 = vld [vmem:[%s294 + $0x18] sm:$0xff]
        %v338 = vld [vmem:[%s294 + $0x20] sm:$0xff]
        %v339 = vld [vmem:[%s294 + $0x28] sm:$0xff]
        %v340 = vld [vmem:[%s294 + $0x30] sm:$0xff]
        %v341 = vld [vmem:[%s294 + $0x38] sm:$0xff]
        %v342 = vld [vmem:[%s294 + $0x40] sm:$0xff]
        %v343 = vld [vmem:[%s294 + $0x48] sm:$0xff]
        %v344 = vld [vmem:[%s294 + $0x50] sm:$0xff]
        %v345 = vld [vmem:[%s294 + $0x58] sm:$0xff]
        %v346 = vld [vmem:[%s294 + $0x60] sm:$0xff]
        %v347 = vld [vmem:[%s294 + $0x68] sm:$0xff]
        %v348 = vld [vmem:[%s294 + $0x70] sm:$0xff]
        %v349 = vld [vmem:[%s294 + $0x78] sm:$0xff]
        %v350 = vld [vmem:[%s294 + $0x80] sm:$0xff]
        %v351 = vld [vmem:[%s294 + $0x88] sm:$0xff]
        %v352 = vld [vmem:[%s294 + $0x90] sm:$0xff]
        %v353 = vld [vmem:[%s294 + $0x98] sm:$0xff]
        %v354 = vld [vmem:[%s294 + $0xa0] sm:$0xff]
        %v355 = vld [vmem:[%s294 + $0xa8] sm:$0xff]
        %v356 = vld [vmem:[%s294 + $0xb0] sm:$0xff]
        %v357 = vld [vmem:[%s294 + $0xb8] sm:$0xff]
        %v358 = vld [vmem:[%s294 + $0xc0] sm:$0xff]
        %v359 = vld [vmem:[%s294 + $0xc8] sm:$0xff]
        %v360 = vld [vmem:[%s294 + $0xd0] sm:$0xff]
        %v361 = vld [vmem:[%s294 + $0xd8] sm:$0xff]
        %v362 = vld [vmem:[%s294 + $0xe0] sm:$0xff]
        %v363 = vld [vmem:[%s294 + $0xe8] sm:$0xff]
        %v364 = vld [vmem:[%s294 + $0xf0] sm:$0xff]
        %v365 = vld [vmem:[%s294 + $0xf8] sm:$0xff]
        %v366 = vld [vmem:[%s294 + $0x100] sm:$0xff]
        %v367 = vld [vmem:[%s294 + $0x108] sm:$0xff]
        %v368 = vld [vmem:[%s294 + $0x110] sm:$0xff]
        %v369 = vld [vmem:[%s294 + $0x118] sm:$0xff]
        %v370 = vld [vmem:[%s294 + $0x120] sm:$0xff]
        %v371 = vld [vmem:[%s294 + $0x128] sm:$0xff]
        %v372 = vld [vmem:[%s294 + $0x130] sm:$0xff]
        %v373 = vld [vmem:[%s294 + $0x138] sm:$0xff]
        %v374 = vld [vmem:[%s294 + $0x140] sm:$0xff]
        %v375 = vld [vmem:[%s294 + $0x148] sm:$0xff]
        %v376 = vld [vmem:[%s294 + $0x150] sm:$0xff]
        %v377 = vld [vmem:[%s294 + $0x158] sm:$0xff]
        %v378 = vld [vmem:[%s294 + $0x160] sm:$0xff]
        %v379 = vld [vmem:[%s294 + $0x168] sm:$0xff]
        %v380 = vld [vmem:[%s294 + $0x170] sm:$0xff]
        %v381 = vld [vmem:[%s294 + $0x178] sm:$0xff]
        %v382 = vld [vmem:[%s294 + $0x180] sm:$0xff]
        %v383 = vld [vmem:[%s294 + $0x188] sm:$0xff]
        %v384 = vld [vmem:[%s294 + $0x190] sm:$0xff]
        %v385 = vld [vmem:[%s294 + $0x198] sm:$0xff]
        %v386 = vld [vmem:[%s294 + $0x1a0] sm:$0xff]
        %v387 = vld [vmem:[%s294 + $0x1a8] sm:$0xff]
        %v388 = vld [vmem:[%s294 + $0x1b0] sm:$0xff]
        %v389 = vld [vmem:[%s294 + $0x1b8] sm:$0xff]
        %v390 = vld [vmem:[%s294 + $0x1c0] sm:$0xff]
        %v391 = vld [vmem:[%s294 + $0x1c8] sm:$0xff]
        %v392 = vld [vmem:[%s294 + $0x1d0] sm:$0xff]
        %v393 = vld [vmem:[%s294 + $0x1d8] sm:$0xff]
        %v394 = vld [vmem:[%s294 + $0x1e0] sm:$0xff]
        %v395 = vld [vmem:[%s294 + $0x1e8] sm:$0xff]
        %v396 = vld [vmem:[%s294 + $0x1f0] sm:$0xff]
        %v397 = vld [vmem:[%s294 + $0x1f8] sm:$0xff]
        %v402 = vunpack.c.l.b16 %v330
        %v403 = vunpack.c.h.b16 %v330
        %v404 = vunpack.c.l.b16 %v331
        %v405 = vunpack.c.h.b16 %v331
        %v406 = vunpack.c.l.b16 %v332
        %v407 = vunpack.c.h.b16 %v332
        %v408 = vunpack.c.l.b16 %v333
        %v409 = vunpack.c.h.b16 %v333
        %v410 = vpack.c.b16 %v406, %v402
        %v411 = vpack.c.b16 %v407, %v403
        %v412 = vpack.c.b16 %v408, %v404
        %v413 = vpack.c.b16 %v409, %v405
        %v482 = vunpack.c.l.b16 %v334
        %v483 = vunpack.c.h.b16 %v334
        %v484 = vunpack.c.l.b16 %v335
        %v485 = vunpack.c.h.b16 %v335
        %v486 = vunpack.c.l.b16 %v336
        %v487 = vunpack.c.h.b16 %v336
        %v488 = vunpack.c.l.b16 %v337
        %v489 = vunpack.c.h.b16 %v337
        %v490 = vunpack.c.l.b16 %v338
        %v491 = vunpack.c.h.b16 %v338
        %v492 = vunpack.c.l.b16 %v339
        %v493 = vunpack.c.h.b16 %v339
        %v494 = vunpack.c.l.b16 %v340
        %v495 = vunpack.c.h.b16 %v340
        %v496 = vunpack.c.l.b16 %v341
        %v497 = vunpack.c.h.b16 %v341
        %v498 = vunpack.c.l.b16 %v342
        %v499 = vunpack.c.h.b16 %v342
        %v500 = vunpack.c.l.b16 %v343
        %v501 = vunpack.c.h.b16 %v343
        %v502 = vunpack.c.l.b16 %v344
        %v503 = vunpack.c.h.b16 %v344
        %v504 = vunpack.c.l.b16 %v345
        %v505 = vunpack.c.h.b16 %v345
        %v506 = vunpack.c.l.b16 %v346
        %v507 = vunpack.c.h.b16 %v346
        %v508 = vunpack.c.l.b16 %v347
        %v509 = vunpack.c.h.b16 %v347
        %v510 = vunpack.c.l.b16 %v348
        %v511 = vunpack.c.h.b16 %v348
        %v512 = vunpack.c.l.b16 %v349
        %v513 = vunpack.c.h.b16 %v349
        %v514 = vunpack.c.l.b16 %v350
        %v515 = vunpack.c.h.b16 %v350
        %v516 = vunpack.c.l.b16 %v351
        %v517 = vunpack.c.h.b16 %v351
        %v518 = vunpack.c.l.b16 %v352
        %v519 = vunpack.c.h.b16 %v352
        %v520 = vunpack.c.l.b16 %v353
        %v521 = vunpack.c.h.b16 %v353
        %v522 = vunpack.c.l.b16 %v354
        %v523 = vunpack.c.h.b16 %v354
        %v524 = vunpack.c.l.b16 %v355
        %v525 = vunpack.c.h.b16 %v355
        %v526 = vunpack.c.l.b16 %v356
        %v527 = vunpack.c.h.b16 %v356
        %v528 = vunpack.c.l.b16 %v357
        %v529 = vunpack.c.h.b16 %v357
        %v530 = vunpack.c.l.b16 %v358
        %v531 = vunpack.c.h.b16 %v358
        %v532 = vunpack.c.l.b16 %v359
        %v533 = vunpack.c.h.b16 %v359
        %v534 = vunpack.c.l.b16 %v360
        %v535 = vunpack.c.h.b16 %v360
        %v536 = vunpack.c.l.b16 %v361
        %v537 = vunpack.c.h.b16 %v361
        %v538 = vunpack.c.l.b16 %v362
        %v539 = vunpack.c.h.b16 %v362
        %v540 = vunpack.c.l.b16 %v363
        %v541 = vunpack.c.h.b16 %v363
        %v542 = vunpack.c.l.b16 %v364
        %v543 = vunpack.c.h.b16 %v364
        %v544 = vunpack.c.l.b16 %v365
        %v545 = vunpack.c.h.b16 %v365
        %v546 = vunpack.c.l.b16 %v366
        %v547 = vunpack.c.h.b16 %v366
        %v548 = vunpack.c.l.b16 %v367
        %v549 = vunpack.c.h.b16 %v367
        %v550 = vunpack.c.l.b16 %v368
        %v551 = vunpack.c.h.b16 %v368
        %v552 = vunpack.c.l.b16 %v369
        %v553 = vunpack.c.h.b16 %v369
        %v554 = vunpack.c.l.b16 %v370
        %v555 = vunpack.c.h.b16 %v370
        %v556 = vunpack.c.l.b16 %v371
        %v557 = vunpack.c.h.b16 %v371
        %v558 = vunpack.c.l.b16 %v372
        %v559 = vunpack.c.h.b16 %v372
        %v560 = vunpack.c.l.b16 %v373
        %v561 = vunpack.c.h.b16 %v373
        %v562 = vunpack.c.l.b16 %v374
        %v563 = vunpack.c.h.b16 %v374
        %v564 = vunpack.c.l.b16 %v375
        %v565 = vunpack.c.h.b16 %v375
        %v566 = vunpack.c.l.b16 %v376
        %v567 = vunpack.c.h.b16 %v376
        %v568 = vunpack.c.l.b16 %v377
        %v569 = vunpack.c.h.b16 %v377
        %v570 = vunpack.c.l.b16 %v378
        %v571 = vunpack.c.h.b16 %v378
        %v572 = vunpack.c.l.b16 %v379
        %v573 = vunpack.c.h.b16 %v379
        %v574 = vunpack.c.l.b16 %v380
        %v575 = vunpack.c.h.b16 %v380
        %v576 = vunpack.c.l.b16 %v381
        %v577 = vunpack.c.h.b16 %v381
        %v578 = vunpack.c.l.b16 %v382
        %v579 = vunpack.c.h.b16 %v382
        %v580 = vunpack.c.l.b16 %v383
        %v581 = vunpack.c.h.b16 %v383
        %v582 = vunpack.c.l.b16 %v384
        %v583 = vunpack.c.h.b16 %v384
        %v584 = vunpack.c.l.b16 %v385
        %v585 = vunpack.c.h.b16 %v385
        %v586 = vunpack.c.l.b16 %v386
        %v587 = vunpack.c.h.b16 %v386
        %v588 = vunpack.c.l.b16 %v387
        %v589 = vunpack.c.h.b16 %v387
        %v590 = vunpack.c.l.b16 %v388
        %v591 = vunpack.c.h.b16 %v388
        %v592 = vunpack.c.l.b16 %v389
        %v593 = vunpack.c.h.b16 %v389
        %v594 = vunpack.c.l.b16 %v390
        %v595 = vunpack.c.h.b16 %v390
        %v596 = vunpack.c.l.b16 %v391
        %v597 = vunpack.c.h.b16 %v391
        %v598 = vunpack.c.l.b16 %v392
        %v599 = vunpack.c.h.b16 %v392
        %v600 = vunpack.c.l.b16 %v393
        %v601 = vunpack.c.h.b16 %v393
        %v602 = vunpack.c.l.b16 %v394
        %v603 = vunpack.c.h.b16 %v394
        %v604 = vunpack.c.l.b16 %v395
        %v605 = vunpack.c.h.b16 %v395
        %v606 = vunpack.c.l.b16 %v396
        %v607 = vunpack.c.h.b16 %v396
        %v608 = vunpack.c.l.b16 %v397
        %v609 = vunpack.c.h.b16 %v397
        %v610 = vpack.c.b16 %v484, %v482
        %v611 = vpack.c.b16 %v485, %v483
        %v612 = vpack.c.b16 %v488, %v486
        %v613 = vpack.c.b16 %v489, %v487
        %v614 = vpack.c.b16 %v492, %v490
        %v615 = vpack.c.b16 %v493, %v491
        %v616 = vpack.c.b16 %v496, %v494
        %v617 = vpack.c.b16 %v497, %v495
        %v618 = vpack.c.b16 %v500, %v498
        %v619 = vpack.c.b16 %v501, %v499
        %v620 = vpack.c.b16 %v504, %v502
        %v621 = vpack.c.b16 %v505, %v503
        %v622 = vpack.c.b16 %v508, %v506
        %v623 = vpack.c.b16 %v509, %v507
        %v624 = vpack.c.b16 %v512, %v510
        %v625 = vpack.c.b16 %v513, %v511
        %v626 = vpack.c.b16 %v516, %v514
        %v627 = vpack.c.b16 %v517, %v515
        %v628 = vpack.c.b16 %v520, %v518
        %v629 = vpack.c.b16 %v521, %v519
        %v630 = vpack.c.b16 %v524, %v522
        %v631 = vpack.c.b16 %v525, %v523
        %v632 = vpack.c.b16 %v528, %v526
        %v633 = vpack.c.b16 %v529, %v527
        %v634 = vpack.c.b16 %v532, %v530
        %v635 = vpack.c.b16 %v533, %v531
        %v636 = vpack.c.b16 %v536, %v534
        %v637 = vpack.c.b16 %v537, %v535
        %v638 = vpack.c.b16 %v540, %v538
        %v639 = vpack.c.b16 %v541, %v539
        %v640 = vpack.c.b16 %v544, %v542
        %v641 = vpack.c.b16 %v545, %v543
        %v642 = vpack.c.b16 %v548, %v546
        %v643 = vpack.c.b16 %v549, %v547
        %v644 = vpack.c.b16 %v552, %v550
        %v645 = vpack.c.b16 %v553, %v551
        %v646 = vpack.c.b16 %v556, %v554
        %v647 = vpack.c.b16 %v557, %v555
        %v648 = vpack.c.b16 %v560, %v558
        %v649 = vpack.c.b16 %v561, %v559
        %v650 = vpack.c.b16 %v564, %v562
        %v651 = vpack.c.b16 %v565, %v563
        %v652 = vpack.c.b16 %v568, %v566
        %v653 = vpack.c.b16 %v569, %v567
        %v654 = vpack.c.b16 %v572, %v570
        %v655 = vpack.c.b16 %v573, %v571
        %v656 = vpack.c.b16 %v576, %v574
        %v657 = vpack.c.b16 %v577, %v575
        %v658 = vpack.c.b16 %v580, %v578
        %v659 = vpack.c.b16 %v581, %v579
        %v660 = vpack.c.b16 %v584, %v582
        %v661 = vpack.c.b16 %v585, %v583
        %v662 = vpack.c.b16 %v588, %v586
        %v663 = vpack.c.b16 %v589, %v587
        %v664 = vpack.c.b16 %v592, %v590
        %v665 = vpack.c.b16 %v593, %v591
        %v666 = vpack.c.b16 %v596, %v594
        %v667 = vpack.c.b16 %v597, %v595
        %v668 = vpack.c.b16 %v600, %v598
        %v669 = vpack.c.b16 %v601, %v599
        %v670 = vpack.c.b16 %v604, %v602
        %v671 = vpack.c.b16 %v605, %v603
        %v672 = vpack.c.b16 %v608, %v606
        %v673 = vpack.c.b16 %v609, %v607
        %738 = vmatpush.bf16.msra.mxu0 %v624
        %739 = vmatpush.bf16.msra.mxu0 %v622
        %740 = vmatpush.bf16.msra.mxu0 %v620
        %741 = vmatpush.bf16.msra.mxu0 %v618
        %742 = vmatpush.bf16.msra.mxu0 %v616
        %743 = vmatpush.bf16.msra.mxu0 %v614
        %744 = vmatpush.bf16.msra.mxu0 %v612
        %745 = vmatpush.bf16.msra.mxu0 %v610
        %746 = vmatmul.bf16.gmra.mxu0 %v410
        %v747 = vpop.f32.mrf.mxu0
        %v748 = vadd.f32 0.0, %v747
        %v749 = vpop.f32.mrf.mxu0
        %v750 = vadd.f32 0.0, %v749
        %751 = vdwg.mxu0
        %752 = vmatpush.bf16.msra.mxu0 %v640
        %753 = vmatpush.bf16.msra.mxu0 %v638
        %754 = vmatpush.bf16.msra.mxu0 %v636
        %755 = vmatpush.bf16.msra.mxu0 %v634
        %756 = vmatpush.bf16.msra.mxu0 %v632
        %757 = vmatpush.bf16.msra.mxu0 %v630
        %758 = vmatpush.bf16.msra.mxu0 %v628
        %759 = vmatpush.bf16.msra.mxu0 %v626
        %760 = vmatmul.bf16.gmra.mxu0 %v411
        %v761 = vpop.f32.mrf.mxu0
        %v762 = vadd.f32 %v748, %v761
        %v763 = vpop.f32.mrf.mxu0
        %v764 = vadd.f32 %v750, %v763
        %765 = vdwg.mxu0
        %766 = vmatpush.bf16.msra.mxu0 %v656
        %767 = vmatpush.bf16.msra.mxu0 %v654
        %768 = vmatpush.bf16.msra.mxu0 %v652
        %769 = vmatpush.bf16.msra.mxu0 %v650
        %770 = vmatpush.bf16.msra.mxu0 %v648
        %771 = vmatpush.bf16.msra.mxu0 %v646
        %772 = vmatpush.bf16.msra.mxu0 %v644
        %773 = vmatpush.bf16.msra.mxu0 %v642
        %774 = vmatmul.bf16.gmra.mxu0 %v412
        %v775 = vpop.f32.mrf.mxu0
        %v776 = vadd.f32 %v762, %v775
        %v777 = vpop.f32.mrf.mxu0
        %v778 = vadd.f32 %v764, %v777
        %779 = vdwg.mxu0
        %780 = vmatpush.bf16.msra.mxu0 %v672
        %781 = vmatpush.bf16.msra.mxu0 %v670
        %782 = vmatpush.bf16.msra.mxu0 %v668
        %783 = vmatpush.bf16.msra.mxu0 %v666
        %784 = vmatpush.bf16.msra.mxu0 %v664
        %785 = vmatpush.bf16.msra.mxu0 %v662
        %786 = vmatpush.bf16.msra.mxu0 %v660
        %787 = vmatpush.bf16.msra.mxu0 %v658
        %788 = vmatmul.bf16.gmra.mxu0 %v413
        %v789 = vpop.f32.mrf.mxu0
        %v790 = vadd.f32 %v776, %v789
        %v791 = vpop.f32.mrf.mxu0
        %v792 = vadd.f32 %v778, %v791
        %793 = vdwg.mxu0
        %794 = vmatpush.bf16.msra.mxu0 %v625
        %795 = vmatpush.bf16.msra.mxu0 %v623
        %796 = vmatpush.bf16.msra.mxu0 %v621
        %797 = vmatpush.bf16.msra.mxu0 %v619
        %798 = vmatpush.bf16.msra.mxu0 %v617
        %799 = vmatpush.bf16.msra.mxu0 %v615
        %800 = vmatpush.bf16.msra.mxu0 %v613
        %801 = vmatpush.bf16.msra.mxu0 %v611
        %802 = vmatmul.bf16.gmra.mxu0 %v410
        %v803 = vpop.f32.mrf.mxu0
        %v804 = vadd.f32 0.0, %v803
        %v805 = vpop.f32.mrf.mxu0
        %v806 = vadd.f32 0.0, %v805
        %807 = vdwg.mxu0
        %808 = vmatpush.bf16.msra.mxu0 %v641
        %809 = vmatpush.bf16.msra.mxu0 %v639
        %810 = vmatpush.bf16.msra.mxu0 %v637
        %811 = vmatpush.bf16.msra.mxu0 %v635
        %812 = vmatpush.bf16.msra.mxu0 %v633
        %813 = vmatpush.bf16.msra.mxu0 %v631
        %814 = vmatpush.bf16.msra.mxu0 %v629
        %815 = vmatpush.bf16.msra.mxu0 %v627
        %816 = vmatmul.bf16.gmra.mxu0 %v411
        %v817 = vpop.f32.mrf.mxu0
        %v818 = vadd.f32 %v804, %v817
        %v819 = vpop.f32.mrf.mxu0
        %v820 = vadd.f32 %v806, %v819
        %821 = vdwg.mxu0
        %822 = vmatpush.bf16.msra.mxu0 %v657
        %823 = vmatpush.bf16.msra.mxu0 %v655
        %824 = vmatpush.bf16.msra.mxu0 %v653
        %825 = vmatpush.bf16.msra.mxu0 %v651
        %826 = vmatpush.bf16.msra.mxu0 %v649
        %827 = vmatpush.bf16.msra.mxu0 %v647
        %828 = vmatpush.bf16.msra.mxu0 %v645
        %829 = vmatpush.bf16.msra.mxu0 %v643
        %830 = vmatmul.bf16.gmra.mxu0 %v412
        %v831 = vpop.f32.mrf.mxu0
        %v832 = vadd.f32 %v818, %v831
        %v833 = vpop.f32.mrf.mxu0
        %v834 = vadd.f32 %v820, %v833
        %835 = vdwg.mxu0
        %836 = vmatpush.bf16.msra.mxu0 %v673
        %837 = vmatpush.bf16.msra.mxu0 %v671
        %838 = vmatpush.bf16.msra.mxu0 %v669
        %839 = vmatpush.bf16.msra.mxu0 %v667
        %840 = vmatpush.bf16.msra.mxu0 %v665
        %841 = vmatpush.bf16.msra.mxu0 %v663
        %842 = vmatpush.bf16.msra.mxu0 %v661
        %843 = vmatpush.bf16.msra.mxu0 %v659
        %844 = vmatmul.bf16.gmra.mxu0 %v413
        %v845 = vpop.f32.mrf.mxu0
        %v846 = vadd.f32 %v832, %v845
        %v847 = vpop.f32.mrf.mxu0
        %v848 = vadd.f32 %v834, %v847
        %849 = vdwg.mxu0
        %v850 = vadd.f32 %v326, %v790
        %v851 = vadd.f32 %v327, %v846
        %v852 = vadd.f32 %v328, %v792
        %v853 = vadd.f32 %v329, %v848
        %854 = vst [vmem:[#allocation2] sm:$0xff] %v850
        %855 = vst [vmem:[#allocation2 + $0x8] sm:$0xff] %v851
        %856 = vst [vmem:[#allocation2 + $0x10] sm:$0xff] %v852
        %857 = vst [vmem:[#allocation2 + $0x18] sm:$0xff] %v853
        %p858 = scmp.eq.s32.totalorder %s23, 3
        // Predicated region
        $region60: #{discriminator_forward.7} parent=50 // pred_check
          %p859 = pneg %p858
        $region61: #{discriminator_forward.7} parent=50 // pred_check_branch
          %861 = sbr.rel (%p859) target = $region63
        $region62: #{discriminator_forward.7} parent=50 // pred_region
          %v862 = vld [vmem:[#allocation2] sm:$0xff]
          %v863 = vld [vmem:[#allocation2 + $0x8] sm:$0xff]
          %v864 = vld [vmem:[#allocation2 + $0x10] sm:$0xff]
          %v865 = vld [vmem:[#allocation2 + $0x18] sm:$0xff]
          %v866 = vld [vmem:[%s300] sm:$0x3]
          %v868 = vperm.slane %v866, 0
          %v869 = vperm.slane %v866, 1
          %v872 = vadd.f32 %v862, %v868
          %v873 = vadd.f32 %v863, %v869
          %v874 = vadd.f32 %v864, %v868
          %v875 = vadd.f32 %v865, %v869
          %v876 = vadd.f32 %v872, %v874
          %v877 = vrot.slane %v876, 4
          %v878 = vadd.f32 %v876, %v877
          %v879 = vrot.slane %v878, 2
          %v880 = vadd.f32 %v878, %v879
          %v881 = vrot.slane %v880, 1
          %v882 = vadd.f32 %v880, %v881
          %v883 = vadd.f32 %v873, %v875
          %v884 = vrot.slane %v883, 4
          %v885 = vadd.f32 %v883, %v884
          %v886 = vrot.slane %v885, 2
          %v887 = vadd.f32 %v885, %v886
          %v888 = vrot.slane %v887, 1
          %v889 = vadd.f32 %v887, %v888
          %v890 = vmul.f32 %v882, 0.0625
          %v891 = vmul.f32 %v889, 0.0625
          %v892 = vsub.f32 %v872, %v890
          %v893 = vsub.f32 %v873, %v891
          %v894 = vsub.f32 %v874, %v890
          %v895 = vsub.f32 %v875, %v891
          %v896 = vmul.f32 %v892, %v892
          %v897 = vmul.f32 %v893, %v893
          %v898 = vmul.f32 %v894, %v894
          %v899 = vmul.f32 %v895, %v895
          %v900 = vadd.f32 %v896, %v898
          %v901 = vrot.slane %v900, 4
          %v902 = vadd.f32 %v900, %v901
          %v903 = vrot.slane %v902, 2
          %v904 = vadd.f32 %v902, %v903
          %v905 = vrot.slane %v904, 1
          %v906 = vadd.f32 %v904, %v905
          %v907 = vadd.f32 %v897, %v899
          %v908 = vrot.slane %v907, 4
          %v909 = vadd.f32 %v907, %v908
          %v910 = vrot.slane %v909, 2
          %v911 = vadd.f32 %v909, %v910
          %v912 = vrot.slane %v911, 1
          %v913 = vadd.f32 %v911, %v912
          %v914 = vmul.f32 %v906, 0.0625
          %v915 = vmul.f32 %v913, 0.0625
          %v916 = vadd.f32 %v914, 1e-05
          %v917 = vadd.f32 %v915, 1e-05
          %v918 = vrsqrt.pop %v916
          %v919 = vmul.f32 %v918, %v916
          %v920 = vmul.f32 %v919, %v918
          %v921 = vmul.f32 0.5, %v920
          %v922 = vsub.f32 1.5, %v921
          %v923 = vmul.f32 %v918, %v922
          %vm924 = vweird.f32 %v916
          %vm925 = vweird.f32 %v918
          %vm926 = vmor %vm924, %vm925
          %v927 = vsel %vm926, %v918, %v923
          %v928 = vrsqrt.pop %v917
          %v929 = vmul.f32 %v928, %v917
          %v930 = vmul.f32 %v929, %v928
          %v931 = vmul.f32 0.5, %v930
          %v932 = vsub.f32 1.5, %v931
          %v933 = vmul.f32 %v928, %v932
          %vm934 = vweird.f32 %v917
          %vm935 = vweird.f32 %v928
          %vm936 = vmor %vm934, %vm935
          %v937 = vsel %vm936, %v928, %v933
          %v938 = vmul.f32 %v892, %v927
          %v939 = vmul.f32 %v893, %v937
          %v940 = vmul.f32 %v894, %v927
          %v941 = vmul.f32 %v895, %v937
          %v942 = vmul.f32 %v938, 0.2
          %v943 = vmul.f32 %v939, 0.2
          %v944 = vmul.f32 %v940, 0.2
          %v945 = vmul.f32 %v941, 0.2
          %v946 = vmax.f32 %v938, %v942
          %v947 = vmax.f32 %v939, %v943
          %v948 = vmax.f32 %v940, %v944
          %v949 = vmax.f32 %v941, %v945
          %v950 = vpack.c.bf16 %v947, %v946
          %v951 = vpack.c.bf16 %v949, %v948
          %952 = vst [vmem:[%s315] sm:$0xff] %v950
          %953 = vst [vmem:[%s315 + $0x8] sm:$0xff] %v951
        $region63: #{discriminator_forward.7} parent=50 // pred_fallthru
          _
        %s954 = smul.u32 2, %s21
        %s955 = smul.u32 2, %s22
        %p956 = scmp.lt.s32.totalorder %s20, 1
        %s957 = scalar_select %p956, %s20, 1
        %p958 = scmp.lt.s32.totalorder %s954, 1
        %s959 = scalar_select %p958, %s954, 1
        %p960 = scmp.lt.s32.totalorder %s955, 1
        %s961 = scalar_select %p960, %s955, 1
        %s962 = smul.addr %s959, 2
        %s963 = sadd.s32 %s961, %s962
        %s964 = smul.addr %s957, 4
        %s965 = sadd.s32 %s963, %s964
        %s966 = smul.addr %s965, 4
        %s967 = scalar_lea.vmem %s3, %s966
        // Predicated region
        $region64: #{discriminator_forward.7} parent=50 // pred_check
          %p968 = pneg %p146
        $region65: #{discriminator_forward.7} parent=50 // pred_check_branch
          %970 = sbr.rel (%p968) target = $region67
        $region66: #{discriminator_forward.7} parent=50 // pred_region
          %s971 = smul.u32 2, %s21
          %s972 = smul.u32 2, %s22
        $region67: #{discriminator_forward.7} parent=50 // pred_fallthru
          _
      $region51: #{discriminator_forward.7} parent=5 // pred_fallthru
        _
      %p973 = scmp.le.s32.totalorder 2, %s9
      // Predicated region
      $region68: #{discriminator_forward.7} parent=5 // pred_check
        %p974 = pneg %p973
      $region69: #{discriminator_forward.7} parent=5 // pred_check_branch
        %976 = sbr.rel (%p974) target = $region71
      $region70: #{discriminator_forward.7} parent=5 // pred_region
        %s977 = ssub.s32 %s9, 2
        // Predicated region
        $region72: #{discriminator_forward.7} parent=70 // pred_check
          %p978 = pneg %p152
        $region73: #{discriminator_forward.7} parent=70 // pred_check_branch
          %980 = sbr.rel (%p978) target = $region75
        $region74: #{discriminator_forward.7} parent=70 // pred_region
          %s981 = smul.u32 2, %s25
          %s982 = smul.u32 2, %s26
          %p983 = scmp.lt.s32.totalorder %s24, 1
          %s984 = scalar_select %p983, %s24, 1
          %p985 = scmp.lt.s32.totalorder %s981, 1
          %s986 = scalar_select %p985, %s981, 1
          %p987 = scmp.lt.s32.totalorder %s982, 1
          %s988 = scalar_select %p987, %s982, 1
          %s989 = smul.addr %s986, 2
          %s990 = sadd.s32 %s988, %s989
          %s991 = smul.addr %s984, 4
          %s992 = sadd.s32 %s990, %s991
          %s993 = smul.addr %s992, 4
          %s994 = scalar_lea.vmem %s3, %s993
        $region75: #{discriminator_forward.7} parent=70 // pred_fallthru
          _
      $region71: #{discriminator_forward.7} parent=5 // pred_fallthru
        _
    $region6: #{discriminator_forward.7} parent=1 // loop_footer
      %s13 = sadd.s32 1, %s9
    $region7: #{discriminator_forward.7} parent=1 // loop_footer_branch
      %8 = sbr.rel target = $region3
    $region8: #{discriminator_forward.7} parent=1 // loop_exit
      _

// kernel: discriminator_forward.8
$region0: #{discriminator_forward.8}
  #allocation0 [shape = 'u32[]', space=smem, size = 0x4, offset = 0x4, fixed_abs, tag = 'smem constant byte address 0x4 - core index']
  #allocation1 [shape = 'u32[72,128]{1,0:T(1,128)}', space=vmem, size = 0x9000, scoped, tag = 'internal scratch']
  #allocation2 [shape = 'f32[4,512]{1,0:T(4,128)}', space=vmem, size = 0x2000, scoped, tag = 'scratch operand']
  %s0 = inlined_call_operand.vmem [shape: bf16[2,4,4096], index: 0, kind: input, shape index: {}]
  %s1 = inlined_call_operand.vmem [shape: bf16[4096,512], index: 1, kind: input, shape index: {}]
  %s2 = inlined_call_operand.vmem [shape: f32[1,512], index: 2, kind: input, shape index: {}]
  %s3 = inlined_call_operand.vmem [shape: bf16[2,4,512], index: 3, kind: output, shape index: {}]
  %s4 = sld [smem:[#allocation0]]
  $region53: #{discriminator_forward.8} parent=0
    _
  %s6 = ssub.s32 1, %s4
  %s7 = scalar_select 0, %s6, %s4
  loop: start=0, step=1, limit=18
  $region2: #{discriminator_forward.8} parent=0 // loop_pre_header
    _
  $region3: #{discriminator_forward.8} parent=0 // loop_header
    %s9 = sphi 0, %s13
    %p10 = scmp.ge.s32.totalorder %s9, 18
    %s16 = sphi 0, %s42
    %s17 = sphi 0, %s38
    %s18 = sphi 0, %s34
    %s19 = sphi 0, %s30
    %s20 = sphi 0, %s16
    %s21 = sphi 0, %s17
    %s22 = sphi 0, %s18
    %s23 = sphi 0, %s19
    %s24 = sphi 0, %s20
    %s25 = sphi 0, %s21
    %s26 = sphi 0, %s22
    %s27 = sphi 0, %s23
    %s49 = sphi 0, %s51
    %s52 = sphi 0, %s49
    %s53 = sphi 0, %s52
    %s69 = sphi 0, %s53
    %s77 = sphi 0, %s79
    %s80 = sphi 0, %s77
    %s81 = sphi 0, %s80
    %s97 = sphi 0, %s81
    %s103 = sphi 0, %s105
    %s106 = sphi 0, %s103
    %s107 = sphi 0, %s106
    %s123 = sphi 0, %s107
    %s133 = sphi 0, %s135
    %s136 = sphi 0, %s133
    %s137 = sphi 0, %s136
    %s153 = sphi 0, %s137
  $region4: #{discriminator_forward.8} parent=0 // loop_header_branch
    %12 = sbr.rel (%p10) target = $region8
  $region5: #{discriminator_forward.8} parent=0 // loop_body
    %s14 = ssub.s32 %s9, 1
    %s15 = ssub.s32 %s9, 2
    %s28 = sadd.s32 1, %s19
    %p29 = scmp.ge.s32.totalorder %s28, 8
    %s30 = scalar_select %p29, 0, %s28
    %s31 = sadd.s32 1, %s18
    %s32 = scalar_select %p29, %s31, %s18
    %p33 = scmp.ge.s32.totalorder %s32, 1
    %s34 = scalar_select %p33, 0, %s32
    %s35 = sadd.s32 1, %s17
    %s36 = scalar_select %p33, %s35, %s17
    %p37 = scmp.ge.s32.totalorder %s36, 1
    %s38 = scalar_select %p37, 0, %s36
    %s39 = sadd.s32 1, %s16
    %s40 = scalar_select %p37, %s39, %s16
    %p41 = scmp.ge.s32.totalorder %s40, 2
    %s42 = scalar_select %p41, 0, %s40
    %s43 = ssub.s32 %s16, %s42
    %s44 = ssub.s32 %s17, %s38
    %s45 = sor.u32 %s43, %s44
    %s46 = ssub.s32 %s19, %s30
    %s47 = sor.u32 %s45, %s46
    %p48 = scmp.eq.s32.totalorder %s47, 0
    %s50 = sadd.s32 %s49, 1
    %s51 = scalar_select %p48, %s49, %s50
    %p54 = pneg %p48
    %p55 = scmp.eq.s32.totalorder %s9, 15
    %p56 = por %p54, %p55
    %p57 = scmp.ne.s32.totalorder %s49, %s52
    %p58 = scmp.eq.s32.totalorder %s9, 0
    %p59 = por %p57, %p58
    %p60 = scmp.ne.s32.totalorder %s49, %s52
    %p61 = scmp.eq.s32.totalorder %s14, 15
    %p62 = por %p60, %p61
    %p63 = scmp.ne.s32.totalorder %s52, %s53
    %p64 = scmp.eq.s32.totalorder %s14, 0
    %p65 = por %p63, %p64
    %p66 = scmp.ne.s32.totalorder %s52, %s53
    %p67 = scmp.eq.s32.totalorder %s15, 15
    %p68 = por %p66, %p67
    %p70 = scmp.ne.s32.totalorder %s53, %s69
    %p71 = scmp.eq.s32.totalorder %s15, 0
    %p72 = por %p70, %p71
    %s73 = ssub.s32 %s19, %s30
    %s74 = ssub.s32 %s18, %s34
    %s75 = sor.u32 %s73, %s74
    %p76 = scmp.eq.s32.totalorder %s75, 0
    %s78 = sadd.s32 %s77, 1
    %s79 = scalar_select %p76, %s77, %s78
    %p82 = pneg %p76
    %p83 = scmp.eq.s32.totalorder %s9, 15
    %p84 = por %p82, %p83
    %p85 = scmp.ne.s32.totalorder %s77, %s80
    %p86 = scmp.eq.s32.totalorder %s9, 0
    %p87 = por %p85, %p86
    %p88 = scmp.ne.s32.totalorder %s77, %s80
    %p89 = scmp.eq.s32.totalorder %s14, 15
    %p90 = por %p88, %p89
    %p91 = scmp.ne.s32.totalorder %s80, %s81
    %p92 = scmp.eq.s32.totalorder %s14, 0
    %p93 = por %p91, %p92
    %p94 = scmp.ne.s32.totalorder %s80, %s81
    %p95 = scmp.eq.s32.totalorder %s15, 15
    %p96 = por %p94, %p95
    %p98 = scmp.ne.s32.totalorder %s81, %s97
    %p99 = scmp.eq.s32.totalorder %s15, 0
    %p100 = por %p98, %p99
    %s101 = ssub.s32 %s18, %s34
    %p102 = scmp.eq.s32.totalorder %s101, 0
    %s104 = sadd.s32 %s103, 1
    %s105 = scalar_select %p102, %s103, %s104
    %p108 = pneg %p102
    %p109 = scmp.eq.s32.totalorder %s9, 15
    %p110 = por %p108, %p109
    %p111 = scmp.ne.s32.totalorder %s103, %s106
    %p112 = scmp.eq.s32.totalorder %s9, 0
    %p113 = por %p111, %p112
    %p114 = scmp.ne.s32.totalorder %s103, %s106
    %p115 = scmp.eq.s32.totalorder %s14, 15
    %p116 = por %p114, %p115
    %p117 = scmp.ne.s32.totalorder %s106, %s107
    %p118 = scmp.eq.s32.totalorder %s14, 0
    %p119 = por %p117, %p118
    %p120 = scmp.ne.s32.totalorder %s106, %s107
    %p121 = scmp.eq.s32.totalorder %s15, 15
    %p122 = por %p120, %p121
    %p124 = scmp.ne.s32.totalorder %s107, %s123
    %p125 = scmp.eq.s32.totalorder %s15, 0
    %p126 = por %p124, %p125
    %s127 = ssub.s32 %s16, %s42
    %s128 = ssub.s32 %s17, %s38
    %s129 = sor.u32 %s127, %s128
    %s130 = ssub.s32 %s18, %s34
    %s131 = sor.u32 %s129, %s130
    %p132 = scmp.eq.s32.totalorder %s131, 0
    %s134 = sadd.s32 %s133, 1
    %s135 = scalar_select %p132, %s133, %s134
    %p138 = pneg %p132
    %p139 = scmp.eq.s32.totalorder %s9, 15
    %p140 = por %p138, %p139
    %p141 = scmp.ne.s32.totalorder %s133, %s136
    %p142 = scmp.eq.s32.totalorder %s9, 0
    %p143 = por %p141, %p142
    %p144 = scmp.ne.s32.totalorder %s133, %s136
    %p145 = scmp.eq.s32.totalorder %s14, 15
    %p146 = por %p144, %p145
    %p147 = scmp.ne.s32.totalorder %s136, %s137
    %p148 = scmp.eq.s32.totalorder %s14, 0
    %p149 = por %p147, %p148
    %p150 = scmp.ne.s32.totalorder %s136, %s137
    %p151 = scmp.eq.s32.totalorder %s15, 15
    %p152 = por %p150, %p151
    %p154 = scmp.ne.s32.totalorder %s137, %s153
    %p155 = scmp.eq.s32.totalorder %s15, 0
    %p156 = por %p154, %p155
    %p157 = scmp.le.s32.totalorder 1, %s9
    %p158 = scmp.lt.s32.totalorder %s9, 17
    %p159 = pnand %p157, %p158
    %p160 = pneg %p159
    // Predicated region
    $region9: #{discriminator_forward.8} parent=5 // pred_check
      _
    $region10: #{discriminator_forward.8} parent=5 // pred_check_branch
      %162 = sbr.rel (%p159) target = $region12
    $region11: #{discriminator_forward.8} parent=5 // pred_region
      %s163 = ssub.s32 %s9, 1
      // Predicated region
      $region13: #{discriminator_forward.8} parent=11 // pred_check
        %p164 = pneg %p119
      $region14: #{discriminator_forward.8} parent=11 // pred_check_branch
        %166 = sbr.rel (%p164) target = $region16
      $region15: #{discriminator_forward.8} parent=11 // pred_region
        %s167 = smul.u32 4, %s22
        %p168 = scmp.lt.s32.totalorder %s167, 3
        %s169 = scalar_select %p168, %s167, 3
        %s170 = scalar_lea.vmem %s2, %s169
        %s171 = smul.u32 4, %s22
      $region16: #{discriminator_forward.8} parent=11 // pred_fallthru
        _
    $region12: #{discriminator_forward.8} parent=5 // pred_fallthru
      _
    %p172 = scmp.lt.s32.totalorder %s9, 16
    // Predicated region
    $region17: #{discriminator_forward.8} parent=5 // pred_check
      %p173 = pneg %p172
    $region18: #{discriminator_forward.8} parent=5 // pred_check_branch
      %175 = sbr.rel (%p173) target = $region20
    $region19: #{discriminator_forward.8} parent=5 // pred_region
      // Predicated region
      $region21: #{discriminator_forward.8} parent=19 // pred_check
        %p176 = pneg %p59
      $region22: #{discriminator_forward.8} parent=19 // pred_check_branch
        %178 = sbr.rel (%p176) target = $region24
      $region23: #{discriminator_forward.8} parent=19 // pred_region
        %s179 = smul.u32 4, %s19
        %p180 = scmp.lt.s32.totalorder %s16, 1
        %s181 = scalar_select %p180, %s16, 1
        %p182 = scmp.lt.s32.totalorder %s17, 0
        %s183 = scalar_select %p182, %s17, 0
        %p184 = scmp.lt.s32.totalorder %s179, 31
        %s185 = scalar_select %p184, %s179, 31
        %s186 = smul.addr %s183, 32
        %s187 = sadd.s32 %s185, %s186
        %s188 = smul.addr %s181, 32
        %s189 = sadd.s32 %s187, %s188
        %s190 = smul.addr %s189, 2
        %s191 = scalar_lea.vmem %s0, %s190
        %s192 = smul.u32 4, %s19
      $region24: #{discriminator_forward.8} parent=19 // pred_fallthru
        _
      // Predicated region
      $region25: #{discriminator_forward.8} parent=19 // pred_check
        %p193 = pneg %p87
      $region26: #{discriminator_forward.8} parent=19 // pred_check_branch
        %195 = sbr.rel (%p193) target = $region28
      $region27: #{discriminator_forward.8} parent=19 // pred_region
        %s196 = smul.u32 64, %s19
        %s197 = smul.u32 4, %s18
        %p198 = scmp.lt.s32.totalorder %s196, 511
        %s199 = scalar_select %p198, %s196, 511
        %p200 = scmp.lt.s32.totalorder %s197, 3
        %s201 = scalar_select %p200, %s197, 3
        %s202 = smul.addr %s199, 4
        %s203 = sadd.s32 %s201, %s202
        %s204 = smul.addr %s203, 4
        %s205 = scalar_lea.vmem %s1, %s204
        %s206 = smul.u32 64, %s19
        %s207 = smul.u32 4, %s18
      $region28: #{discriminator_forward.8} parent=19 // pred_fallthru
        _
    $region20: #{discriminator_forward.8} parent=5 // pred_fallthru
      _
    %p208 = scmp.le.s32.totalorder 1, %s9
    %p209 = scmp.lt.s32.totalorder %s9, 17
    %p210 = pnand %p208, %p209
    %p211 = pneg %p210
    // Predicated region
    $region29: #{discriminator_forward.8} parent=5 // pred_check
      _
    $region30: #{discriminator_forward.8} parent=5 // pred_check_branch
      %213 = sbr.rel (%p210) target = $region32
    $region31: #{discriminator_forward.8} parent=5 // pred_region
      %s214 = ssub.s32 %s9, 1
      %s215 = smul.u32 4, %s23
      %p216 = scmp.lt.s32.totalorder %s20, 1
      %s217 = scalar_select %p216, %s20, 1
      %p218 = scmp.lt.s32.totalorder %s21, 0
      %s219 = scalar_select %p218, %s21, 0
      %p220 = scmp.lt.s32.totalorder %s215, 31
      %s221 = scalar_select %p220, %s215, 31
      %s222 = smul.addr %s219, 32
      %s223 = sadd.s32 %s221, %s222
      %s224 = smul.addr %s217, 32
      %s225 = sadd.s32 %s223, %s224
      %s226 = smul.addr %s225, 2
      %s227 = scalar_lea.vmem %s0, %s226
      %p228 = pneg %p65
      %p229 = pneg %p62
      %s230 = smul.u32 64, %s23
      %s231 = smul.u32 4, %s22
      %p232 = scmp.lt.s32.totalorder %s230, 511
      %s233 = scalar_select %p232, %s230, 511
      %p234 = scmp.lt.s32.totalorder %s231, 3
      %s235 = scalar_select %p234, %s231, 3
      %s236 = smul.addr %s233, 4
      %s237 = sadd.s32 %s235, %s236
      %s238 = smul.addr %s237, 4
      %s239 = scalar_lea.vmem %s1, %s238
      %p240 = pneg %p93
      %p241 = pneg %p90
      %s242 = smul.u32 4, %s22
      %p243 = scmp.lt.s32.totalorder %s242, 3
      %s244 = scalar_select %p243, %s242, 3
      %s245 = scalar_lea.vmem %s2, %s244
      %p246 = pneg %p119
      %p247 = pneg %p116
      %p248 = pneg %p149
      %p249 = pneg %p146
      %s250 = smul.u32 4, %s22
      %p251 = scmp.lt.s32.totalorder %s20, 1
      %s252 = scalar_select %p251, %s20, 1
      %p253 = scmp.lt.s32.totalorder %s21, 0
      %s254 = scalar_select %p253, %s21, 0
      %p255 = scmp.lt.s32.totalorder %s250, 3
      %s256 = scalar_select %p255, %s250, 3
      %s257 = smul.addr %s254, 4
      %s258 = sadd.s32 %s256, %s257
      %s259 = smul.addr %s252, 4
      %s260 = sadd.s32 %s258, %s259
      %s261 = smul.addr %s260, 2
      %s262 = scalar_lea.vmem %s3, %s261
      %s263 = smul.u32 4, %s23
      %p264 = scmp.lt.s32.totalorder %s20, 1
      %s265 = scalar_select %p264, %s20, 1
      %p266 = scmp.lt.s32.totalorder %s21, 0
      %s267 = scalar_select %p266, %s21, 0
      %p268 = scmp.lt.s32.totalorder %s263, 31
      %s269 = scalar_select %p268, %s263, 31
      %s270 = smul.addr %s267, 32
      %s271 = sadd.s32 %s269, %s270
      %s272 = smul.addr %s265, 32
      %s273 = sadd.s32 %s271, %s272
      %s274 = smul.addr %s273, 2
      %s275 = scalar_lea.vmem %s0, %s274
      %s276 = smul.u32 4, %s23
      %s277 = smul.u32 64, %s23
      %s278 = smul.u32 4, %s22
      %p279 = scmp.lt.s32.totalorder %s277, 511
      %s280 = scalar_select %p279, %s277, 511
      %p281 = scmp.lt.s32.totalorder %s278, 3
      %s282 = scalar_select %p281, %s278, 3
      %s283 = smul.addr %s280, 4
      %s284 = sadd.s32 %s282, %s283
      %s285 = smul.addr %s284, 4
      %s286 = scalar_lea.vmem %s1, %s285
      %s287 = smul.u32 64, %s23
      %s288 = smul.u32 4, %s22
      %s289 = smul.u32 4, %s22
      %p290 = scmp.lt.s32.totalorder %s289, 3
      %s291 = scalar_select %p290, %s289, 3
      %s292 = scalar_lea.vmem %s2, %s291
      %s293 = smul.u32 4, %s22
      %s294 = smul.u32 4, %s22
      %p295 = scmp.lt.s32.totalorder %s20, 1
      %s296 = scalar_select %p295, %s20, 1
      %p297 = scmp.lt.s32.totalorder %s21, 0
      %s298 = scalar_select %p297, %s21, 0
      %p299 = scmp.lt.s32.totalorder %s294, 3
      %s300 = scalar_select %p299, %s294, 3
      %s301 = smul.addr %s298, 4
      %s302 = sadd.s32 %s300, %s301
      %s303 = smul.addr %s296, 4
      %s304 = sadd.s32 %s302, %s303
      %s305 = smul.addr %s304, 2
      %s306 = scalar_lea.vmem %s3, %s305
      %s307 = smul.u32 4, %s22
      %p308 = scmp.eq.s32.totalorder %s23, 0
      // Predicated region
      $region33: #{discriminator_forward.8} parent=31 // pred_check
        %p309 = pneg %p308
      $region34: #{discriminator_forward.8} parent=31 // pred_check_branch
        %311 = sbr.rel (%p309) target = $region36
      $region35: #{discriminator_forward.8} parent=31 // pred_region
        %312 = vst [vmem:[#allocation2] sm:$0xff] 0.0
        %313 = vst [vmem:[#allocation2 + $0x8] sm:$0xff] 0.0
      $region36: #{discriminator_forward.8} parent=31 // pred_fallthru
        _
      %v314 = vld [vmem:[#allocation2] sm:$0xff]
      %v315 = vld [vmem:[#allocation2 + $0x8] sm:$0xff]
      %v316 = vld [vmem:[%s275] sm:$0xff]
      %v317 = vld [vmem:[%s286] sm:$0xff]
      %v318 = vld [vmem:[%s286 + $0x8] sm:$0xff]
      %v319 = vld [vmem:[%s286 + $0x10] sm:$0xff]
      %v320 = vld [vmem:[%s286 + $0x18] sm:$0xff]
      %v321 = vld [vmem:[%s286 + $0x20] sm:$0xff]
      %v322 = vld [vmem:[%s286 + $0x28] sm:$0xff]
      %v323 = vld [vmem:[%s286 + $0x30] sm:$0xff]
      %v324 = vld [vmem:[%s286 + $0x38] sm:$0xff]
      %v325 = vld [vmem:[%s286 + $0x40] sm:$0xff]
      %v326 = vld [vmem:[%s286 + $0x48] sm:$0xff]
      %v327 = vld [vmem:[%s286 + $0x50] sm:$0xff]
      %v328 = vld [vmem:[%s286 + $0x58] sm:$0xff]
      %v329 = vld [vmem:[%s286 + $0x60] sm:$0xff]
      %v330 = vld [vmem:[%s286 + $0x68] sm:$0xff]
      %v331 = vld [vmem:[%s286 + $0x70] sm:$0xff]
      %v332 = vld [vmem:[%s286 + $0x78] sm:$0xff]
      %v333 = vld [vmem:[%s286 + $0x80] sm:$0xff]
      %v334 = vld [vmem:[%s286 + $0x88] sm:$0xff]
      %v335 = vld [vmem:[%s286 + $0x90] sm:$0xff]
      %v336 = vld [vmem:[%s286 + $0x98] sm:$0xff]
      %v337 = vld [vmem:[%s286 + $0xa0] sm:$0xff]
      %v338 = vld [vmem:[%s286 + $0xa8] sm:$0xff]
      %v339 = vld [vmem:[%s286 + $0xb0] sm:$0xff]
      %v340 = vld [vmem:[%s286 + $0xb8] sm:$0xff]
      %v341 = vld [vmem:[%s286 + $0xc0] sm:$0xff]
      %v342 = vld [vmem:[%s286 + $0xc8] sm:$0xff]
      %v343 = vld [vmem:[%s286 + $0xd0] sm:$0xff]
      %v344 = vld [vmem:[%s286 + $0xd8] sm:$0xff]
      %v345 = vld [vmem:[%s286 + $0xe0] sm:$0xff]
      %v346 = vld [vmem:[%s286 + $0xe8] sm:$0xff]
      %v347 = vld [vmem:[%s286 + $0xf0] sm:$0xff]
      %v348 = vld [vmem:[%s286 + $0xf8] sm:$0xff]
      %v349 = vld [vmem:[%s286 + $0x100] sm:$0xff]
      %v350 = vld [vmem:[%s286 + $0x108] sm:$0xff]
      %v351 = vld [vmem:[%s286 + $0x110] sm:$0xff]
      %v352 = vld [vmem:[%s286 + $0x118] sm:$0xff]
      %v353 = vld [vmem:[%s286 + $0x120] sm:$0xff]
      %v354 = vld [vmem:[%s286 + $0x128] sm:$0xff]
      %v355 = vld [vmem:[%s286 + $0x130] sm:$0xff]
      %v356 = vld [vmem:[%s286 + $0x138] sm:$0xff]
      %v357 = vld [vmem:[%s286 + $0x140] sm:$0xff]
      %v358 = vld [vmem:[%s286 + $0x148] sm:$0xff]
      %v359 = vld [vmem:[%s286 + $0x150] sm:$0xff]
      %v360 = vld [vmem:[%s286 + $0x158] sm:$0xff]
      %v361 = vld [vmem:[%s286 + $0x160] sm:$0xff]
      %v362 = vld [vmem:[%s286 + $0x168] sm:$0xff]
      %v363 = vld [vmem:[%s286 + $0x170] sm:$0xff]
      %v364 = vld [vmem:[%s286 + $0x178] sm:$0xff]
      %v365 = vld [vmem:[%s286 + $0x180] sm:$0xff]
      %v366 = vld [vmem:[%s286 + $0x188] sm:$0xff]
      %v367 = vld [vmem:[%s286 + $0x190] sm:$0xff]
      %v368 = vld [vmem:[%s286 + $0x198] sm:$0xff]
      %v369 = vld [vmem:[%s286 + $0x1a0] sm:$0xff]
      %v370 = vld [vmem:[%s286 + $0x1a8] sm:$0xff]
      %v371 = vld [vmem:[%s286 + $0x1b0] sm:$0xff]
      %v372 = vld [vmem:[%s286 + $0x1b8] sm:$0xff]
      %v373 = vld [vmem:[%s286 + $0x1c0] sm:$0xff]
      %v374 = vld [vmem:[%s286 + $0x1c8] sm:$0xff]
      %v375 = vld [vmem:[%s286 + $0x1d0] sm:$0xff]
      %v376 = vld [vmem:[%s286 + $0x1d8] sm:$0xff]
      %v377 = vld [vmem:[%s286 + $0x1e0] sm:$0xff]
      %v378 = vld [vmem:[%s286 + $0x1e8] sm:$0xff]
      %v379 = vld [vmem:[%s286 + $0x1f0] sm:$0xff]
      %v380 = vld [vmem:[%s286 + $0x1f8] sm:$0xff]
      %v381 = vld [vmem:[%s286 + $0x200] sm:$0xff]
      %v382 = vld [vmem:[%s286 + $0x208] sm:$0xff]
      %v383 = vld [vmem:[%s286 + $0x210] sm:$0xff]
      %v384 = vld [vmem:[%s286 + $0x218] sm:$0xff]
      %v385 = vld [vmem:[%s286 + $0x220] sm:$0xff]
      %v386 = vld [vmem:[%s286 + $0x228] sm:$0xff]
      %v387 = vld [vmem:[%s286 + $0x230] sm:$0xff]
      %v388 = vld [vmem:[%s286 + $0x238] sm:$0xff]
      %v389 = vld [vmem:[%s286 + $0x240] sm:$0xff]
      %v390 = vld [vmem:[%s286 + $0x248] sm:$0xff]
      %v391 = vld [vmem:[%s286 + $0x250] sm:$0xff]
      %v392 = vld [vmem:[%s286 + $0x258] sm:$0xff]
      %v393 = vld [vmem:[%s286 + $0x260] sm:$0xff]
      %v394 = vld [vmem:[%s286 + $0x268] sm:$0xff]
      %v395 = vld [vmem:[%s286 + $0x270] sm:$0xff]
      %v396 = vld [vmem:[%s286 + $0x278] sm:$0xff]
      %v397 = vld [vmem:[%s286 + $0x280] sm:$0xff]
      %v398 = vld [vmem:[%s286 + $0x288] sm:$0xff]
      %v399 = vld [vmem:[%s286 + $0x290] sm:$0xff]
      %v400 = vld [vmem:[%s286 + $0x298] sm:$0xff]
      %v401 = vld [vmem:[%s286 + $0x2a0] sm:$0xff]
      %v402 = vld [vmem:[%s286 + $0x2a8] sm:$0xff]
      %v403 = vld [vmem:[%s286 + $0x2b0] sm:$0xff]
      %v404 = vld [vmem:[%s286 + $0x2b8] sm:$0xff]
      %v405 = vld [vmem:[%s286 + $0x2c0] sm:$0xff]
      %v406 = vld [vmem:[%s286 + $0x2c8] sm:$0xff]
      %v407 = vld [vmem:[%s286 + $0x2d0] sm:$0xff]
      %v408 = vld [vmem:[%s286 + $0x2d8] sm:$0xff]
      %v409 = vld [vmem:[%s286 + $0x2e0] sm:$0xff]
      %v410 = vld [vmem:[%s286 + $0x2e8] sm:$0xff]
      %v411 = vld [vmem:[%s286 + $0x2f0] sm:$0xff]
      %v412 = vld [vmem:[%s286 + $0x2f8] sm:$0xff]
      %v413 = vld [vmem:[%s286 + $0x300] sm:$0xff]
      %v414 = vld [vmem:[%s286 + $0x308] sm:$0xff]
      %v415 = vld [vmem:[%s286 + $0x310] sm:$0xff]
      %v416 = vld [vmem:[%s286 + $0x318] sm:$0xff]
      %v417 = vld [vmem:[%s286 + $0x320] sm:$0xff]
      %v418 = vld [vmem:[%s286 + $0x328] sm:$0xff]
      %v419 = vld [vmem:[%s286 + $0x330] sm:$0xff]
      %v420 = vld [vmem:[%s286 + $0x338] sm:$0xff]
      %v421 = vld [vmem:[%s286 + $0x340] sm:$0xff]
      %v422 = vld [vmem:[%s286 + $0x348] sm:$0xff]
      %v423 = vld [vmem:[%s286 + $0x350] sm:$0xff]
      %v424 = vld [vmem:[%s286 + $0x358] sm:$0xff]
      %v425 = vld [vmem:[%s286 + $0x360] sm:$0xff]
      %v426 = vld [vmem:[%s286 + $0x368] sm:$0xff]
      %v427 = vld [vmem:[%s286 + $0x370] sm:$0xff]
      %v428 = vld [vmem:[%s286 + $0x378] sm:$0xff]
      %v429 = vld [vmem:[%s286 + $0x380] sm:$0xff]
      %v430 = vld [vmem:[%s286 + $0x388] sm:$0xff]
      %v431 = vld [vmem:[%s286 + $0x390] sm:$0xff]
      %v432 = vld [vmem:[%s286 + $0x398] sm:$0xff]
      %v433 = vld [vmem:[%s286 + $0x3a0] sm:$0xff]
      %v434 = vld [vmem:[%s286 + $0x3a8] sm:$0xff]
      %v435 = vld [vmem:[%s286 + $0x3b0] sm:$0xff]
      %v436 = vld [vmem:[%s286 + $0x3b8] sm:$0xff]
      %v437 = vld [vmem:[%s286 + $0x3c0] sm:$0xff]
      %v438 = vld [vmem:[%s286 + $0x3c8] sm:$0xff]
      %v439 = vld [vmem:[%s286 + $0x3d0] sm:$0xff]
      %v440 = vld [vmem:[%s286 + $0x3d8] sm:$0xff]
      %v441 = vld [vmem:[%s286 + $0x3e0] sm:$0xff]
      %v442 = vld [vmem:[%s286 + $0x3e8] sm:$0xff]
      %v443 = vld [vmem:[%s286 + $0x3f0] sm:$0xff]
      %v444 = vld [vmem:[%s286 + $0x3f8] sm:$0xff]
      %446 = vst [vmem:[#allocation1] ss:$4 sm:$0xff] %v316
      %v447 = vld.sshfl [vmem:[#allocation1] sm:$0xff pattern:$0x73625140]
      %v448 = vld.sshfl [vmem:[#allocation1 + $0x8] sm:$0xff pattern:$0x73625140]
      %v449 = vld.sshfl [vmem:[#allocation1 + $0x10] sm:$0xff pattern:$0x73625140]
      %v450 = vld.sshfl [vmem:[#allocation1 + $0x18] sm:$0xff pattern:$0x73625140]
      %v583 = vunpack.c.l.b16 %v317
      %v584 = vunpack.c.h.b16 %v317
      %v585 = vunpack.c.l.b16 %v318
      %v586 = vunpack.c.h.b16 %v318
      %v587 = vunpack.c.l.b16 %v319
      %v588 = vunpack.c.h.b16 %v319
      %v589 = vunpack.c.l.b16 %v320
      %v590 = vunpack.c.h.b16 %v320
      %v591 = vunpack.c.l.b16 %v321
      %v592 = vunpack.c.h.b16 %v321
      %v593 = vunpack.c.l.b16 %v322
      %v594 = vunpack.c.h.b16 %v322
      %v595 = vunpack.c.l.b16 %v323
      %v596 = vunpack.c.h.b16 %v323
      %v597 = vunpack.c.l.b16 %v324
      %v598 = vunpack.c.h.b16 %v324
      %v599 = vunpack.c.l.b16 %v325
      %v600 = vunpack.c.h.b16 %v325
      %v601 = vunpack.c.l.b16 %v326
      %v602 = vunpack.c.h.b16 %v326
      %v603 = vunpack.c.l.b16 %v327
      %v604 = vunpack.c.h.b16 %v327
      %v605 = vunpack.c.l.b16 %v328
      %v606 = vunpack.c.h.b16 %v328
      %v607 = vunpack.c.l.b16 %v329
      %v608 = vunpack.c.h.b16 %v329
      %v609 = vunpack.c.l.b16 %v330
      %v610 = vunpack.c.h.b16 %v330
      %v611 = vunpack.c.l.b16 %v331
      %v612 = vunpack.c.h.b16 %v331
      %v613 = vunpack.c.l.b16 %v332
      %v614 = vunpack.c.h.b16 %v332
      %v615 = vunpack.c.l.b16 %v333
      %v616 = vunpack.c.h.b16 %v333
      %v617 = vunpack.c.l.b16 %v334
      %v618 = vunpack.c.h.b16 %v334
      %v619 = vunpack.c.l.b16 %v335
      %v620 = vunpack.c.h.b16 %v335
      %v621 = vunpack.c.l.b16 %v336
      %v622 = vunpack.c.h.b16 %v336
      %v623 = vunpack.c.l.b16 %v337
      %v624 = vunpack.c.h.b16 %v337
      %v625 = vunpack.c.l.b16 %v338
      %v626 = vunpack.c.h.b16 %v338
      %v627 = vunpack.c.l.b16 %v339
      %v628 = vunpack.c.h.b16 %v339
      %v629 = vunpack.c.l.b16 %v340
      %v630 = vunpack.c.h.b16 %v340
      %v631 = vunpack.c.l.b16 %v341
      %v632 = vunpack.c.h.b16 %v341
      %v633 = vunpack.c.l.b16 %v342
      %v634 = vunpack.c.h.b16 %v342
      %v635 = vunpack.c.l.b16 %v343
      %v636 = vunpack.c.h.b16 %v343
      %v637 = vunpack.c.l.b16 %v344
      %v638 = vunpack.c.h.b16 %v344
      %v639 = vunpack.c.l.b16 %v345
      %v640 = vunpack.c.h.b16 %v345
      %v641 = vunpack.c.l.b16 %v346
      %v642 = vunpack.c.h.b16 %v346
      %v643 = vunpack.c.l.b16 %v347
      %v644 = vunpack.c.h.b16 %v347
      %v645 = vunpack.c.l.b16 %v348
      %v646 = vunpack.c.h.b16 %v348
      %v647 = vunpack.c.l.b16 %v349
      %v648 = vunpack.c.h.b16 %v349
      %v649 = vunpack.c.l.b16 %v350
      %v650 = vunpack.c.h.b16 %v350
      %v651 = vunpack.c.l.b16 %v351
      %v652 = vunpack.c.h.b16 %v351
      %v653 = vunpack.c.l.b16 %v352
      %v654 = vunpack.c.h.b16 %v352
      %v655 = vunpack.c.l.b16 %v353
      %v656 = vunpack.c.h.b16 %v353
      %v657 = vunpack.c.l.b16 %v354
      %v658 = vunpack.c.h.b16 %v354
      %v659 = vunpack.c.l.b16 %v355
      %v660 = vunpack.c.h.b16 %v355
      %v661 = vunpack.c.l.b16 %v356
      %v662 = vunpack.c.h.b16 %v356
      %v663 = vunpack.c.l.b16 %v357
      %v664 = vunpack.c.h.b16 %v357
      %v665 = vunpack.c.l.b16 %v358
      %v666 = vunpack.c.h.b16 %v358
      %v667 = vunpack.c.l.b16 %v359
      %v668 = vunpack.c.h.b16 %v359
      %v669 = vunpack.c.l.b16 %v360
      %v670 = vunpack.c.h.b16 %v360
      %v671 = vunpack.c.l.b16 %v361
      %v672 = vunpack.c.h.b16 %v361
      %v673 = vunpack.c.l.b16 %v362
      %v674 = vunpack.c.h.b16 %v362
      %v675 = vunpack.c.l.b16 %v363
      %v676 = vunpack.c.h.b16 %v363
      %v677 = vunpack.c.l.b16 %v364
      %v678 = vunpack.c.h.b16 %v364
      %v679 = vunpack.c.l.b16 %v365
      %v680 = vunpack.c.h.b16 %v365
      %v681 = vunpack.c.l.b16 %v366
      %v682 = vunpack.c.h.b16 %v366
      %v683 = vunpack.c.l.b16 %v367
      %v684 = vunpack.c.h.b16 %v367
      %v685 = vunpack.c.l.b16 %v368
      %v686 = vunpack.c.h.b16 %v368
      %v687 = vunpack.c.l.b16 %v369
      %v688 = vunpack.c.h.b16 %v369
      %v689 = vunpack.c.l.b16 %v370
      %v690 = vunpack.c.h.b16 %v370
      %v691 = vunpack.c.l.b16 %v371
      %v692 = vunpack.c.h.b16 %v371
      %v693 = vunpack.c.l.b16 %v372
      %v694 = vunpack.c.h.b16 %v372
      %v695 = vunpack.c.l.b16 %v373
      %v696 = vunpack.c.h.b16 %v373
      %v697 = vunpack.c.l.b16 %v374
      %v698 = vunpack.c.h.b16 %v374
      %v699 = vunpack.c.l.b16 %v375
      %v700 = vunpack.c.h.b16 %v375
      %v701 = vunpack.c.l.b16 %v376
      %v702 = vunpack.c.h.b16 %v376
      %v703 = vunpack.c.l.b16 %v377
      %v704 = vunpack.c.h.b16 %v377
      %v705 = vunpack.c.l.b16 %v378
      %v706 = vunpack.c.h.b16 %v378
      %v707 = vunpack.c.l.b16 %v379
      %v708 = vunpack.c.h.b16 %v379
      %v709 = vunpack.c.l.b16 %v380
      %v710 = vunpack.c.h.b16 %v380
      %v711 = vunpack.c.l.b16 %v381
      %v712 = vunpack.c.h.b16 %v381
      %v713 = vunpack.c.l.b16 %v382
      %v714 = vunpack.c.h.b16 %v382
      %v715 = vunpack.c.l.b16 %v383
      %v716 = vunpack.c.h.b16 %v383
      %v717 = vunpack.c.l.b16 %v384
      %v718 = vunpack.c.h.b16 %v384
      %v719 = vunpack.c.l.b16 %v385
      %v720 = vunpack.c.h.b16 %v385
      %v721 = vunpack.c.l.b16 %v386
      %v722 = vunpack.c.h.b16 %v386
      %v723 = vunpack.c.l.b16 %v387
      %v724 = vunpack.c.h.b16 %v387
      %v725 = vunpack.c.l.b16 %v388
      %v726 = vunpack.c.h.b16 %v388
      %v727 = vunpack.c.l.b16 %v389
      %v728 = vunpack.c.h.b16 %v389
      %v729 = vunpack.c.l.b16 %v390
      %v730 = vunpack.c.h.b16 %v390
      %v731 = vunpack.c.l.b16 %v391
      %v732 = vunpack.c.h.b16 %v391
      %v733 = vunpack.c.l.b16 %v392
      %v734 = vunpack.c.h.b16 %v392
      %v735 = vunpack.c.l.b16 %v393
      %v736 = vunpack.c.h.b16 %v393
      %v737 = vunpack.c.l.b16 %v394
      %v738 = vunpack.c.h.b16 %v394
      %v739 = vunpack.c.l.b16 %v395
      %v740 = vunpack.c.h.b16 %v395
      %v741 = vunpack.c.l.b16 %v396
      %v742 = vunpack.c.h.b16 %v396
      %v743 = vunpack.c.l.b16 %v397
      %v744 = vunpack.c.h.b16 %v397
      %v745 = vunpack.c.l.b16 %v398
      %v746 = vunpack.c.h.b16 %v398
      %v747 = vunpack.c.l.b16 %v399
      %v748 = vunpack.c.h.b16 %v399
      %v749 = vunpack.c.l.b16 %v400
      %v750 = vunpack.c.h.b16 %v400
      %v751 = vunpack.c.l.b16 %v401
      %v752 = vunpack.c.h.b16 %v401
      %v753 = vunpack.c.l.b16 %v402
      %v754 = vunpack.c.h.b16 %v402
      %v755 = vunpack.c.l.b16 %v403
      %v756 = vunpack.c.h.b16 %v403
      %v757 = vunpack.c.l.b16 %v404
      %v758 = vunpack.c.h.b16 %v404
      %v759 = vunpack.c.l.b16 %v405
      %v760 = vunpack.c.h.b16 %v405
      %v761 = vunpack.c.l.b16 %v406
      %v762 = vunpack.c.h.b16 %v406
      %v763 = vunpack.c.l.b16 %v407
      %v764 = vunpack.c.h.b16 %v407
      %v765 = vunpack.c.l.b16 %v408
      %v766 = vunpack.c.h.b16 %v408
      %v767 = vunpack.c.l.b16 %v409
      %v768 = vunpack.c.h.b16 %v409
      %v769 = vunpack.c.l.b16 %v410
      %v770 = vunpack.c.h.b16 %v410
      %v771 = vunpack.c.l.b16 %v411
      %v772 = vunpack.c.h.b16 %v411
      %v773 = vunpack.c.l.b16 %v412
      %v774 = vunpack.c.h.b16 %v412
      %v775 = vunpack.c.l.b16 %v413
      %v776 = vunpack.c.h.b16 %v413
      %v777 = vunpack.c.l.b16 %v414
      %v778 = vunpack.c.h.b16 %v414
      %v779 = vunpack.c.l.b16 %v415
      %v780 = vunpack.c.h.b16 %v415
      %v781 = vunpack.c.l.b16 %v416
      %v782 = vunpack.c.h.b16 %v416
      %v783 = vunpack.c.l.b16 %v417
      %v784 = vunpack.c.h.b16 %v417
      %v785 = vunpack.c.l.b16 %v418
      %v786 = vunpack.c.h.b16 %v418
      %v787 = vunpack.c.l.b16 %v419
      %v788 = vunpack.c.h.b16 %v419
      %v789 = vunpack.c.l.b16 %v420
      %v790 = vunpack.c.h.b16 %v420
      %v791 = vunpack.c.l.b16 %v421
      %v792 = vunpack.c.h.b16 %v421
      %v793 = vunpack.c.l.b16 %v422
      %v794 = vunpack.c.h.b16 %v422
      %v795 = vunpack.c.l.b16 %v423
      %v796 = vunpack.c.h.b16 %v423
      %v797 = vunpack.c.l.b16 %v424
      %v798 = vunpack.c.h.b16 %v424
      %v799 = vunpack.c.l.b16 %v425
      %v800 = vunpack.c.h.b16 %v425
      %v801 = vunpack.c.l.b16 %v426
      %v802 = vunpack.c.h.b16 %v426
      %v803 = vunpack.c.l.b16 %v427
      %v804 = vunpack.c.h.b16 %v427
      %v805 = vunpack.c.l.b16 %v428
      %v806 = vunpack.c.h.b16 %v428
      %v807 = vunpack.c.l.b16 %v429
      %v808 = vunpack.c.h.b16 %v429
      %v809 = vunpack.c.l.b16 %v430
      %v810 = vunpack.c.h.b16 %v430
      %v811 = vunpack.c.l.b16 %v431
      %v812 = vunpack.c.h.b16 %v431
      %v813 = vunpack.c.l.b16 %v432
      %v814 = vunpack.c.h.b16 %v432
      %v815 = vunpack.c.l.b16 %v433
      %v816 = vunpack.c.h.b16 %v433
      %v817 = vunpack.c.l.b16 %v434
      %v818 = vunpack.c.h.b16 %v434
      %v819 = vunpack.c.l.b16 %v435
      %v820 = vunpack.c.h.b16 %v435
      %v821 = vunpack.c.l.b16 %v436
      %v822 = vunpack.c.h.b16 %v436
      %v823 = vunpack.c.l.b16 %v437
      %v824 = vunpack.c.h.b16 %v437
      %v825 = vunpack.c.l.b16 %v438
      %v826 = vunpack.c.h.b16 %v438
      %v827 = vunpack.c.l.b16 %v439
      %v828 = vunpack.c.h.b16 %v439
      %v829 = vunpack.c.l.b16 %v440
      %v830 = vunpack.c.h.b16 %v440
      %v831 = vunpack.c.l.b16 %v441
      %v832 = vunpack.c.h.b16 %v441
      %v833 = vunpack.c.l.b16 %v442
      %v834 = vunpack.c.h.b16 %v442
      %v835 = vunpack.c.l.b16 %v443
      %v836 = vunpack.c.h.b16 %v443
      %v837 = vunpack.c.l.b16 %v444
      %v838 = vunpack.c.h.b16 %v444
      %v839 = vpack.c.b16 %v587, %v583
      %v840 = vpack.c.b16 %v588, %v584
      %v841 = vpack.c.b16 %v589, %v585
      %v842 = vpack.c.b16 %v590, %v586
      %v843 = vpack.c.b16 %v595, %v591
      %v844 = vpack.c.b16 %v596, %v592
      %v845 = vpack.c.b16 %v597, %v593
      %v846 = vpack.c.b16 %v598, %v594
      %v847 = vpack.c.b16 %v603, %v599
      %v848 = vpack.c.b16 %v604, %v600
      %v849 = vpack.c.b16 %v605, %v601
      %v850 = vpack.c.b16 %v606, %v602
      %v851 = vpack.c.b16 %v611, %v607
      %v852 = vpack.c.b16 %v612, %v608
      %v853 = vpack.c.b16 %v613, %v609
      %v854 = vpack.c.b16 %v614, %v610
      %v855 = vpack.c.b16 %v619, %v615
      %v856 = vpack.c.b16 %v620, %v616
      %v857 = vpack.c.b16 %v621, %v617
      %v858 = vpack.c.b16 %v622, %v618
      %v859 = vpack.c.b16 %v627, %v623
      %v860 = vpack.c.b16 %v628, %v624
      %v861 = vpack.c.b16 %v629, %v625
      %v862 = vpack.c.b16 %v630, %v626
      %v863 = vpack.c.b16 %v635, %v631
      %v864 = vpack.c.b16 %v636, %v632
      %v865 = vpack.c.b16 %v637, %v633
      %v866 = vpack.c.b16 %v638, %v634
      %v867 = vpack.c.b16 %v643, %v639
      %v868 = vpack.c.b16 %v644, %v640
      %v869 = vpack.c.b16 %v645, %v641
      %v870 = vpack.c.b16 %v646, %v642
      %v871 = vpack.c.b16 %v651, %v647
      %v872 = vpack.c.b16 %v652, %v648
      %v873 = vpack.c.b16 %v653, %v649
      %v874 = vpack.c.b16 %v654, %v650
      %v875 = vpack.c.b16 %v659, %v655
      %v876 = vpack.c.b16 %v660, %v656
      %v877 = vpack.c.b16 %v661, %v657
      %v878 = vpack.c.b16 %v662, %v658
      %v879 = vpack.c.b16 %v667, %v663
      %v880 = vpack.c.b16 %v668, %v664
      %v881 = vpack.c.b16 %v669, %v665
      %v882 = vpack.c.b16 %v670, %v666
      %v883 = vpack.c.b16 %v675, %v671
      %v884 = vpack.c.b16 %v676, %v672
      %v885 = vpack.c.b16 %v677, %v673
      %v886 = vpack.c.b16 %v678, %v674
      %v887 = vpack.c.b16 %v683, %v679
      %v888 = vpack.c.b16 %v684, %v680
      %v889 = vpack.c.b16 %v685, %v681
      %v890 = vpack.c.b16 %v686, %v682
      %v891 = vpack.c.b16 %v691, %v687
      %v892 = vpack.c.b16 %v692, %v688
      %v893 = vpack.c.b16 %v693, %v689
      %v894 = vpack.c.b16 %v694, %v690
      %v895 = vpack.c.b16 %v699, %v695
      %v896 = vpack.c.b16 %v700, %v696
      %v897 = vpack.c.b16 %v701, %v697
      %v898 = vpack.c.b16 %v702, %v698
      %v899 = vpack.c.b16 %v707, %v703
      %v900 = vpack.c.b16 %v708, %v704
      %v901 = vpack.c.b16 %v709, %v705
      %v902 = vpack.c.b16 %v710, %v706
      %v903 = vpack.c.b16 %v715, %v711
      %v904 = vpack.c.b16 %v716, %v712
      %v905 = vpack.c.b16 %v717, %v713
      %v906 = vpack.c.b16 %v718, %v714
      %v907 = vpack.c.b16 %v723, %v719
      %v908 = vpack.c.b16 %v724, %v720
      %v909 = vpack.c.b16 %v725, %v721
      %v910 = vpack.c.b16 %v726, %v722
      %v911 = vpack.c.b16 %v731, %v727
      %v912 = vpack.c.b16 %v732, %v728
      %v913 = vpack.c.b16 %v733, %v729
      %v914 = vpack.c.b16 %v734, %v730
      %v915 = vpack.c.b16 %v739, %v735
      %v916 = vpack.c.b16 %v740, %v736
      %v917 = vpack.c.b16 %v741, %v737
      %v918 = vpack.c.b16 %v742, %v738
      %v919 = vpack.c.b16 %v747, %v743
      %v920 = vpack.c.b16 %v748, %v744
      %v921 = vpack.c.b16 %v749, %v745
      %v922 = vpack.c.b16 %v750, %v746
      %v923 = vpack.c.b16 %v755, %v751
      %v924 = vpack.c.b16 %v756, %v752
      %v925 = vpack.c.b16 %v757, %v753
      %v926 = vpack.c.b16 %v758, %v754
      %v927 = vpack.c.b16 %v763, %v759
      %v928 = vpack.c.b16 %v764, %v760
      %v929 = vpack.c.b16 %v765, %v761
      %v930 = vpack.c.b16 %v766, %v762
      %v931 = vpack.c.b16 %v771, %v767
      %v932 = vpack.c.b16 %v772, %v768
      %v933 = vpack.c.b16 %v773, %v769
      %v934 = vpack.c.b16 %v774, %v770
      %v935 = vpack.c.b16 %v779, %v775
      %v936 = vpack.c.b16 %v780, %v776
      %v937 = vpack.c.b16 %v781, %v777
      %v938 = vpack.c.b16 %v782, %v778
      %v939 = vpack.c.b16 %v787, %v783
      %v940 = vpack.c.b16 %v788, %v784
      %v941 = vpack.c.b16 %v789, %v785
      %v942 = vpack.c.b16 %v790, %v786
      %v943 = vpack.c.b16 %v795, %v791
      %v944 = vpack.c.b16 %v796, %v792
      %v945 = vpack.c.b16 %v797, %v793
      %v946 = vpack.c.b16 %v798, %v794
      %v947 = vpack.c.b16 %v803, %v799
      %v948 = vpack.c.b16 %v804, %v800
      %v949 = vpack.c.b16 %v805, %v801
      %v950 = vpack.c.b16 %v806, %v802
      %v951 = vpack.c.b16 %v811, %v807
      %v952 = vpack.c.b16 %v812, %v808
      %v953 = vpack.c.b16 %v813, %v809
      %v954 = vpack.c.b16 %v814, %v810
      %v955 = vpack.c.b16 %v819, %v815
      %v956 = vpack.c.b16 %v820, %v816
      %v957 = vpack.c.b16 %v821, %v817
      %v958 = vpack.c.b16 %v822, %v818
      %v959 = vpack.c.b16 %v827, %v823
      %v960 = vpack.c.b16 %v828, %v824
      %v961 = vpack.c.b16 %v829, %v825
      %v962 = vpack.c.b16 %v830, %v826
      %v963 = vpack.c.b16 %v835, %v831
      %v964 = vpack.c.b16 %v836, %v832
      %v965 = vpack.c.b16 %v837, %v833
      %v966 = vpack.c.b16 %v838, %v834
      %1095 = vmatpush.bf16.msra.mxu0 %v867
      %1096 = vmatpush.bf16.msra.mxu0 %v863
      %1097 = vmatpush.bf16.msra.mxu0 %v859
      %1098 = vmatpush.bf16.msra.mxu0 %v855
      %1099 = vmatpush.bf16.msra.mxu0 %v851
      %1100 = vmatpush.bf16.msra.mxu0 %v847
      %1101 = vmatpush.bf16.msra.mxu0 %v843
      %1102 = vmatpush.bf16.msra.mxu0 %v839
      %1103 = vmatmul.bf16.gmra.mxu0 %v447
      %v1104 = vpop.f32.mrf.mxu0
      %v1105 = vadd.f32 0.0, %v1104
      %v1106 = vpop.f32.mrf.mxu0
      %1107 = vdwg.mxu0
      %1108 = vmatpush.bf16.msra.mxu0 %v899
      %1109 = vmatpush.bf16.msra.mxu0 %v895
      %1110 = vmatpush.bf16.msra.mxu0 %v891
      %1111 = vmatpush.bf16.msra.mxu0 %v887
      %1112 = vmatpush.bf16.msra.mxu0 %v883
      %1113 = vmatpush.bf16.msra.mxu0 %v879
      %1114 = vmatpush.bf16.msra.mxu0 %v875
      %1115 = vmatpush.bf16.msra.mxu0 %v871
      %1116 = vmatmul.bf16.gmra.mxu0 %v448
      %v1117 = vpop.f32.mrf.mxu0
      %v1118 = vadd.f32 %v1105, %v1117
      %v1119 = vpop.f32.mrf.mxu0
      %1120 = vdwg.mxu0
      %1121 = vmatpush.bf16.msra.mxu0 %v931
      %1122 = vmatpush.bf16.msra.mxu0 %v927
      %1123 = vmatpush.bf16.msra.mxu0 %v923
      %1124 = vmatpush.bf16.msra.mxu0 %v919
      %1125 = vmatpush.bf16.msra.mxu0 %v915
      %1126 = vmatpush.bf16.msra.mxu0 %v911
      %1127 = vmatpush.bf16.msra.mxu0 %v907
      %1128 = vmatpush.bf16.msra.mxu0 %v903
      %1129 = vmatmul.bf16.gmra.mxu0 %v449
      %v1130 = vpop.f32.mrf.mxu0
      %v1131 = vadd.f32 %v1118, %v1130
      %v1132 = vpop.f32.mrf.mxu0
      %1133 = vdwg.mxu0
      %1134 = vmatpush.bf16.msra.mxu0 %v963
      %1135 = vmatpush.bf16.msra.mxu0 %v959
      %1136 = vmatpush.bf16.msra.mxu0 %v955
      %1137 = vmatpush.bf16.msra.mxu0 %v951
      %1138 = vmatpush.bf16.msra.mxu0 %v947
      %1139 = vmatpush.bf16.msra.mxu0 %v943
      %1140 = vmatpush.bf16.msra.mxu0 %v939
      %1141 = vmatpush.bf16.msra.mxu0 %v935
      %1142 = vmatmul.bf16.gmra.mxu0 %v450
      %v1143 = vpop.f32.mrf.mxu0
      %v1144 = vadd.f32 %v1131, %v1143
      %v1145 = vpop.f32.mrf.mxu0
      %1146 = vdwg.mxu0
      %1147 = vmatpush.bf16.msra.mxu0 %v868
      %1148 = vmatpush.bf16.msra.mxu0 %v864
      %1149 = vmatpush.bf16.msra.mxu0 %v860
      %1150 = vmatpush.bf16.msra.mxu0 %v856
      %1151 = vmatpush.bf16.msra.mxu0 %v852
      %1152 = vmatpush.bf16.msra.mxu0 %v848
      %1153 = vmatpush.bf16.msra.mxu0 %v844
      %1154 = vmatpush.bf16.msra.mxu0 %v840
      %1155 = vmatmul.bf16.gmra.mxu0 %v447
      %v1156 = vpop.f32.mrf.mxu0
      %v1157 = vadd.f32 0.0, %v1156
      %v1158 = vpop.f32.mrf.mxu0
      %1159 = vdwg.mxu0
      %1160 = vmatpush.bf16.msra.mxu0 %v900
      %1161 = vmatpush.bf16.msra.mxu0 %v896
      %1162 = vmatpush.bf16.msra.mxu0 %v892
      %1163 = vmatpush.bf16.msra.mxu0 %v888
      %1164 = vmatpush.bf16.msra.mxu0 %v884
      %1165 = vmatpush.bf16.msra.mxu0 %v880
      %1166 = vmatpush.bf16.msra.mxu0 %v876
      %1167 = vmatpush.bf16.msra.mxu0 %v872
      %1168 = vmatmul.bf16.gmra.mxu0 %v448
      %v1169 = vpop.f32.mrf.mxu0
      %v1170 = vadd.f32 %v1157, %v1169
      %v1171 = vpop.f32.mrf.mxu0
      %1172 = vdwg.mxu0
      %1173 = vmatpush.bf16.msra.mxu0 %v932
      %1174 = vmatpush.bf16.msra.mxu0 %v928
      %1175 = vmatpush.bf16.msra.mxu0 %v924
      %1176 = vmatpush.bf16.msra.mxu0 %v920
      %1177 = vmatpush.bf16.msra.mxu0 %v916
      %1178 = vmatpush.bf16.msra.mxu0 %v912
      %1179 = vmatpush.bf16.msra.mxu0 %v908
      %1180 = vmatpush.bf16.msra.mxu0 %v904
      %1181 = vmatmul.bf16.gmra.mxu0 %v449
      %v1182 = vpop.f32.mrf.mxu0
      %v1183 = vadd.f32 %v1170, %v1182
      %v1184 = vpop.f32.mrf.mxu0
      %1185 = vdwg.mxu0
      %1186 = vmatpush.bf16.msra.mxu0 %v964
      %1187 = vmatpush.bf16.msra.mxu0 %v960
      %1188 = vmatpush.bf16.msra.mxu0 %v956
      %1189 = vmatpush.bf16.msra.mxu0 %v952
      %1190 = vmatpush.bf16.msra.mxu0 %v948
      %1191 = vmatpush.bf16.msra.mxu0 %v944
      %1192 = vmatpush.bf16.msra.mxu0 %v940
      %1193 = vmatpush.bf16.msra.mxu0 %v936
      %1194 = vmatmul.bf16.gmra.mxu0 %v450
      %v1195 = vpop.f32.mrf.mxu0
      %v1196 = vadd.f32 %v1183, %v1195
      %v1197 = vpop.f32.mrf.mxu0
      %1198 = vdwg.mxu0
      %1199 = vmatpush.bf16.msra.mxu0 %v869
      %1200 = vmatpush.bf16.msra.mxu0 %v865
      %1201 = vmatpush.bf16.msra.mxu0 %v861
      %1202 = vmatpush.bf16.msra.mxu0 %v857
      %1203 = vmatpush.bf16.msra.mxu0 %v853
      %1204 = vmatpush.bf16.msra.mxu0 %v849
      %1205 = vmatpush.bf16.msra.mxu0 %v845
      %1206 = vmatpush.bf16.msra.mxu0 %v841
      %1207 = vmatmul.bf16.gmra.mxu0 %v447
      %v1208 = vpop.f32.mrf.mxu0
      %v1209 = vadd.f32 0.0, %v1208
      %v1210 = vpop.f32.mrf.mxu0
      %1211 = vdwg.mxu0
      %1212 = vmatpush.bf16.msra.mxu0 %v901
      %1213 = vmatpush.bf16.msra.mxu0 %v897
      %1214 = vmatpush.bf16.msra.mxu0 %v893
      %1215 = vmatpush.bf16.msra.mxu0 %v889
      %1216 = vmatpush.bf16.msra.mxu0 %v885
      %1217 = vmatpush.bf16.msra.mxu0 %v881
      %1218 = vmatpush.bf16.msra.mxu0 %v877
      %1219 = vmatpush.bf16.msra.mxu0 %v873
      %1220 = vmatmul.bf16.gmra.mxu0 %v448
      %v1221 = vpop.f32.mrf.mxu0
      %v1222 = vadd.f32 %v1209, %v1221
      %v1223 = vpop.f32.mrf.mxu0
      %1224 = vdwg.mxu0
      %1225 = vmatpush.bf16.msra.mxu0 %v933
      %1226 = vmatpush.bf16.msra.mxu0 %v929
      %1227 = vmatpush.bf16.msra.mxu0 %v925
      %1228 = vmatpush.bf16.msra.mxu0 %v921
      %1229 = vmatpush.bf16.msra.mxu0 %v917
      %1230 = vmatpush.bf16.msra.mxu0 %v913
      %1231 = vmatpush.bf16.msra.mxu0 %v909
      %1232 = vmatpush.bf16.msra.mxu0 %v905
      %1233 = vmatmul.bf16.gmra.mxu0 %v449
      %v1234 = vpop.f32.mrf.mxu0
      %v1235 = vadd.f32 %v1222, %v1234
      %v1236 = vpop.f32.mrf.mxu0
      %1237 = vdwg.mxu0
      %1238 = vmatpush.bf16.msra.mxu0 %v965
      %1239 = vmatpush.bf16.msra.mxu0 %v961
      %1240 = vmatpush.bf16.msra.mxu0 %v957
      %1241 = vmatpush.bf16.msra.mxu0 %v953
      %1242 = vmatpush.bf16.msra.mxu0 %v949
      %1243 = vmatpush.bf16.msra.mxu0 %v945
      %1244 = vmatpush.bf16.msra.mxu0 %v941
      %1245 = vmatpush.bf16.msra.mxu0 %v937
      %1246 = vmatmul.bf16.gmra.mxu0 %v450
      %v1247 = vpop.f32.mrf.mxu0
      %v1248 = vadd.f32 %v1235, %v1247
      %v1249 = vpop.f32.mrf.mxu0
      %1250 = vdwg.mxu0
      %1251 = vmatpush.bf16.msra.mxu0 %v870
      %1252 = vmatpush.bf16.msra.mxu0 %v866
      %1253 = vmatpush.bf16.msra.mxu0 %v862
      %1254 = vmatpush.bf16.msra.mxu0 %v858
      %1255 = vmatpush.bf16.msra.mxu0 %v854
      %1256 = vmatpush.bf16.msra.mxu0 %v850
      %1257 = vmatpush.bf16.msra.mxu0 %v846
      %1258 = vmatpush.bf16.msra.mxu0 %v842
      %1259 = vmatmul.bf16.gmra.mxu0 %v447
      %v1260 = vpop.f32.mrf.mxu0
      %v1261 = vadd.f32 0.0, %v1260
      %v1262 = vpop.f32.mrf.mxu0
      %1263 = vdwg.mxu0
      %1264 = vmatpush.bf16.msra.mxu0 %v902
      %1265 = vmatpush.bf16.msra.mxu0 %v898
      %1266 = vmatpush.bf16.msra.mxu0 %v894
      %1267 = vmatpush.bf16.msra.mxu0 %v890
      %1268 = vmatpush.bf16.msra.mxu0 %v886
      %1269 = vmatpush.bf16.msra.mxu0 %v882
      %1270 = vmatpush.bf16.msra.mxu0 %v878
      %1271 = vmatpush.bf16.msra.mxu0 %v874
      %1272 = vmatmul.bf16.gmra.mxu0 %v448
      %v1273 = vpop.f32.mrf.mxu0
      %v1274 = vadd.f32 %v1261, %v1273
      %v1275 = vpop.f32.mrf.mxu0
      %1276 = vdwg.mxu0
      %1277 = vmatpush.bf16.msra.mxu0 %v934
      %1278 = vmatpush.bf16.msra.mxu0 %v930
      %1279 = vmatpush.bf16.msra.mxu0 %v926
      %1280 = vmatpush.bf16.msra.mxu0 %v922
      %1281 = vmatpush.bf16.msra.mxu0 %v918
      %1282 = vmatpush.bf16.msra.mxu0 %v914
      %1283 = vmatpush.bf16.msra.mxu0 %v910
      %1284 = vmatpush.bf16.msra.mxu0 %v906
      %1285 = vmatmul.bf16.gmra.mxu0 %v449
      %v1286 = vpop.f32.mrf.mxu0
      %v1287 = vadd.f32 %v1274, %v1286
      %v1288 = vpop.f32.mrf.mxu0
      %1289 = vdwg.mxu0
      %1290 = vmatpush.bf16.msra.mxu0 %v966
      %1291 = vmatpush.bf16.msra.mxu0 %v962
      %1292 = vmatpush.bf16.msra.mxu0 %v958
      %1293 = vmatpush.bf16.msra.mxu0 %v954
      %1294 = vmatpush.bf16.msra.mxu0 %v950
      %1295 = vmatpush.bf16.msra.mxu0 %v946
      %1296 = vmatpush.bf16.msra.mxu0 %v942
      %1297 = vmatpush.bf16.msra.mxu0 %v938
      %1298 = vmatmul.bf16.gmra.mxu0 %v450
      %v1299 = vpop.f32.mrf.mxu0
      %v1300 = vadd.f32 %v1287, %v1299
      %v1301 = vpop.f32.mrf.mxu0
      %1302 = vdwg.mxu0
      %v1307 = vrot.slane %v1196, 4
      %v1308 = vrot.slane %v1300, 4
      %vm1309 = vcmask 1043456
      %v1310 = vsel %vm1309, %v1144, %v1307
      %v1311 = vsel %vm1309, %v1248, %v1308
      %v1314 = vadd.f32 %v314, %v1310
      %v1315 = vadd.f32 %v315, %v1311
      %1316 = vst [vmem:[#allocation2] sm:$0xff] %v1314
      %1317 = vst [vmem:[#allocation2 + $0x8] sm:$0xff] %v1315
      %p1318 = scmp.eq.s32.totalorder %s23, 7
      // Predicated region
      $region37: #{discriminator_forward.8} parent=31 // pred_check
        %p1319 = pneg %p1318
      $region38: #{discriminator_forward.8} parent=31 // pred_check_branch
        %1321 = sbr.rel (%p1319) target = $region40
      $region39: #{discriminator_forward.8} parent=31 // pred_region
        %v1322 = vld [vmem:[#allocation2] sm:$0xff]
        %v1323 = vld [vmem:[#allocation2 + $0x8] sm:$0xff]
        %v1324 = vld [vmem:[%s292] sm:$0xf]
        %v1326 = vperm.slane %v1324, 0
        %v1327 = vperm.slane %v1324, 1
        %v1328 = vperm.slane %v1324, 2
        %v1329 = vperm.slane %v1324, 3
        %v1330 = vrot.slane %v1327, 4
        %v1331 = vrot.slane %v1329, 4
        %v1332 = vsel %vm1309, %v1326, %v1330
        %v1333 = vsel %vm1309, %v1328, %v1331
        %v1336 = vadd.f32 %v1322, %v1332
        %v1337 = vadd.f32 %v1323, %v1333
        %1340 = vst [vmem:[#allocation1] ss:$2 sm:$0xff] %v1336
        %s1341 = scalar_lea.vmem [#allocation1], 16
        %1342 = vst [vmem:[%s1341] ss:$2 sm:$0xff] %v1337
        %v1343 = vld.sshfl [vmem:[#allocation1] sm:$0xff pattern:$0x75316420]
        %v1344 = vld.sshfl [vmem:[#allocation1 + $0x8] sm:$0xff pattern:$0x75316420]
        %v1345 = vld.sshfl [vmem:[#allocation1 + $0x10] sm:$0xff pattern:$0x75316420]
        %v1346 = vld.sshfl [vmem:[#allocation1 + $0x18] sm:$0xff pattern:$0x75316420]
        %v1351 = vsel %vm1309, %v1343, 0.0
        %v1352 = vrot.slane %v1351, 4
        %v1353 = vadd.f32 %v1351, %v1352
        %v1354 = vrot.slane %v1353, 2
        %v1355 = vadd.f32 %v1353, %v1354
        %v1356 = vrot.slane %v1355, 1
        %v1357 = vadd.f32 %v1355, %v1356
        %v1358 = vsel %vm1309, %v1344, 0.0
        %v1359 = vrot.slane %v1358, 4
        %v1360 = vadd.f32 %v1358, %v1359
        %v1361 = vrot.slane %v1360, 2
        %v1362 = vadd.f32 %v1360, %v1361
        %v1363 = vrot.slane %v1362, 1
        %v1364 = vadd.f32 %v1362, %v1363
        %v1365 = vsel %vm1309, %v1345, 0.0
        %v1366 = vrot.slane %v1365, 4
        %v1367 = vadd.f32 %v1365, %v1366
        %v1368 = vrot.slane %v1367, 2
        %v1369 = vadd.f32 %v1367, %v1368
        %v1370 = vrot.slane %v1369, 1
        %v1371 = vadd.f32 %v1369, %v1370
        %v1372 = vsel %vm1309, %v1346, 0.0
        %v1373 = vrot.slane %v1372, 4
        %v1374 = vadd.f32 %v1372, %v1373
        %v1375 = vrot.slane %v1374, 2
        %v1376 = vadd.f32 %v1374, %v1375
        %v1377 = vrot.slane %v1376, 1
        %v1378 = vadd.f32 %v1376, %v1377
        %v1379 = vmul.f32 %v1357, 0.25
        %v1380 = vmul.f32 %v1364, 0.25
        %v1381 = vmul.f32 %v1371, 0.25
        %v1382 = vmul.f32 %v1378, 0.25
        %v1387 = vrot.slane %v1380, 4
        %v1388 = vrot.slane %v1382, 4
        %v1389 = vsel %vm1309, %v1379, %v1387
        %v1390 = vsel %vm1309, %v1381, %v1388
        %v1393 = vsub.f32 %v1336, %v1389
        %v1394 = vsub.f32 %v1337, %v1390
        %v1395 = vmul.f32 %v1393, %v1393
        %v1396 = vmul.f32 %v1394, %v1394
        %1399 = vst [vmem:[#allocation1] ss:$2 sm:$0xff] %v1395
        %s1400 = scalar_lea.vmem [#allocation1], 16
        %1401 = vst [vmem:[%s1400] ss:$2 sm:$0xff] %v1396
        %v1402 = vld.sshfl [vmem:[#allocation1] sm:$0xff pattern:$0x75316420]
        %v1403 = vld.sshfl [vmem:[#allocation1 + $0x8] sm:$0xff pattern:$0x75316420]
        %v1404 = vld.sshfl [vmem:[#allocation1 + $0x10] sm:$0xff pattern:$0x75316420]
        %v1405 = vld.sshfl [vmem:[#allocation1 + $0x18] sm:$0xff pattern:$0x75316420]
        %v1410 = vsel %vm1309, %v1402, 0.0
        %v1411 = vrot.slane %v1410, 4
        %v1412 = vadd.f32 %v1410, %v1411
        %v1413 = vrot.slane %v1412, 2
        %v1414 = vadd.f32 %v1412, %v1413
        %v1415 = vrot.slane %v1414, 1
        %v1416 = vadd.f32 %v1414, %v1415
        %v1417 = vsel %vm1309, %v1403, 0.0
        %v1418 = vrot.slane %v1417, 4
        %v1419 = vadd.f32 %v1417, %v1418
        %v1420 = vrot.slane %v1419, 2
        %v1421 = vadd.f32 %v1419, %v1420
        %v1422 = vrot.slane %v1421, 1
        %v1423 = vadd.f32 %v1421, %v1422
        %v1424 = vsel %vm1309, %v1404, 0.0
        %v1425 = vrot.slane %v1424, 4
        %v1426 = vadd.f32 %v1424, %v1425
        %v1427 = vrot.slane %v1426, 2
        %v1428 = vadd.f32 %v1426, %v1427
        %v1429 = vrot.slane %v1428, 1
        %v1430 = vadd.f32 %v1428, %v1429
        %v1431 = vsel %vm1309, %v1405, 0.0
        %v1432 = vrot.slane %v1431, 4
        %v1433 = vadd.f32 %v1431, %v1432
        %v1434 = vrot.slane %v1433, 2
        %v1435 = vadd.f32 %v1433, %v1434
        %v1436 = vrot.slane %v1435, 1
        %v1437 = vadd.f32 %v1435, %v1436
        %v1438 = vmul.f32 %v1416, 0.25
        %v1439 = vmul.f32 %v1423, 0.25
        %v1440 = vmul.f32 %v1430, 0.25
        %v1441 = vmul.f32 %v1437, 0.25
        %v1442 = vadd.f32 %v1438, 1e-05
        %v1443 = vadd.f32 %v1439, 1e-05
        %v1444 = vadd.f32 %v1440, 1e-05
        %v1445 = vadd.f32 %v1441, 1e-05
        %v1446 = vrsqrt.pop %v1442
        %v1447 = vmul.f32 %v1446, %v1442
        %v1448 = vmul.f32 %v1447, %v1446
        %v1449 = vmul.f32 0.5, %v1448
        %v1450 = vsub.f32 1.5, %v1449
        %v1451 = vmul.f32 %v1446, %v1450
        %vm1452 = vweird.f32 %v1442
        %vm1453 = vweird.f32 %v1446
        %vm1454 = vmor %vm1452, %vm1453
        %v1455 = vsel %vm1454, %v1446, %v1451
        %v1456 = vrsqrt.pop %v1443
        %v1457 = vmul.f32 %v1456, %v1443
        %v1458 = vmul.f32 %v1457, %v1456
        %v1459 = vmul.f32 0.5, %v1458
        %v1460 = vsub.f32 1.5, %v1459
        %v1461 = vmul.f32 %v1456, %v1460
        %vm1462 = vweird.f32 %v1443
        %vm1463 = vweird.f32 %v1456
        %vm1464 = vmor %vm1462, %vm1463
        %v1465 = vsel %vm1464, %v1456, %v1461
        %v1466 = vrsqrt.pop %v1444
        %v1467 = vmul.f32 %v1466, %v1444
        %v1468 = vmul.f32 %v1467, %v1466
        %v1469 = vmul.f32 0.5, %v1468
        %v1470 = vsub.f32 1.5, %v1469
        %v1471 = vmul.f32 %v1466, %v1470
        %vm1472 = vweird.f32 %v1444
        %vm1473 = vweird.f32 %v1466
        %vm1474 = vmor %vm1472, %vm1473
        %v1475 = vsel %vm1474, %v1466, %v1471
        %v1476 = vrsqrt.pop %v1445
        %v1477 = vmul.f32 %v1476, %v1445
        %v1478 = vmul.f32 %v1477, %v1476
        %v1479 = vmul.f32 0.5, %v1478
        %v1480 = vsub.f32 1.5, %v1479
        %v1481 = vmul.f32 %v1476, %v1480
        %vm1482 = vweird.f32 %v1445
        %vm1483 = vweird.f32 %v1476
        %vm1484 = vmor %vm1482, %vm1483
        %v1485 = vsel %vm1484, %v1476, %v1481
        %v1490 = vrot.slane %v1465, 4
        %v1491 = vrot.slane %v1485, 4
        %v1492 = vsel %vm1309, %v1455, %v1490
        %v1493 = vsel %vm1309, %v1475, %v1491
        %v1496 = vmul.f32 %v1393, %v1492
        %v1497 = vmul.f32 %v1394, %v1493
        %v1498 = vmul.f32 %v1496, 0.2
        %v1499 = vmul.f32 %v1497, 0.2
        %v1500 = vmax.f32 %v1496, %v1498
        %v1501 = vmax.f32 %v1497, %v1499
        %1504 = vst [vmem:[#allocation1] ss:$2 sm:$0xff] %v1500
        %s1505 = scalar_lea.vmem [#allocation1], 16
        %1506 = vst [vmem:[%s1505] ss:$2 sm:$0xff] %v1501
        %v1507 = vld.sshfl [vmem:[#allocation1] sm:$0xff pattern:$0x75316420]
        %v1508 = vld.sshfl [vmem:[#allocation1 + $0x8] sm:$0xff pattern:$0x75316420]
        %v1509 = vld.sshfl [vmem:[#allocation1 + $0x10] sm:$0xff pattern:$0x75316420]
        %v1510 = vld.sshfl [vmem:[#allocation1 + $0x18] sm:$0xff pattern:$0x75316420]
        %v1515 = vpack.c.bf16 %v1508, %v1507
        %v1516 = vpack.c.bf16 %v1510, %v1509
        %v1519 = vrot.slane %v1515, 2
        %v1520 = vrot.slane %v1516, 4
        %v1521 = vrot.slane %v1516, 6
        %vm1522 = vcmask 1041408
        %v1525 = vsel %vm1522, %v1515, %v1519
        %vm1526 = vcmask 1045508
        %v1529 = vsel %vm1526, %v1520, %v1521
        %v1530 = vsel %vm1309, %v1525, %v1529
        %1532 = vst [vmem:[%s306] sm:$0xff] %v1530
      $region40: #{discriminator_forward.8} parent=31 // pred_fallthru
        _
      %s1533 = smul.u32 4, %s22
      %p1534 = scmp.lt.s32.totalorder %s20, 1
      %s1535 = scalar_select %p1534, %s20, 1
      %p1536 = scmp.lt.s32.totalorder %s21, 0
      %s1537 = scalar_select %p1536, %s21, 0
      %p1538 = scmp.lt.s32.totalorder %s1533, 3
      %s1539 = scalar_select %p1538, %s1533, 3
      %s1540 = smul.addr %s1537, 4
      %s1541 = sadd.s32 %s1539, %s1540
      %s1542 = smul.addr %s1535, 4
      %s1543 = sadd.s32 %s1541, %s1542
      %s1544 = smul.addr %s1543, 2
      %s1545 = scalar_lea.vmem %s3, %s1544
      // Predicated region
      $region41: #{discriminator_forward.8} parent=31 // pred_check
        %p1546 = pneg %p146
      $region42: #{discriminator_forward.8} parent=31 // pred_check_branch
        %1548 = sbr.rel (%p1546) target = $region44
      $region43: #{discriminator_forward.8} parent=31 // pred_region
        %s1549 = smul.u32 4, %s22
      $region44: #{discriminator_forward.8} parent=31 // pred_fallthru
        _
    $region32: #{discriminator_forward.8} parent=5 // pred_fallthru
      _
    %p1550 = scmp.le.s32.totalorder 2, %s9
    // Predicated region
    $region45: #{discriminator_forward.8} parent=5 // pred_check
      %p1551 = pneg %p1550
    $region46: #{discriminator_forward.8} parent=5 // pred_check_branch
      %1553 = sbr.rel (%p1551) target = $region48
    $region47: #{discriminator_forward.8} parent=5 // pred_region
      %s1554 = ssub.s32 %s9, 2
      // Predicated region
      $region49: #{discriminator_forward.8} parent=47 // pred_check
        %p1555 = pneg %p152
      $region50: #{discriminator_forward.8} parent=47 // pred_check_branch
        %1557 = sbr.rel (%p1555) target = $region52
      $region51: #{discriminator_forward.8} parent=47 // pred_region
        %s1558 = smul.u32 4, %s26
        %p1559 = scmp.lt.s32.totalorder %s24, 1
        %s1560 = scalar_select %p1559, %s24, 1
        %p1561 = scmp.lt.s32.totalorder %s25, 0
        %s1562 = scalar_select %p1561, %s25, 0
        %p1563 = scmp.lt.s32.totalorder %s1558, 3
        %s1564 = scalar_select %p1563, %s1558, 3
        %s1565 = smul.addr %s1562, 4
        %s1566 = sadd.s32 %s1564, %s1565
        %s1567 = smul.addr %s1560, 4
        %s1568 = sadd.s32 %s1566, %s1567
        %s1569 = smul.addr %s1568, 2
        %s1570 = scalar_lea.vmem %s3, %s1569
      $region52: #{discriminator_forward.8} parent=47 // pred_fallthru
        _
    $region48: #{discriminator_forward.8} parent=5 // pred_fallthru
      _
  $region6: #{discriminator_forward.8} parent=0 // loop_footer
    %s13 = sadd.s32 1, %s9
  $region7: #{discriminator_forward.8} parent=0 // loop_footer_branch
    %8 = sbr.rel target = $region3
  $region8: #{discriminator_forward.8} parent=0 // loop_exit
    _

// kernel: discriminator_forward.9
$region0: #{discriminator_forward.9}
  #allocation0 [shape = 'u32[]', space=smem, size = 0x4, offset = 0x4, fixed_abs, tag = 'smem constant byte address 0x4 - core index']
  #allocation1 [shape = 'u32[72,128]{1,0:T(1,128)}', space=vmem, size = 0x9000, scoped, tag = 'internal scratch']
  #allocation2 [shape = 'f32[4,128]{1,0:T(4,128)}', space=vmem, size = 0x800, scoped, tag = 'scratch operand']
  %s0 = inlined_call_operand.vmem [shape: bf16[2,4,8192], index: 0, kind: input, shape index: {}]
  %s1 = inlined_call_operand.vmem [shape: bf16[8192,128], index: 1, kind: input, shape index: {}]
  %s2 = inlined_call_operand.vmem [shape: f32[1,128], index: 2, kind: input, shape index: {}]
  %s3 = inlined_call_operand.vmem [shape: f32[2,4,128], index: 3, kind: output, shape index: {}]
  %s4 = sld [smem:[#allocation0]]
  $region53: #{discriminator_forward.9} parent=0
    _
  %s6 = ssub.s32 1, %s4
  %s7 = scalar_select 0, %s6, %s4
  loop: start=0, step=1, limit=34
  $region2: #{discriminator_forward.9} parent=0 // loop_pre_header
    _
  $region3: #{discriminator_forward.9} parent=0 // loop_header
    %s9 = sphi 0, %s13
    %p10 = scmp.ge.s32.totalorder %s9, 34
    %s16 = sphi 0, %s42
    %s17 = sphi 0, %s38
    %s18 = sphi 0, %s34
    %s19 = sphi 0, %s30
    %s20 = sphi 0, %s16
    %s21 = sphi 0, %s17
    %s22 = sphi 0, %s18
    %s23 = sphi 0, %s19
    %s24 = sphi 0, %s20
    %s25 = sphi 0, %s21
    %s26 = sphi 0, %s22
    %s27 = sphi 0, %s23
    %s49 = sphi 0, %s51
    %s52 = sphi 0, %s49
    %s53 = sphi 0, %s52
    %s69 = sphi 0, %s53
    %s77 = sphi 0, %s79
    %s80 = sphi 0, %s77
    %s81 = sphi 0, %s80
    %s97 = sphi 0, %s81
    %s103 = sphi 0, %s105
    %s106 = sphi 0, %s103
    %s107 = sphi 0, %s106
    %s123 = sphi 0, %s107
    %s133 = sphi 0, %s135
    %s136 = sphi 0, %s133
    %s137 = sphi 0, %s136
    %s153 = sphi 0, %s137
  $region4: #{discriminator_forward.9} parent=0 // loop_header_branch
    %12 = sbr.rel (%p10) target = $region8
  $region5: #{discriminator_forward.9} parent=0 // loop_body
    %s14 = ssub.s32 %s9, 1
    %s15 = ssub.s32 %s9, 2
    %s28 = sadd.s32 1, %s19
    %p29 = scmp.ge.s32.totalorder %s28, 16
    %s30 = scalar_select %p29, 0, %s28
    %s31 = sadd.s32 1, %s18
    %s32 = scalar_select %p29, %s31, %s18
    %p33 = scmp.ge.s32.totalorder %s32, 1
    %s34 = scalar_select %p33, 0, %s32
    %s35 = sadd.s32 1, %s17
    %s36 = scalar_select %p33, %s35, %s17
    %p37 = scmp.ge.s32.totalorder %s36, 1
    %s38 = scalar_select %p37, 0, %s36
    %s39 = sadd.s32 1, %s16
    %s40 = scalar_select %p37, %s39, %s16
    %p41 = scmp.ge.s32.totalorder %s40, 2
    %s42 = scalar_select %p41, 0, %s40
    %s43 = ssub.s32 %s16, %s42
    %s44 = ssub.s32 %s17, %s38
    %s45 = sor.u32 %s43, %s44
    %s46 = ssub.s32 %s19, %s30
    %s47 = sor.u32 %s45, %s46
    %p48 = scmp.eq.s32.totalorder %s47, 0
    %s50 = sadd.s32 %s49, 1
    %s51 = scalar_select %p48, %s49, %s50
    %p54 = pneg %p48
    %p55 = scmp.eq.s32.totalorder %s9, 31
    %p56 = por %p54, %p55
    %p57 = scmp.ne.s32.totalorder %s49, %s52
    %p58 = scmp.eq.s32.totalorder %s9, 0
    %p59 = por %p57, %p58
    %p60 = scmp.ne.s32.totalorder %s49, %s52
    %p61 = scmp.eq.s32.totalorder %s14, 31
    %p62 = por %p60, %p61
    %p63 = scmp.ne.s32.totalorder %s52, %s53
    %p64 = scmp.eq.s32.totalorder %s14, 0
    %p65 = por %p63, %p64
    %p66 = scmp.ne.s32.totalorder %s52, %s53
    %p67 = scmp.eq.s32.totalorder %s15, 31
    %p68 = por %p66, %p67
    %p70 = scmp.ne.s32.totalorder %s53, %s69
    %p71 = scmp.eq.s32.totalorder %s15, 0
    %p72 = por %p70, %p71
    %s73 = ssub.s32 %s19, %s30
    %s74 = ssub.s32 %s18, %s34
    %s75 = sor.u32 %s73, %s74
    %p76 = scmp.eq.s32.totalorder %s75, 0
    %s78 = sadd.s32 %s77, 1
    %s79 = scalar_select %p76, %s77, %s78
    %p82 = pneg %p76
    %p83 = scmp.eq.s32.totalorder %s9, 31
    %p84 = por %p82, %p83
    %p85 = scmp.ne.s32.totalorder %s77, %s80
    %p86 = scmp.eq.s32.totalorder %s9, 0
    %p87 = por %p85, %p86
    %p88 = scmp.ne.s32.totalorder %s77, %s80
    %p89 = scmp.eq.s32.totalorder %s14, 31
    %p90 = por %p88, %p89
    %p91 = scmp.ne.s32.totalorder %s80, %s81
    %p92 = scmp.eq.s32.totalorder %s14, 0
    %p93 = por %p91, %p92
    %p94 = scmp.ne.s32.totalorder %s80, %s81
    %p95 = scmp.eq.s32.totalorder %s15, 31
    %p96 = por %p94, %p95
    %p98 = scmp.ne.s32.totalorder %s81, %s97
    %p99 = scmp.eq.s32.totalorder %s15, 0
    %p100 = por %p98, %p99
    %s101 = ssub.s32 %s18, %s34
    %p102 = scmp.eq.s32.totalorder %s101, 0
    %s104 = sadd.s32 %s103, 1
    %s105 = scalar_select %p102, %s103, %s104
    %p108 = pneg %p102
    %p109 = scmp.eq.s32.totalorder %s9, 31
    %p110 = por %p108, %p109
    %p111 = scmp.ne.s32.totalorder %s103, %s106
    %p112 = scmp.eq.s32.totalorder %s9, 0
    %p113 = por %p111, %p112
    %p114 = scmp.ne.s32.totalorder %s103, %s106
    %p115 = scmp.eq.s32.totalorder %s14, 31
    %p116 = por %p114, %p115
    %p117 = scmp.ne.s32.totalorder %s106, %s107
    %p118 = scmp.eq.s32.totalorder %s14, 0
    %p119 = por %p117, %p118
    %p120 = scmp.ne.s32.totalorder %s106, %s107
    %p121 = scmp.eq.s32.totalorder %s15, 31
    %p122 = por %p120, %p121
    %p124 = scmp.ne.s32.totalorder %s107, %s123
    %p125 = scmp.eq.s32.totalorder %s15, 0
    %p126 = por %p124, %p125
    %s127 = ssub.s32 %s16, %s42
    %s128 = ssub.s32 %s17, %s38
    %s129 = sor.u32 %s127, %s128
    %s130 = ssub.s32 %s18, %s34
    %s131 = sor.u32 %s129, %s130
    %p132 = scmp.eq.s32.totalorder %s131, 0
    %s134 = sadd.s32 %s133, 1
    %s135 = scalar_select %p132, %s133, %s134
    %p138 = pneg %p132
    %p139 = scmp.eq.s32.totalorder %s9, 31
    %p140 = por %p138, %p139
    %p141 = scmp.ne.s32.totalorder %s133, %s136
    %p142 = scmp.eq.s32.totalorder %s9, 0
    %p143 = por %p141, %p142
    %p144 = scmp.ne.s32.totalorder %s133, %s136
    %p145 = scmp.eq.s32.totalorder %s14, 31
    %p146 = por %p144, %p145
    %p147 = scmp.ne.s32.totalorder %s136, %s137
    %p148 = scmp.eq.s32.totalorder %s14, 0
    %p149 = por %p147, %p148
    %p150 = scmp.ne.s32.totalorder %s136, %s137
    %p151 = scmp.eq.s32.totalorder %s15, 31
    %p152 = por %p150, %p151
    %p154 = scmp.ne.s32.totalorder %s137, %s153
    %p155 = scmp.eq.s32.totalorder %s15, 0
    %p156 = por %p154, %p155
    %p157 = scmp.le.s32.totalorder 1, %s9
    %p158 = scmp.lt.s32.totalorder %s9, 33
    %p159 = pnand %p157, %p158
    %p160 = pneg %p159
    // Predicated region
    $region9: #{discriminator_forward.9} parent=5 // pred_check
      _
    $region10: #{discriminator_forward.9} parent=5 // pred_check_branch
      %162 = sbr.rel (%p159) target = $region12
    $region11: #{discriminator_forward.9} parent=5 // pred_region
      %s163 = ssub.s32 %s9, 1
      // Predicated region
      $region13: #{discriminator_forward.9} parent=11 // pred_check
        %p164 = pneg %p119
      $region14: #{discriminator_forward.9} parent=11 // pred_check_branch
        %166 = sbr.rel (%p164) target = $region16
      $region15: #{discriminator_forward.9} parent=11 // pred_region
        %p167 = scmp.lt.s32.totalorder %s22, 0
        %s168 = scalar_select %p167, %s22, 0
        %s169 = scalar_lea.vmem %s2, %s168
      $region16: #{discriminator_forward.9} parent=11 // pred_fallthru
        _
    $region12: #{discriminator_forward.9} parent=5 // pred_fallthru
      _
    %p170 = scmp.lt.s32.totalorder %s9, 32
    // Predicated region
    $region17: #{discriminator_forward.9} parent=5 // pred_check
      %p171 = pneg %p170
    $region18: #{discriminator_forward.9} parent=5 // pred_check_branch
      %173 = sbr.rel (%p171) target = $region20
    $region19: #{discriminator_forward.9} parent=5 // pred_region
      // Predicated region
      $region21: #{discriminator_forward.9} parent=19 // pred_check
        %p174 = pneg %p59
      $region22: #{discriminator_forward.9} parent=19 // pred_check_branch
        %176 = sbr.rel (%p174) target = $region24
      $region23: #{discriminator_forward.9} parent=19 // pred_region
        %s177 = smul.u32 4, %s19
        %p178 = scmp.lt.s32.totalorder %s16, 1
        %s179 = scalar_select %p178, %s16, 1
        %p180 = scmp.lt.s32.totalorder %s17, 0
        %s181 = scalar_select %p180, %s17, 0
        %p182 = scmp.lt.s32.totalorder %s177, 63
        %s183 = scalar_select %p182, %s177, 63
        %s184 = smul.addr %s181, 64
        %s185 = sadd.s32 %s183, %s184
        %s186 = smul.addr %s179, 64
        %s187 = sadd.s32 %s185, %s186
        %s188 = smul.addr %s187, 2
        %s189 = scalar_lea.vmem %s0, %s188
        %s190 = smul.u32 4, %s19
      $region24: #{discriminator_forward.9} parent=19 // pred_fallthru
        _
      // Predicated region
      $region25: #{discriminator_forward.9} parent=19 // pred_check
        %p191 = pneg %p87
      $region26: #{discriminator_forward.9} parent=19 // pred_check_branch
        %193 = sbr.rel (%p191) target = $region28
      $region27: #{discriminator_forward.9} parent=19 // pred_region
        %s194 = smul.u32 64, %s19
        %p195 = scmp.lt.s32.totalorder %s194, 1023
        %s196 = scalar_select %p195, %s194, 1023
        %p197 = scmp.lt.s32.totalorder %s18, 0
        %s198 = scalar_select %p197, %s18, 0
        %s199 = sadd.s32 %s198, %s196
        %s200 = smul.addr %s199, 4
        %s201 = scalar_lea.vmem %s1, %s200
        %s202 = smul.u32 64, %s19
      $region28: #{discriminator_forward.9} parent=19 // pred_fallthru
        _
    $region20: #{discriminator_forward.9} parent=5 // pred_fallthru
      _
    %p203 = scmp.le.s32.totalorder 1, %s9
    %p204 = scmp.lt.s32.totalorder %s9, 33
    %p205 = pnand %p203, %p204
    %p206 = pneg %p205
    // Predicated region
    $region29: #{discriminator_forward.9} parent=5 // pred_check
      _
    $region30: #{discriminator_forward.9} parent=5 // pred_check_branch
      %208 = sbr.rel (%p205) target = $region32
    $region31: #{discriminator_forward.9} parent=5 // pred_region
      %s209 = ssub.s32 %s9, 1
      %s210 = smul.u32 4, %s23
      %p211 = scmp.lt.s32.totalorder %s20, 1
      %s212 = scalar_select %p211, %s20, 1
      %p213 = scmp.lt.s32.totalorder %s21, 0
      %s214 = scalar_select %p213, %s21, 0
      %p215 = scmp.lt.s32.totalorder %s210, 63
      %s216 = scalar_select %p215, %s210, 63
      %s217 = smul.addr %s214, 64
      %s218 = sadd.s32 %s216, %s217
      %s219 = smul.addr %s212, 64
      %s220 = sadd.s32 %s218, %s219
      %s221 = smul.addr %s220, 2
      %s222 = scalar_lea.vmem %s0, %s221
      %p223 = pneg %p65
      %p224 = pneg %p62
      %s225 = smul.u32 64, %s23
      %p226 = scmp.lt.s32.totalorder %s225, 1023
      %s227 = scalar_select %p226, %s225, 1023
      %p228 = scmp.lt.s32.totalorder %s22, 0
      %s229 = scalar_select %p228, %s22, 0
      %s230 = sadd.s32 %s229, %s227
      %s231 = smul.addr %s230, 4
      %s232 = scalar_lea.vmem %s1, %s231
      %p233 = pneg %p93
      %p234 = pneg %p90
      %p235 = scmp.lt.s32.totalorder %s22, 0
      %s236 = scalar_select %p235, %s22, 0
      %s237 = scalar_lea.vmem %s2, %s236
      %p238 = pneg %p119
      %p239 = pneg %p116
      %p240 = pneg %p149
      %p241 = pneg %p146
      %p242 = scmp.lt.s32.totalorder %s20, 1
      %s243 = scalar_select %p242, %s20, 1
      %p244 = scmp.lt.s32.totalorder %s21, 0
      %s245 = scalar_select %p244, %s21, 0
      %p246 = scmp.lt.s32.totalorder %s22, 0
      %s247 = scalar_select %p246, %s22, 0
      %s248 = sadd.s32 %s247, %s245
      %s249 = sadd.s32 %s248, %s243
      %s250 = smul.addr %s249, 4
      %s251 = scalar_lea.vmem %s3, %s250
      %s252 = smul.u32 4, %s23
      %p253 = scmp.lt.s32.totalorder %s20, 1
      %s254 = scalar_select %p253, %s20, 1
      %p255 = scmp.lt.s32.totalorder %s21, 0
      %s256 = scalar_select %p255, %s21, 0
      %p257 = scmp.lt.s32.totalorder %s252, 63
      %s258 = scalar_select %p257, %s252, 63
      %s259 = smul.addr %s256, 64
      %s260 = sadd.s32 %s258, %s259
      %s261 = smul.addr %s254, 64
      %s262 = sadd.s32 %s260, %s261
      %s263 = smul.addr %s262, 2
      %s264 = scalar_lea.vmem %s0, %s263
      %s265 = smul.u32 4, %s23
      %s266 = smul.u32 64, %s23
      %p267 = scmp.lt.s32.totalorder %s266, 1023
      %s268 = scalar_select %p267, %s266, 1023
      %p269 = scmp.lt.s32.totalorder %s22, 0
      %s270 = scalar_select %p269, %s22, 0
      %s271 = sadd.s32 %s270, %s268
      %s272 = smul.addr %s271, 4
      %s273 = scalar_lea.vmem %s1, %s272
      %s274 = smul.u32 64, %s23
      %p275 = scmp.lt.s32.totalorder %s22, 0
      %s276 = scalar_select %p275, %s22, 0
      %s277 = scalar_lea.vmem %s2, %s276
      %p278 = scmp.lt.s32.totalorder %s20, 1
      %s279 = scalar_select %p278, %s20, 1
      %p280 = scmp.lt.s32.totalorder %s21, 0
      %s281 = scalar_select %p280, %s21, 0
      %p282 = scmp.lt.s32.totalorder %s22, 0
      %s283 = scalar_select %p282, %s22, 0
      %s284 = sadd.s32 %s283, %s281
      %s285 = sadd.s32 %s284, %s279
      %s286 = smul.addr %s285, 4
      %s287 = scalar_lea.vmem %s3, %s286
      %p288 = scmp.eq.s32.totalorder %s23, 0
      // Predicated region
      $region33: #{discriminator_forward.9} parent=31 // pred_check
        %p289 = pneg %p288
      $region34: #{discriminator_forward.9} parent=31 // pred_check_branch
        %291 = sbr.rel (%p289) target = $region36
      $region35: #{discriminator_forward.9} parent=31 // pred_region
        %292 = vst [vmem:[#allocation2] sm:$0xf] 0.0
      $region36: #{discriminator_forward.9} parent=31 // pred_fallthru
        _
      %v293 = vld [vmem:[#allocation2] sm:$0xf]
      %v294 = vld [vmem:[%s264] sm:$0xff]
      %v295 = vld [vmem:[%s273] sm:$0xf]
      %v296 = vld [vmem:[%s273 + $0x4] sm:$0xf]
      %v297 = vld [vmem:[%s273 + $0x8] sm:$0xf]
      %v298 = vld [vmem:[%s273 + $0xc] sm:$0xf]
      %v299 = vld [vmem:[%s273 + $0x10] sm:$0xf]
      %v300 = vld [vmem:[%s273 + $0x14] sm:$0xf]
      %v301 = vld [vmem:[%s273 + $0x18] sm:$0xf]
      %v302 = vld [vmem:[%s273 + $0x1c] sm:$0xf]
      %v303 = vld [vmem:[%s273 + $0x20] sm:$0xf]
      %v304 = vld [vmem:[%s273 + $0x24] sm:$0xf]
      %v305 = vld [vmem:[%s273 + $0x28] sm:$0xf]
      %v306 = vld [vmem:[%s273 + $0x2c] sm:$0xf]
      %v307 = vld [vmem:[%s273 + $0x30] sm:$0xf]
      %v308 = vld [vmem:[%s273 + $0x34] sm:$0xf]
      %v309 = vld [vmem:[%s273 + $0x38] sm:$0xf]
      %v310 = vld [vmem:[%s273 + $0x3c] sm:$0xf]
      %v311 = vld [vmem:[%s273 + $0x40] sm:$0xf]
      %v312 = vld [vmem:[%s273 + $0x44] sm:$0xf]
      %v313 = vld [vmem:[%s273 + $0x48] sm:$0xf]
      %v314 = vld [vmem:[%s273 + $0x4c] sm:$0xf]
      %v315 = vld [vmem:[%s273 + $0x50] sm:$0xf]
      %v316 = vld [vmem:[%s273 + $0x54] sm:$0xf]
      %v317 = vld [vmem:[%s273 + $0x58] sm:$0xf]
      %v318 = vld [vmem:[%s273 + $0x5c] sm:$0xf]
      %v319 = vld [vmem:[%s273 + $0x60] sm:$0xf]
      %v320 = vld [vmem:[%s273 + $0x64] sm:$0xf]
      %v321 = vld [vmem:[%s273 + $0x68] sm:$0xf]
      %v322 = vld [vmem:[%s273 + $0x6c] sm:$0xf]
      %v323 = vld [vmem:[%s273 + $0x70] sm:$0xf]
      %v324 = vld [vmem:[%s273 + $0x74] sm:$0xf]
      %v325 = vld [vmem:[%s273 + $0x78] sm:$0xf]
      %v326 = vld [vmem:[%s273 + $0x7c] sm:$0xf]
      %v327 = vld [vmem:[%s273 + $0x80] sm:$0xf]
      %v328 = vld [vmem:[%s273 + $0x84] sm:$0xf]
      %v329 = vld [vmem:[%s273 + $0x88] sm:$0xf]
      %v330 = vld [vmem:[%s273 + $0x8c] sm:$0xf]
      %v331 = vld [vmem:[%s273 + $0x90] sm:$0xf]
      %v332 = vld [vmem:[%s273 + $0x94] sm:$0xf]
      %v333 = vld [vmem:[%s273 + $0x98] sm:$0xf]
      %v334 = vld [vmem:[%s273 + $0x9c] sm:$0xf]
      %v335 = vld [vmem:[%s273 + $0xa0] sm:$0xf]
      %v336 = vld [vmem:[%s273 + $0xa4] sm:$0xf]
      %v337 = vld [vmem:[%s273 + $0xa8] sm:$0xf]
      %v338 = vld [vmem:[%s273 + $0xac] sm:$0xf]
      %v339 = vld [vmem:[%s273 + $0xb0] sm:$0xf]
      %v340 = vld [vmem:[%s273 + $0xb4] sm:$0xf]
      %v341 = vld [vmem:[%s273 + $0xb8] sm:$0xf]
      %v342 = vld [vmem:[%s273 + $0xbc] sm:$0xf]
      %v343 = vld [vmem:[%s273 + $0xc0] sm:$0xf]
      %v344 = vld [vmem:[%s273 + $0xc4] sm:$0xf]
      %v345 = vld [vmem:[%s273 + $0xc8] sm:$0xf]
      %v346 = vld [vmem:[%s273 + $0xcc] sm:$0xf]
      %v347 = vld [vmem:[%s273 + $0xd0] sm:$0xf]
      %v348 = vld [vmem:[%s273 + $0xd4] sm:$0xf]
      %v349 = vld [vmem:[%s273 + $0xd8] sm:$0xf]
      %v350 = vld [vmem:[%s273 + $0xdc] sm:$0xf]
      %v351 = vld [vmem:[%s273 + $0xe0] sm:$0xf]
      %v352 = vld [vmem:[%s273 + $0xe4] sm:$0xf]
      %v353 = vld [vmem:[%s273 + $0xe8] sm:$0xf]
      %v354 = vld [vmem:[%s273 + $0xec] sm:$0xf]
      %v355 = vld [vmem:[%s273 + $0xf0] sm:$0xf]
      %v356 = vld [vmem:[%s273 + $0xf4] sm:$0xf]
      %v357 = vld [vmem:[%s273 + $0xf8] sm:$0xf]
      %v358 = vld [vmem:[%s273 + $0xfc] sm:$0xf]
      %360 = vst [vmem:[#allocation1] ss:$4 sm:$0xff] %v294
      %v361 = vld.sshfl [vmem:[#allocation1] sm:$0xff pattern:$0x73625140]
      %v362 = vld.sshfl [vmem:[#allocation1 + $0x8] sm:$0xff pattern:$0x73625140]
      %v363 = vld.sshfl [vmem:[#allocation1 + $0x10] sm:$0xff pattern:$0x73625140]
      %v364 = vld.sshfl [vmem:[#allocation1 + $0x18] sm:$0xff pattern:$0x73625140]
      %v433 = vunpack.c.l.b16 %v295
      %v434 = vunpack.c.l.b16 %v296
      %v435 = vunpack.c.l.b16 %v297
      %v436 = vunpack.c.l.b16 %v298
      %v437 = vunpack.c.l.b16 %v299
      %v438 = vunpack.c.l.b16 %v300
      %v439 = vunpack.c.l.b16 %v301
      %v440 = vunpack.c.l.b16 %v302
      %v441 = vunpack.c.l.b16 %v303
      %v442 = vunpack.c.l.b16 %v304
      %v443 = vunpack.c.l.b16 %v305
      %v444 = vunpack.c.l.b16 %v306
      %v445 = vunpack.c.l.b16 %v307
      %v446 = vunpack.c.l.b16 %v308
      %v447 = vunpack.c.l.b16 %v309
      %v448 = vunpack.c.l.b16 %v310
      %v449 = vunpack.c.l.b16 %v311
      %v450 = vunpack.c.l.b16 %v312
      %v451 = vunpack.c.l.b16 %v313
      %v452 = vunpack.c.l.b16 %v314
      %v453 = vunpack.c.l.b16 %v315
      %v454 = vunpack.c.l.b16 %v316
      %v455 = vunpack.c.l.b16 %v317
      %v456 = vunpack.c.l.b16 %v318
      %v457 = vunpack.c.l.b16 %v319
      %v458 = vunpack.c.l.b16 %v320
      %v459 = vunpack.c.l.b16 %v321
      %v460 = vunpack.c.l.b16 %v322
      %v461 = vunpack.c.l.b16 %v323
      %v462 = vunpack.c.l.b16 %v324
      %v463 = vunpack.c.l.b16 %v325
      %v464 = vunpack.c.l.b16 %v326
      %v465 = vunpack.c.l.b16 %v327
      %v466 = vunpack.c.l.b16 %v328
      %v467 = vunpack.c.l.b16 %v329
      %v468 = vunpack.c.l.b16 %v330
      %v469 = vunpack.c.l.b16 %v331
      %v470 = vunpack.c.l.b16 %v332
      %v471 = vunpack.c.l.b16 %v333
      %v472 = vunpack.c.l.b16 %v334
      %v473 = vunpack.c.l.b16 %v335
      %v474 = vunpack.c.l.b16 %v336
      %v475 = vunpack.c.l.b16 %v337
      %v476 = vunpack.c.l.b16 %v338
      %v477 = vunpack.c.l.b16 %v339
      %v478 = vunpack.c.l.b16 %v340
      %v479 = vunpack.c.l.b16 %v341
      %v480 = vunpack.c.l.b16 %v342
      %v481 = vunpack.c.l.b16 %v343
      %v482 = vunpack.c.l.b16 %v344
      %v483 = vunpack.c.l.b16 %v345
      %v484 = vunpack.c.l.b16 %v346
      %v485 = vunpack.c.l.b16 %v347
      %v486 = vunpack.c.l.b16 %v348
      %v487 = vunpack.c.l.b16 %v349
      %v488 = vunpack.c.l.b16 %v350
      %v489 = vunpack.c.l.b16 %v351
      %v490 = vunpack.c.l.b16 %v352
      %v491 = vunpack.c.l.b16 %v353
      %v492 = vunpack.c.l.b16 %v354
      %v493 = vunpack.c.l.b16 %v355
      %v494 = vunpack.c.l.b16 %v356
      %v495 = vunpack.c.l.b16 %v357
      %v496 = vunpack.c.l.b16 %v358
      %v497 = vpack.c.b16 %v434, %v433
      %v498 = vpack.c.b16 %v436, %v435
      %v499 = vpack.c.b16 %v438, %v437
      %v500 = vpack.c.b16 %v440, %v439
      %v501 = vpack.c.b16 %v442, %v441
      %v502 = vpack.c.b16 %v444, %v443
      %v503 = vpack.c.b16 %v446, %v445
      %v504 = vpack.c.b16 %v448, %v447
      %v505 = vpack.c.b16 %v450, %v449
      %v506 = vpack.c.b16 %v452, %v451
      %v507 = vpack.c.b16 %v454, %v453
      %v508 = vpack.c.b16 %v456, %v455
      %v509 = vpack.c.b16 %v458, %v457
      %v510 = vpack.c.b16 %v460, %v459
      %v511 = vpack.c.b16 %v462, %v461
      %v512 = vpack.c.b16 %v464, %v463
      %v513 = vpack.c.b16 %v466, %v465
      %v514 = vpack.c.b16 %v468, %v467
      %v515 = vpack.c.b16 %v470, %v469
      %v516 = vpack.c.b16 %v472, %v471
      %v517 = vpack.c.b16 %v474, %v473
      %v518 = vpack.c.b16 %v476, %v475
      %v519 = vpack.c.b16 %v478, %v477
      %v520 = vpack.c.b16 %v480, %v479
      %v521 = vpack.c.b16 %v482, %v481
      %v522 = vpack.c.b16 %v484, %v483
      %v523 = vpack.c.b16 %v486, %v485
      %v524 = vpack.c.b16 %v488, %v487
      %v525 = vpack.c.b16 %v490, %v489
      %v526 = vpack.c.b16 %v492, %v491
      %v527 = vpack.c.b16 %v494, %v493
      %v528 = vpack.c.b16 %v496, %v495
      %561 = vmatpush.bf16.msra.mxu0 %v504
      %562 = vmatpush.bf16.msra.mxu0 %v503
      %563 = vmatpush.bf16.msra.mxu0 %v502
      %564 = vmatpush.bf16.msra.mxu0 %v501
      %565 = vmatpush.bf16.msra.mxu0 %v500
      %566 = vmatpush.bf16.msra.mxu0 %v499
      %567 = vmatpush.bf16.msra.mxu0 %v498
      %568 = vmatpush.bf16.msra.mxu0 %v497
      %569 = vmatmul.bf16.gmra.mxu0 %v361
      %v570 = vpop.f32.mrf.mxu0
      %v571 = vadd.f32 0.0, %v570
      %v572 = vpop.f32.mrf.mxu0
      %573 = vdwg.mxu0
      %574 = vmatpush.bf16.msra.mxu0 %v512
      %575 = vmatpush.bf16.msra.mxu0 %v511
      %576 = vmatpush.bf16.msra.mxu0 %v510
      %577 = vmatpush.bf16.msra.mxu0 %v509
      %578 = vmatpush.bf16.msra.mxu0 %v508
      %579 = vmatpush.bf16.msra.mxu0 %v507
      %580 = vmatpush.bf16.msra.mxu0 %v506
      %581 = vmatpush.bf16.msra.mxu0 %v505
      %582 = vmatmul.bf16.gmra.mxu0 %v362
      %v583 = vpop.f32.mrf.mxu0
      %v584 = vadd.f32 %v571, %v583
      %v585 = vpop.f32.mrf.mxu0
      %586 = vdwg.mxu0
      %587 = vmatpush.bf16.msra.mxu0 %v520
      %588 = vmatpush.bf16.msra.mxu0 %v519
      %589 = vmatpush.bf16.msra.mxu0 %v518
      %590 = vmatpush.bf16.msra.mxu0 %v517
      %591 = vmatpush.bf16.msra.mxu0 %v516
      %592 = vmatpush.bf16.msra.mxu0 %v515
      %593 = vmatpush.bf16.msra.mxu0 %v514
      %594 = vmatpush.bf16.msra.mxu0 %v513
      %595 = vmatmul.bf16.gmra.mxu0 %v363
      %v596 = vpop.f32.mrf.mxu0
      %v597 = vadd.f32 %v584, %v596
      %v598 = vpop.f32.mrf.mxu0
      %599 = vdwg.mxu0
      %600 = vmatpush.bf16.msra.mxu0 %v528
      %601 = vmatpush.bf16.msra.mxu0 %v527
      %602 = vmatpush.bf16.msra.mxu0 %v526
      %603 = vmatpush.bf16.msra.mxu0 %v525
      %604 = vmatpush.bf16.msra.mxu0 %v524
      %605 = vmatpush.bf16.msra.mxu0 %v523
      %606 = vmatpush.bf16.msra.mxu0 %v522
      %607 = vmatpush.bf16.msra.mxu0 %v521
      %608 = vmatmul.bf16.gmra.mxu0 %v364
      %v609 = vpop.f32.mrf.mxu0
      %v610 = vadd.f32 %v597, %v609
      %v611 = vpop.f32.mrf.mxu0
      %612 = vdwg.mxu0
      %v613 = vadd.f32 %v293, %v610
      %614 = vst [vmem:[#allocation2] sm:$0xf] %v613
      %p615 = scmp.eq.s32.totalorder %s23, 15
      // Predicated region
      $region37: #{discriminator_forward.9} parent=31 // pred_check
        %p616 = pneg %p615
      $region38: #{discriminator_forward.9} parent=31 // pred_check_branch
        %618 = sbr.rel (%p616) target = $region40
      $region39: #{discriminator_forward.9} parent=31 // pred_region
        %v619 = vld [vmem:[#allocation2] sm:$0xf]
        %v620 = vld [vmem:[%s277] sm:$0x1]
        %v622 = vperm.slane %v620, 0
        %v624 = vadd.f32 %v619, %v622
        %625 = vst [vmem:[%s287] sm:$0xf] %v624
      $region40: #{discriminator_forward.9} parent=31 // pred_fallthru
        _
      %p626 = scmp.lt.s32.totalorder %s20, 1
      %s627 = scalar_select %p626, %s20, 1
      %p628 = scmp.lt.s32.totalorder %s21, 0
      %s629 = scalar_select %p628, %s21, 0
      %p630 = scmp.lt.s32.totalorder %s22, 0
      %s631 = scalar_select %p630, %s22, 0
      %s632 = sadd.s32 %s631, %s629
      %s633 = sadd.s32 %s632, %s627
      %s634 = smul.addr %s633, 4
      %s635 = scalar_lea.vmem %s3, %s634
      // Predicated region
      $region41: #{discriminator_forward.9} parent=31 // pred_check
        %p636 = pneg %p146
      $region42: #{discriminator_forward.9} parent=31 // pred_check_branch
        %638 = sbr.rel (%p636) target = $region44
      $region43: #{discriminator_forward.9} parent=31 // pred_region
        _
      $region44: #{discriminator_forward.9} parent=31 // pred_fallthru
        _
    $region32: #{discriminator_forward.9} parent=5 // pred_fallthru
      _
    %p639 = scmp.le.s32.totalorder 2, %s9
    // Predicated region
    $region45: #{discriminator_forward.9} parent=5 // pred_check
      %p640 = pneg %p639
    $region46: #{discriminator_forward.9} parent=5 // pred_check_branch
      %642 = sbr.rel (%p640) target = $region48
    $region47: #{discriminator_forward.9} parent=5 // pred_region
      %s643 = ssub.s32 %s9, 2
      // Predicated region
      $region49: #{discriminator_forward.9} parent=47 // pred_check
        %p644 = pneg %p152
      $region50: #{discriminator_forward.9} parent=47 // pred_check_branch
        %646 = sbr.rel (%p644) target = $region52
      $region51: #{discriminator_forward.9} parent=47 // pred_region
        %p647 = scmp.lt.s32.totalorder %s24, 1
        %s648 = scalar_select %p647, %s24, 1
        %p649 = scmp.lt.s32.totalorder %s25, 0
        %s650 = scalar_select %p649, %s25, 0
        %p651 = scmp.lt.s32.totalorder %s26, 0
        %s652 = scalar_select %p651, %s26, 0
        %s653 = sadd.s32 %s652, %s650
        %s654 = sadd.s32 %s653, %s648
        %s655 = smul.addr %s654, 4
        %s656 = scalar_lea.vmem %s3, %s655
      $region52: #{discriminator_forward.9} parent=47 // pred_fallthru
        _
    $region48: #{discriminator_forward.9} parent=5 // pred_fallthru
      _
  $region6: #{discriminator_forward.9} parent=0 // loop_footer
    %s13 = sadd.s32 1, %s9
  $region7: #{discriminator_forward.9} parent=0 // loop_footer_branch
    %8 = sbr.rel target = $region3
  $region8: #{discriminator_forward.9} parent=0 // loop_exit
    _

</llo_original>
